<compile_context>
chip_gen: v7x
topology: tpu7x:2x2x1
jax: 0.10.0
libtpu: 0.0.40
codegen_flags: <defaults>
</compile_context>

<pallas_src>
import functools

import jax
import jax.numpy as jnp
from jax import lax
from jax.experimental import pallas as pl
from jax.experimental.pallas import tpu as pltpu

# Large finite negative: exp() underflows to exactly 0, no -inf/NaN hazards.
_MASK_VALUE = -1e30


def _head_kernel(x_ref, w_ref, o_ref,
                 q_scr, k_scr, v_scr, m_scr, l_scr, acc_scr,
                 *, head_size, tq, tk):
    # x_ref: (1, tq, C)      w_ref: (C, 3H) bf16 [q|k|v], scale folded into q
    # o_ref: (1, tq, H)
    # scratch: q_scr (tq,H) bf16, k_scr/v_scr (T,H) bf16,
    #          m/l (tq,1) f32, acc (tq,H) f32
    H = head_size
    qi = pl.program_id(1)
    ki = pl.program_id(2)
    n_k = pl.num_programs(2)

    # ---- once per q block (ki == 0): fused QKV projection + state reset ----
    # tq == tk, so the x block of q-block `qi` IS kv block `qi`; projecting
    # K/V here means each kv block is projected exactly once per batch row.
    @pl.when(ki == 0)
    def _project_init():
        x_blk = x_ref[0].astype(jnp.bfloat16)                       # (tq, C)
        qkv = lax.dot_general(x_blk, w_ref[...],
                              (((1,), (0,)), ((), ())),
                              preferred_element_type=jnp.float32)   # (tq, 3H)
        q_scr[...] = qkv[:, :H].astype(jnp.bfloat16)                # pre-scaled
        row0 = pl.multiple_of(qi * tq, tq)
        k_scr[pl.ds(row0, tq), :] = qkv[:, H:2 * H].astype(jnp.bfloat16)
        v_scr[pl.ds(row0, tq), :] = qkv[:, 2 * H:].astype(jnp.bfloat16)
        m_scr[...] = jnp.full(m_scr.shape, _MASK_VALUE, dtype=m_scr.dtype)
        l_scr[...] = jnp.zeros(l_scr.shape, dtype=l_scr.dtype)
        acc_scr[...] = jnp.zeros(acc_scr.shape, dtype=acc_scr.dtype)

    def _attend(mask_diagonal):
        col0 = pl.multiple_of(ki * tk, tk)
        k_blk = k_scr[pl.ds(col0, tk), :]                           # (tk, H) bf16
        v_blk = v_scr[pl.ds(col0, tk), :]                           # (tk, H) bf16
        # scores: contract head dim of both q and k (no explicit k.T)
        s = lax.dot_general(q_scr[...], k_blk,
                            (((1,), (1,)), ((), ())),
                            preferred_element_type=jnp.float32)     # (tq, tk) f32
        if mask_diagonal:
            # purely local mask (qi == ki and tq == tk => same row/col offset)
            r = lax.broadcasted_iota(jnp.int32, (tq, tk), 0)
            c = lax.broadcasted_iota(jnp.int32, (tq, tk), 1)
            s = jnp.where(c <= r, s, _MASK_VALUE)
        # online-softmax update
        m_prev = m_scr[...]
        m_new = jnp.maximum(m_prev, jnp.max(s, axis=-1, keepdims=True))
        alpha = jnp.exp(m_prev - m_new)
        p = jnp.exp(s - m_new)
        l_scr[...] = alpha * l_scr[...] + jnp.sum(p, axis=-1, keepdims=True)
        acc_scr[...] = alpha * acc_scr[...] + lax.dot_general(
            p.astype(jnp.bfloat16), v_blk,
            (((1,), (0,)), ((), ())),
            preferred_element_type=jnp.float32)
        m_scr[...] = m_new

    # diagonal block: masked; strictly-below-diagonal: unmasked;
    # above-diagonal (ki > qi): skipped entirely.
    @pl.when(ki == qi)
    def _diag():
        _attend(True)

    @pl.when(ki < qi)
    def _below():
        _attend(False)

    # ---- finalize after the last kv step of this q block ----
    @pl.when(ki == n_k - 1)
    def _finalize():
        inv_l = pl.reciprocal(l_scr[...], approx=True)
        o_ref[0] = (acc_scr[...] * inv_l).astype(o_ref.dtype)


def head_forward(x, w_key, w_query, w_value, *, block_q=256, block_k=256):
    """x: (B, T, C); w_*: (C, H) (transpose of torch's (H, C)). Eval-mode forward."""
    B, T, C = x.shape
    H = w_key.shape[1]
    scale = float(C) ** (-0.5)          # module scales by C**-0.5 (C = n_embd)
    out_dtype = x.dtype

    tq = block_q if T % block_q == 0 else T
    tk = block_k if T % block_k == 0 else T
    # The diagonal-block K/V dedup and local mask rely on square tiles.
    assert tq == tk, "block_q and block_k must resolve to the same tile size"
    n_q, n_k = T // tq, T // tk

    # One packed (C, 3H) bf16 weight: [q_scaled | k | v].  Scaling the weight
    # at trace time removes the in-kernel q*scale multiply; bf16 operands for
    # the MXU (f32 accumulation stays inside the kernel).
    w_qkv = jnp.concatenate(
        [(w_query * scale).astype(jnp.bfloat16),
         w_key.astype(jnp.bfloat16),
         w_value.astype(jnp.bfloat16)],
        axis=1)

    kernel = functools.partial(_head_kernel, head_size=H, tq=tq, tk=tk)

    return pl.pallas_call(
        kernel,
        out_shape=jax.ShapeDtypeStruct((B, T, H), out_dtype),
        grid_spec=pltpu.PrefetchScalarGridSpec(
            num_scalar_prefetch=0,
            grid=(B, n_q, n_k),
            in_specs=[
                # single x input, reused for Q and the diagonal K/V projection;
                # index does not depend on ki -> no wasted DMA on skipped steps
                pl.BlockSpec((1, tq, C), lambda b, qi, ki: (b, qi, 0)),
                pl.BlockSpec((C, 3 * H), lambda b, qi, ki: (0, 0)),   # resident
            ],
            out_specs=pl.BlockSpec((1, tq, H), lambda b, qi, ki: (b, qi, 0)),
            scratch_shapes=[
                pltpu.VMEM((tq, H), jnp.bfloat16),   # q (pre-scaled)
                pltpu.VMEM((T, H), jnp.bfloat16),    # K for the whole row
                pltpu.VMEM((T, H), jnp.bfloat16),    # V for the whole row
                pltpu.VMEM((tq, 1), jnp.float32),    # running max m
                pltpu.VMEM((tq, 1), jnp.float32),    # running denom l
                pltpu.VMEM((tq, H), jnp.float32),    # output accumulator
            ],
        ),
        compiler_params=pltpu.CompilerParams(
            # qi must be "arbitrary": K/V scratch written at q-block `ki` is
            # consumed by later q-blocks of the same batch row.
            dimension_semantics=("parallel", "arbitrary", "arbitrary"),
        ),
    )(x, w_qkv)


def head_reference(x, w_key, w_query, w_value):
    """Plain-JAX f32 reference matching the PyTorch forward (eval mode)."""
    B, T, C = x.shape
    k = x @ w_key
    q = x @ w_query
    v = x @ w_value
    wei = (q @ jnp.swapaxes(k, -2, -1)) * (C ** -0.5)
    mask = jnp.tril(jnp.ones((T, T), dtype=bool))
    wei = jnp.where(mask, wei, -jnp.inf)
    wei = jax.nn.softmax(wei, axis=-1)
    return wei @ v


if __name__ == "__main__":
    # Shapes implied by the module: C = n_embd = 384, T <= block_size = 256.
    B = 2
    T = 256          # sequence length (= block_size)
    n_embd = 384     # embedding dim C (module constant)
    head_size = 64   # typical head size (n_embd // n_head)

    key = jax.random.PRNGKey(0)
    kx, kk, kq, kv = jax.random.split(key, 4)

    x = jax.random.normal(kx, (B, T, n_embd), dtype=jnp.float32)
    # nn.Linear(n_embd, head_size, bias=False) weight is (head_size, n_embd);
    # we store its transpose (n_embd, head_size).
    w_key = jax.random.normal(kk, (n_embd, head_size), dtype=jnp.float32) * 0.05
    w_query = jax.random.normal(kq, (n_embd, head_size), dtype=jnp.float32) * 0.05
    w_value = jax.random.normal(kv, (n_embd, head_size), dtype=jnp.float32) * 0.05

    out = head_forward(x, w_key, w_query, w_value)
    out = jax.block_until_ready(out)

    ref = head_reference(x, w_key, w_query, w_value)
    assert out.shape == (B, T, head_size)
    # bf16 MXU operands (f32 accumulate) -> tolerance looser than pure f32.
    max_err = float(jnp.max(jnp.abs(out - ref)))
    assert jnp.allclose(out, ref, atol=3e-2, rtol=3e-2), f"mismatch vs reference, max_err={max_err}"

    print("KERNEL_OK")
</pallas_src>

<mosaic_0001>
module attributes {stable_mosaic.version = 11 : i64} {
  func.func @_head_kernel(%arg0: i32, %arg1: i32, %arg2: i32, %arg3: memref<1x256x384xf32, #tpu.memory_space<vmem>>, %arg4: memref<384x192xbf16, #tpu.memory_space<vmem>>, %arg5: memref<1x256x64xf32, #tpu.memory_space<vmem>>, %arg6: memref<256x64xbf16, #tpu.memory_space<vmem>>, %arg7: memref<256x64xbf16, #tpu.memory_space<vmem>>, %arg8: memref<256x64xbf16, #tpu.memory_space<vmem>>, %arg9: memref<256x1xf32, #tpu.memory_space<vmem>>, %arg10: memref<256x1xf32, #tpu.memory_space<vmem>>, %arg11: memref<256x64xf32, #tpu.memory_space<vmem>>) attributes {dimension_semantics = [#tpu.dimension_semantics<parallel>, #tpu.dimension_semantics<arbitrary>, #tpu.dimension_semantics<arbitrary>], iteration_bounds = array<i64: 2, 1, 1>, scalar_prefetch = 0 : i64, scratch_operands = 6 : i64, tpu.core_type = #tpu.core_type<tc>, window_params = [{transform_indices = @transform_0, window_bounds = array<i64: 1, 256, 384>}, {pipeline_mode = #tpu.pipeline_mode<synchronous>, transform_indices = @transform_1, window_bounds = array<i64: 384, 192>}, {transform_indices = @transform_2, window_bounds = array<i64: 1, 256, 64>}]} {
    %c0_i32 = arith.constant 0 : i32
    %0 = arith.cmpi eq, %arg2, %c0_i32 : i32
    %1 = arith.extui %0 : i1 to i32
    %c0_i32_0 = arith.constant 0 : i32
    %2 = arith.cmpi ne, %1, %c0_i32_0 : i32
    scf.if %2 {
      %c0 = arith.constant 0 : index
      %c0_5 = arith.constant 0 : index
      %c0_6 = arith.constant 0 : index
      %12 = vector.load %arg3[%c0, %c0_5, %c0_6] : memref<1x256x384xf32, #tpu.memory_space<vmem>>, vector<1x256x384xf32>
      %13 = vector.shape_cast %12 : vector<1x256x384xf32> to vector<256x384xf32>
      %14 = arith.truncf %13 : vector<256x384xf32> to vector<256x384xbf16>
      %c0_7 = arith.constant 0 : index
      %c0_8 = arith.constant 0 : index
      %15 = vector.load %arg4[%c0_7, %c0_8] : memref<384x192xbf16, #tpu.memory_space<vmem>>, vector<384x192xbf16>
      %cst = arith.constant dense<0.000000e+00> : vector<256x192xf32>
      %16 = tpu.matmul %14, %15, %cst {dimension_numbers = #tpu.dot_dimension_numbers<[1], [0], [0], [1], [0, 0, 1, 1], [], []>} : vector<256x384xbf16>, vector<384x192xbf16>, vector<256x192xf32> -> vector<256x192xf32>
      %17 = vector.extract_strided_slice %16 {offsets = [0, 0], sizes = [256, 64], strides = [1, 1]} : vector<256x192xf32> to vector<256x64xf32>
      %18 = arith.truncf %17 : vector<256x64xf32> to vector<256x64xbf16>
      %c0_9 = arith.constant 0 : index
      %c0_10 = arith.constant 0 : index
      %19 = vector.load %arg6[%c0_9, %c0_10] : memref<256x64xbf16, #tpu.memory_space<vmem>>, vector<256x64xbf16>
      tpu.vector_store %arg6[%c0_9, %c0_10], %18 {strides = array<i32>} : memref<256x64xbf16, #tpu.memory_space<vmem>>, vector<256x64xbf16>,
      %c256_i32 = arith.constant 256 : i32
      %20 = arith.muli %arg1, %c256_i32 : i32
      %21 = tpu.assume_multiple %20, 256 : i32
      %22 = vector.extract_strided_slice %16 {offsets = [0, 64], sizes = [256, 64], strides = [1, 1]} : vector<256x192xf32> to vector<256x64xf32>
      %23 = arith.truncf %22 : vector<256x64xf32> to vector<256x64xbf16>
      %24 = arith.index_cast %21 : i32 to index
      %c0_11 = arith.constant 0 : index
      %25 = vector.load %arg7[%24, %c0_11] : memref<256x64xbf16, #tpu.memory_space<vmem>>, vector<256x64xbf16>
      tpu.vector_store %arg7[%24, %c0_11], %23 {strides = array<i32>} : memref<256x64xbf16, #tpu.memory_space<vmem>>, vector<256x64xbf16>,
      %26 = vector.extract_strided_slice %16 {offsets = [0, 128], sizes = [256, 64], strides = [1, 1]} : vector<256x192xf32> to vector<256x64xf32>
      %27 = arith.truncf %26 : vector<256x64xf32> to vector<256x64xbf16>
      %28 = arith.index_cast %21 : i32 to index
      %c0_12 = arith.constant 0 : index
      %29 = vector.load %arg8[%28, %c0_12] : memref<256x64xbf16, #tpu.memory_space<vmem>>, vector<256x64xbf16>
      tpu.vector_store %arg8[%28, %c0_12], %27 {strides = array<i32>} : memref<256x64xbf16, #tpu.memory_space<vmem>>, vector<256x64xbf16>,
      %cst_13 = arith.constant -1.000000e+30 : f32
      %30 = vector.broadcast %cst_13 : f32 to vector<256x1xf32>
      %c0_14 = arith.constant 0 : index
      %c0_15 = arith.constant 0 : index
      %31 = vector.load %arg9[%c0_14, %c0_15] : memref<256x1xf32, #tpu.memory_space<vmem>>, vector<256x1xf32>
      tpu.vector_store %arg9[%c0_14, %c0_15], %30 {strides = array<i32>} : memref<256x1xf32, #tpu.memory_space<vmem>>, vector<256x1xf32>,
      %cst_16 = arith.constant 0.000000e+00 : f32
      %32 = vector.broadcast %cst_16 : f32 to vector<256x1xf32>
      %c0_17 = arith.constant 0 : index
      %c0_18 = arith.constant 0 : index
      %33 = vector.load %arg10[%c0_17, %c0_18] : memref<256x1xf32, #tpu.memory_space<vmem>>, vector<256x1xf32>
      tpu.vector_store %arg10[%c0_17, %c0_18], %32 {strides = array<i32>} : memref<256x1xf32, #tpu.memory_space<vmem>>, vector<256x1xf32>,
      %cst_19 = arith.constant 0.000000e+00 : f32
      %34 = vector.broadcast %cst_19 : f32 to vector<256x64xf32>
      %c0_20 = arith.constant 0 : index
      %c0_21 = arith.constant 0 : index
      %35 = vector.load %arg11[%c0_20, %c0_21] : memref<256x64xf32, #tpu.memory_space<vmem>>, vector<256x64xf32>
      tpu.vector_store %arg11[%c0_20, %c0_21], %34 {strides = array<i32>} : memref<256x64xf32, #tpu.memory_space<vmem>>, vector<256x64xf32>,
    } else {
    }
    %3 = arith.cmpi eq, %arg2, %arg1 : i32
    %4 = arith.extui %3 : i1 to i32
    %c0_i32_1 = arith.constant 0 : i32
    %5 = arith.cmpi ne, %4, %c0_i32_1 : i32
    scf.if %5 {
      %c256_i32 = arith.constant 256 : i32
      %12 = arith.muli %arg2, %c256_i32 : i32
      %13 = tpu.assume_multiple %12, 256 : i32
      %14 = arith.index_cast %13 : i32 to index
      %c0 = arith.constant 0 : index
      %15 = vector.load %arg7[%14, %c0] : memref<256x64xbf16, #tpu.memory_space<vmem>>, vector<256x64xbf16>
      %16 = arith.index_cast %13 : i32 to index
      %c0_5 = arith.constant 0 : index
      %17 = vector.load %arg8[%16, %c0_5] : memref<256x64xbf16, #tpu.memory_space<vmem>>, vector<256x64xbf16>
      %c0_6 = arith.constant 0 : index
      %c0_7 = arith.constant 0 : index
      %18 = vector.load %arg6[%c0_6, %c0_7] : memref<256x64xbf16, #tpu.memory_space<vmem>>, vector<256x64xbf16>
      %cst = arith.constant dense<0.000000e+00> : vector<256x256xf32>
      %19 = tpu.matmul %18, %15, %cst {dimension_numbers = #tpu.dot_dimension_numbers<[1], [1], [0], [0], [0, 0, 1, 0], [], []>} : vector<256x64xbf16>, vector<256x64xbf16>, vector<256x256xf32> -> vector<256x256xf32>
      %20 = tpu.iota {dimensions = array<i32: 0>} : vector<256x256xi32>
      %21 = tpu.iota {dimensions = array<i32: 1>} : vector<256x256xi32>
      %22 = arith.cmpi sle, %21, %20 : vector<256x256xi32>
      %cst_8 = arith.constant -1.000000e+30 : f32
      %23 = vector.broadcast %cst_8 : f32 to vector<256x256xf32>
      %24 = arith.select %22, %19, %23 : vector<256x256xi1>, vector<256x256xf32>
      %c0_9 = arith.constant 0 : index
      %c0_10 = arith.constant 0 : index
      %25 = vector.load %arg9[%c0_9, %c0_10] : memref<256x1xf32, #tpu.memory_space<vmem>>, vector<256x1xf32>
      %cst_11 = arith.constant dense<0xFF800000> : vector<256xf32>
      %26 = vector.multi_reduction <maximumf>, %24, %cst_11 [1] : vector<256x256xf32> to vector<256xf32>
      %27 = vector.shape_cast %26 : vector<256xf32> to vector<256x1xf32>
      %28 = arith.maximumf %25, %27 : vector<256x1xf32>
      %29 = arith.subf %25, %28 : vector<256x1xf32>
      %30 = math.exp %29 : vector<256x1xf32>
      %31 = vector.broadcast %28 : vector<256x1xf32> to vector<256x256xf32>
      %32 = arith.subf %24, %31 : vector<256x256xf32>
      %33 = math.exp %32 : vector<256x256xf32>
      %c0_12 = arith.constant 0 : index
      %c0_13 = arith.constant 0 : index
      %34 = vector.load %arg10[%c0_12, %c0_13] : memref<256x1xf32, #tpu.memory_space<vmem>>, vector<256x1xf32>
      %35 = arith.mulf %30, %34 : vector<256x1xf32>
      %cst_14 = arith.constant dense<0.000000e+00> : vector<256xf32>
      %36 = vector.multi_reduction <add>, %33, %cst_14 [1] : vector<256x256xf32> to vector<256xf32>
      %37 = vector.shape_cast %36 : vector<256xf32> to vector<256x1xf32>
      %38 = arith.addf %35, %37 : vector<256x1xf32>
      %c0_15 = arith.constant 0 : index
      %c0_16 = arith.constant 0 : index
      %39 = vector.load %arg10[%c0_15, %c0_16] : memref<256x1xf32, #tpu.memory_space<vmem>>, vector<256x1xf32>
      tpu.vector_store %arg10[%c0_15, %c0_16], %38 {strides = array<i32>} : memref<256x1xf32, #tpu.memory_space<vmem>>, vector<256x1xf32>,
      %c0_17 = arith.constant 0 : index
      %c0_18 = arith.constant 0 : index
      %40 = vector.load %arg11[%c0_17, %c0_18] : memref<256x64xf32, #tpu.memory_space<vmem>>, vector<256x64xf32>
      %41 = vector.broadcast %30 : vector<256x1xf32> to vector<256x64xf32>
      %42 = arith.mulf %41, %40 : vector<256x64xf32>
      %43 = arith.truncf %33 : vector<256x256xf32> to vector<256x256xbf16>
      %cst_19 = arith.constant dense<0.000000e+00> : vector<256x64xf32>
      %44 = tpu.matmul %43, %17, %cst_19 {dimension_numbers = #tpu.dot_dimension_numbers<[1], [0], [0], [1], [0, 0, 1, 1], [], []>} : vector<256x256xbf16>, vector<256x64xbf16>, vector<256x64xf32> -> vector<256x64xf32>
      %45 = arith.addf %42, %44 : vector<256x64xf32>
      %c0_20 = arith.constant 0 : index
      %c0_21 = arith.constant 0 : index
      %46 = vector.load %arg11[%c0_20, %c0_21] : memref<256x64xf32, #tpu.memory_space<vmem>>, vector<256x64xf32>
      tpu.vector_store %arg11[%c0_20, %c0_21], %45 {strides = array<i32>} : memref<256x64xf32, #tpu.memory_space<vmem>>, vector<256x64xf32>,
      %c0_22 = arith.constant 0 : index
      %c0_23 = arith.constant 0 : index
      %47 = vector.load %arg9[%c0_22, %c0_23] : memref<256x1xf32, #tpu.memory_space<vmem>>, vector<256x1xf32>
      tpu.vector_store %arg9[%c0_22, %c0_23], %28 {strides = array<i32>} : memref<256x1xf32, #tpu.memory_space<vmem>>, vector<256x1xf32>,
    } else {
    }
    %6 = arith.cmpi slt, %arg2, %arg1 : i32
    %7 = arith.extui %6 : i1 to i32
    %c0_i32_2 = arith.constant 0 : i32
    %8 = arith.cmpi ne, %7, %c0_i32_2 : i32
    scf.if %8 {
      %c256_i32 = arith.constant 256 : i32
      %12 = arith.muli %arg2, %c256_i32 : i32
      %13 = tpu.assume_multiple %12, 256 : i32
      %14 = arith.index_cast %13 : i32 to index
      %c0 = arith.constant 0 : index
      %15 = vector.load %arg7[%14, %c0] : memref<256x64xbf16, #tpu.memory_space<vmem>>, vector<256x64xbf16>
      %16 = arith.index_cast %13 : i32 to index
      %c0_5 = arith.constant 0 : index
      %17 = vector.load %arg8[%16, %c0_5] : memref<256x64xbf16, #tpu.memory_space<vmem>>, vector<256x64xbf16>
      %c0_6 = arith.constant 0 : index
      %c0_7 = arith.constant 0 : index
      %18 = vector.load %arg6[%c0_6, %c0_7] : memref<256x64xbf16, #tpu.memory_space<vmem>>, vector<256x64xbf16>
      %cst = arith.constant dense<0.000000e+00> : vector<256x256xf32>
      %19 = tpu.matmul %18, %15, %cst {dimension_numbers = #tpu.dot_dimension_numbers<[1], [1], [0], [0], [0, 0, 1, 0], [], []>} : vector<256x64xbf16>, vector<256x64xbf16>, vector<256x256xf32> -> vector<256x256xf32>
      %c0_8 = arith.constant 0 : index
      %c0_9 = arith.constant 0 : index
      %20 = vector.load %arg9[%c0_8, %c0_9] : memref<256x1xf32, #tpu.memory_space<vmem>>, vector<256x1xf32>
      %cst_10 = arith.constant dense<0xFF800000> : vector<256xf32>
      %21 = vector.multi_reduction <maximumf>, %19, %cst_10 [1] : vector<256x256xf32> to vector<256xf32>
      %22 = vector.shape_cast %21 : vector<256xf32> to vector<256x1xf32>
      %23 = arith.maximumf %20, %22 : vector<256x1xf32>
      %24 = arith.subf %20, %23 : vector<256x1xf32>
      %25 = math.exp %24 : vector<256x1xf32>
      %26 = vector.broadcast %23 : vector<256x1xf32> to vector<256x256xf32>
      %27 = arith.subf %19, %26 : vector<256x256xf32>
      %28 = math.exp %27 : vector<256x256xf32>
      %c0_11 = arith.constant 0 : index
      %c0_12 = arith.constant 0 : index
      %29 = vector.load %arg10[%c0_11, %c0_12] : memref<256x1xf32, #tpu.memory_space<vmem>>, vector<256x1xf32>
      %30 = arith.mulf %25, %29 : vector<256x1xf32>
      %cst_13 = arith.constant dense<0.000000e+00> : vector<256xf32>
      %31 = vector.multi_reduction <add>, %28, %cst_13 [1] : vector<256x256xf32> to vector<256xf32>
      %32 = vector.shape_cast %31 : vector<256xf32> to vector<256x1xf32>
      %33 = arith.addf %30, %32 : vector<256x1xf32>
      %c0_14 = arith.constant 0 : index
      %c0_15 = arith.constant 0 : index
      %34 = vector.load %arg10[%c0_14, %c0_15] : memref<256x1xf32, #tpu.memory_space<vmem>>, vector<256x1xf32>
      tpu.vector_store %arg10[%c0_14, %c0_15], %33 {strides = array<i32>} : memref<256x1xf32, #tpu.memory_space<vmem>>, vector<256x1xf32>,
      %c0_16 = arith.constant 0 : index
      %c0_17 = arith.constant 0 : index
      %35 = vector.load %arg11[%c0_16, %c0_17] : memref<256x64xf32, #tpu.memory_space<vmem>>, vector<256x64xf32>
      %36 = vector.broadcast %25 : vector<256x1xf32> to vector<256x64xf32>
      %37 = arith.mulf %36, %35 : vector<256x64xf32>
      %38 = arith.truncf %28 : vector<256x256xf32> to vector<256x256xbf16>
      %cst_18 = arith.constant dense<0.000000e+00> : vector<256x64xf32>
      %39 = tpu.matmul %38, %17, %cst_18 {dimension_numbers = #tpu.dot_dimension_numbers<[1], [0], [0], [1], [0, 0, 1, 1], [], []>} : vector<256x256xbf16>, vector<256x64xbf16>, vector<256x64xf32> -> vector<256x64xf32>
      %40 = arith.addf %37, %39 : vector<256x64xf32>
      %c0_19 = arith.constant 0 : index
      %c0_20 = arith.constant 0 : index
      %41 = vector.load %arg11[%c0_19, %c0_20] : memref<256x64xf32, #tpu.memory_space<vmem>>, vector<256x64xf32>
      tpu.vector_store %arg11[%c0_19, %c0_20], %40 {strides = array<i32>} : memref<256x64xf32, #tpu.memory_space<vmem>>, vector<256x64xf32>,
      %c0_21 = arith.constant 0 : index
      %c0_22 = arith.constant 0 : index
      %42 = vector.load %arg9[%c0_21, %c0_22] : memref<256x1xf32, #tpu.memory_space<vmem>>, vector<256x1xf32>
      tpu.vector_store %arg9[%c0_21, %c0_22], %23 {strides = array<i32>} : memref<256x1xf32, #tpu.memory_space<vmem>>, vector<256x1xf32>,
    } else {
    }
    %c0_i32_3 = arith.constant 0 : i32
    %9 = arith.cmpi eq, %arg2, %c0_i32_3 : i32
    %10 = arith.extui %9 : i1 to i32
    %c0_i32_4 = arith.constant 0 : i32
    %11 = arith.cmpi ne, %10, %c0_i32_4 : i32
    scf.if %11 {
      %c0 = arith.constant 0 : index
      %c0_5 = arith.constant 0 : index
      %12 = vector.load %arg10[%c0, %c0_5] : memref<256x1xf32, #tpu.memory_space<vmem>>, vector<256x1xf32>
      %13 = tpu.reciprocal %12 {approx = true} : vector<256x1xf32> -> vector<256x1xf32>
      %c0_6 = arith.constant 0 : index
      %c0_7 = arith.constant 0 : index
      %14 = vector.load %arg11[%c0_6, %c0_7] : memref<256x64xf32, #tpu.memory_space<vmem>>, vector<256x64xf32>
      %15 = vector.broadcast %13 : vector<256x1xf32> to vector<256x64xf32>
      %16 = arith.mulf %14, %15 : vector<256x64xf32>
      %c0_8 = arith.constant 0 : index
      %c0_9 = arith.constant 0 : index
      %c0_10 = arith.constant 0 : index
      %17 = vector.load %arg5[%c0_8, %c0_9, %c0_10] : memref<1x256x64xf32, #tpu.memory_space<vmem>>, vector<1x256x64xf32>
      %18 = vector.shape_cast %17 : vector<1x256x64xf32> to vector<256x64xf32>
      %19 = vector.shape_cast %16 : vector<256x64xf32> to vector<1x256x64xf32>
      tpu.vector_store %arg5[%c0_8, %c0_9, %c0_10], %19 {strides = array<i32>} : memref<1x256x64xf32, #tpu.memory_space<vmem>>, vector<1x256x64xf32>,
    } else {
    }
    return
  }
  func.func @transform_0(%arg0: i32, %arg1: i32, %arg2: i32) -> (i32, i32, i32) {
    %c0_i32 = arith.constant 0 : i32
    %c0_i32_0 = arith.constant 0 : i32
    return %arg0, %arg1, %c0_i32 : i32, i32, i32
  }
  func.func @transform_1(%arg0: i32, %arg1: i32, %arg2: i32) -> (i32, i32) {
    %c0_i32 = arith.constant 0 : i32
    %c0_i32_0 = arith.constant 0 : i32
    %c0_i32_1 = arith.constant 0 : i32
    return %c0_i32, %c0_i32_0 : i32, i32
  }
  func.func @transform_2(%arg0: i32, %arg1: i32, %arg2: i32) -> (i32, i32, i32) {
    %c0_i32 = arith.constant 0 : i32
    %c0_i32_0 = arith.constant 0 : i32
    return %arg0, %arg1, %c0_i32 : i32, i32, i32
  }
}

</mosaic_0001>

<llo_original>
// kernel: tpu_custom_call.1
$region0: #{tpu_custom_call.1}
  #allocation0 [shape = 'u32[]', space=smem, size = 0x4, offset = 0x4, fixed_abs, tag = 'smem constant byte address 0x4 - core index']
  #allocation1 [shape = 'u32[144,128]{1,0:T(1,128)}', space=vmem, size = 0x12000, scoped, tag = 'internal scratch']
  #allocation2 [shape = 'bf16[256,64]{1,0:T(16,128)(2,1)}', space=vmem, size = 0x10000, scoped, tag = 'scratch operand']
  #allocation3 [shape = 'bf16[256,64]{1,0:T(16,128)(2,1)}', space=vmem, size = 0x10000, scoped, tag = 'scratch operand']
  #allocation4 [shape = 'bf16[256,64]{1,0:T(16,128)(2,1)}', space=vmem, size = 0x10000, scoped, tag = 'scratch operand']
  #allocation5 [shape = 'f32[256,1]{1,0:T(8,128)}', space=vmem, size = 0x20000, scoped, tag = 'scratch operand']
  #allocation6 [shape = 'f32[256,1]{1,0:T(8,128)}', space=vmem, size = 0x20000, scoped, tag = 'scratch operand']
  #allocation7 [shape = 'f32[256,64]{1,0:T(8,128)}', space=vmem, size = 0x20000, scoped, tag = 'scratch operand']
  %s0 = inlined_call_operand.hbm [shape: f32[2,256,384], index: 0, kind: input, shape index: {}]
  %s1 = inlined_call_operand.vmem [shape: bf16[384,192], index: 1, kind: input, shape index: {}]
  %s2 = inlined_call_operand.vmem [shape: f32[2,256,64], index: 2, kind: output, shape index: {}]
  %s3 = sld [smem:[#allocation0]]
  $region61: #{tpu_custom_call.1} parent=0
    _
  %s5 = ssub.s32 1, %s3
  %s6 = scalar_select 0, %s5, %s3
  $region1: #{tpu_custom_call.1} parent=0
    #allocation8 [shape = 'u8[786432]{0}', space=vmem, size = 0xc0000, scoped, tag = 'input window, operand 0']
    #allocation9 [shape = 's32[2]{0}', space=sflag, size = 0x8, scoped, tag = 'scoped memory for tpu_custom_call.1']
    %7 = vsyncpa [#allocation9], 0
    %s8 = scalar_lea.sflag [#allocation9], 1
    %9 = vsyncpa %s8, 0
    loop: start=0, step=1, limit=4
    $region2: #{tpu_custom_call.1} parent=1 // loop_pre_header
      _
    $region3: #{tpu_custom_call.1} parent=1 // loop_header
      %s11 = sphi 0, %s15
      %p12 = scmp.ge.s32.totalorder %s11, 4
      %s18 = sphi 0, %s37
      %s19 = sphi 0, %s33
      %s20 = sphi 0, %s29
      %s21 = sphi 0, %s18
      %s22 = sphi 0, %s19
      %s23 = sphi 0, %s20
      %s24 = sphi 0, %s21
      %s25 = sphi 0, %s22
      %s26 = sphi 0, %s23
      %s42 = sphi 0, %s44
      %s45 = sphi 0, %s42
      %s46 = sphi 0, %s45
      %s62 = sphi 0, %s46
      %s66 = sphi 0, %s66
      %s68 = sphi 0, %s66
      %s69 = sphi 0, %s68
      %s83 = sphi 0, %s69
      %s91 = sphi 0, %s93
      %s94 = sphi 0, %s91
      %s95 = sphi 0, %s94
      %s111 = sphi 0, %s95
    $region4: #{tpu_custom_call.1} parent=1 // loop_header_branch
      %14 = sbr.rel (%p12) target = $region8
    $region5: #{tpu_custom_call.1} parent=1 // loop_body
      %s16 = ssub.s32 %s11, 1
      %s17 = ssub.s32 %s11, 2
      %s27 = sadd.s32 1, %s20
      %p28 = scmp.ge.s32.totalorder %s27, 1
      %s29 = scalar_select %p28, 0, %s27
      %s30 = sadd.s32 1, %s19
      %s31 = scalar_select %p28, %s30, %s19
      %p32 = scmp.ge.s32.totalorder %s31, 1
      %s33 = scalar_select %p32, 0, %s31
      %s34 = sadd.s32 1, %s18
      %s35 = scalar_select %p32, %s34, %s18
      %p36 = scmp.ge.s32.totalorder %s35, 2
      %s37 = scalar_select %p36, 0, %s35
      %s38 = ssub.s32 %s18, %s37
      %s39 = ssub.s32 %s19, %s33
      %s40 = sor.u32 %s38, %s39
      %p41 = scmp.eq.s32.totalorder %s40, 0
      %s43 = sadd.s32 %s42, 1
      %s44 = scalar_select %p41, %s42, %s43
      %p47 = pneg %p41
      %p48 = scmp.eq.s32.totalorder %s11, 1
      %p49 = por %p47, %p48
      %p50 = scmp.ne.s32.totalorder %s42, %s45
      %p51 = scmp.eq.s32.totalorder %s11, 0
      %p52 = por %p50, %p51
      %p53 = scmp.ne.s32.totalorder %s42, %s45
      %p54 = scmp.eq.s32.totalorder %s16, 1
      %p55 = por %p53, %p54
      %p56 = scmp.ne.s32.totalorder %s45, %s46
      %p57 = scmp.eq.s32.totalorder %s16, 0
      %p58 = por %p56, %p57
      %p59 = scmp.ne.s32.totalorder %s45, %s46
      %p60 = scmp.eq.s32.totalorder %s17, 1
      %p61 = por %p59, %p60
      %p63 = scmp.ne.s32.totalorder %s46, %s62
      %p64 = scmp.eq.s32.totalorder %s17, 0
      %p65 = por %p63, %p64
      %s67 = sadd.s32 %s66, 1
      %p70 = scmp.eq.s32.totalorder %s11, 1
      %p71 = scmp.ne.s32.totalorder %s66, %s68
      %p72 = scmp.eq.s32.totalorder %s11, 0
      %p73 = por %p71, %p72
      %p74 = scmp.ne.s32.totalorder %s66, %s68
      %p75 = scmp.eq.s32.totalorder %s16, 1
      %p76 = por %p74, %p75
      %p77 = scmp.ne.s32.totalorder %s68, %s69
      %p78 = scmp.eq.s32.totalorder %s16, 0
      %p79 = por %p77, %p78
      %p80 = scmp.ne.s32.totalorder %s68, %s69
      %p81 = scmp.eq.s32.totalorder %s17, 1
      %p82 = por %p80, %p81
      %p84 = scmp.ne.s32.totalorder %s69, %s83
      %p85 = scmp.eq.s32.totalorder %s17, 0
      %p86 = por %p84, %p85
      %s87 = ssub.s32 %s18, %s37
      %s88 = ssub.s32 %s19, %s33
      %s89 = sor.u32 %s87, %s88
      %p90 = scmp.eq.s32.totalorder %s89, 0
      %s92 = sadd.s32 %s91, 1
      %s93 = scalar_select %p90, %s91, %s92
      %p96 = pneg %p90
      %p97 = scmp.eq.s32.totalorder %s11, 1
      %p98 = por %p96, %p97
      %p99 = scmp.ne.s32.totalorder %s91, %s94
      %p100 = scmp.eq.s32.totalorder %s11, 0
      %p101 = por %p99, %p100
      %p102 = scmp.ne.s32.totalorder %s91, %s94
      %p103 = scmp.eq.s32.totalorder %s16, 1
      %p104 = por %p102, %p103
      %p105 = scmp.ne.s32.totalorder %s94, %s95
      %p106 = scmp.eq.s32.totalorder %s16, 0
      %p107 = por %p105, %p106
      %p108 = scmp.ne.s32.totalorder %s94, %s95
      %p109 = scmp.eq.s32.totalorder %s17, 1
      %p110 = por %p108, %p109
      %p112 = scmp.ne.s32.totalorder %s95, %s111
      %p113 = scmp.eq.s32.totalorder %s17, 0
      %p114 = por %p112, %p113
      %p115 = scmp.le.s32.totalorder 1, %s11
      %p116 = scmp.lt.s32.totalorder %s11, 3
      %p117 = pnand %p115, %p116
      %p118 = pneg %p117
      // Predicated region
      $region9: #{tpu_custom_call.1} parent=5 // pred_check
        _
      $region10: #{tpu_custom_call.1} parent=5 // pred_check_branch
        %120 = sbr.rel (%p117) target = $region12
      $region11: #{tpu_custom_call.1} parent=5 // pred_region
        %s121 = ssub.s32 %s11, 1
        // Predicated region
        $region13: #{tpu_custom_call.1} parent=11 // pred_check
          %p122 = pneg %p79
        $region14: #{tpu_custom_call.1} parent=11 // pred_check_branch
          %124 = sbr.rel (%p122) target = $region16
        $region15: #{tpu_custom_call.1} parent=11 // pred_region
          _
        $region16: #{tpu_custom_call.1} parent=11 // pred_fallthru
          _
      $region12: #{tpu_custom_call.1} parent=5 // pred_fallthru
        _
      %p125 = scmp.lt.s32.totalorder %s11, 2
      // Predicated region
      $region17: #{tpu_custom_call.1} parent=5 // pred_check
        %p126 = pneg %p125
      $region18: #{tpu_custom_call.1} parent=5 // pred_check_branch
        %128 = sbr.rel (%p126) target = $region20
      $region19: #{tpu_custom_call.1} parent=5 // pred_region
        // Predicated region
        $region21: #{tpu_custom_call.1} parent=19 // pred_check
          %p129 = pneg %p52
        $region22: #{tpu_custom_call.1} parent=19 // pred_check_branch
          %131 = sbr.rel (%p129) target = $region24
        $region23: #{tpu_custom_call.1} parent=19 // pred_region
          %s132 = sand.u32 %s42, 1
          %s133 = scalar_lea.sflag [#allocation9], %s132
          %s134 = sand.u32 %s42, 1
          %s135 = smul.addr %s134, 768
          %s136 = scalar_lea.vmem [#allocation8], %s135
          %s137 = smul.u32 32, %s19
          %s139 = ssub.s32 12288, 12288
          %140 = vsyncadd %s133, %s139
          %s141 = smul.addr %s137, 3
          %s142 = smul.addr %s18, 96
          %s143 = sadd.s32 %s141, %s142
          %s144 = smul.addr %s143, 128
          %s145 = scalar_lea.hbm %s0, %s144
          %s146 = sshll.u32 %s136, 4
          %s147 = int_to_ptr.vmem [resolvable:$true] %s146
          %152 = dma.hbm_to_vmem [thread:$0]  %s145, 12288, %s147, %s133, 384, 384, 24
        $region24: #{tpu_custom_call.1} parent=19 // pred_fallthru
          _
      $region20: #{tpu_custom_call.1} parent=5 // pred_fallthru
        _
      %p153 = scmp.le.s32.totalorder 1, %s11
      %p154 = scmp.lt.s32.totalorder %s11, 3
      %p155 = pnand %p153, %p154
      %p156 = pneg %p155
      // Predicated region
      $region25: #{tpu_custom_call.1} parent=5 // pred_check
        _
      $region26: #{tpu_custom_call.1} parent=5 // pred_check_branch
        %158 = sbr.rel (%p155) target = $region28
      $region27: #{tpu_custom_call.1} parent=5 // pred_region
        %s159 = ssub.s32 %s11, 1
        %s160 = sand.u32 %s45, 1
        %s161 = scalar_lea.sflag [#allocation9], %s160
        %s162 = sand.u32 %s45, 1
        %s163 = smul.addr %s162, 768
        %s164 = scalar_lea.vmem [#allocation8], %s163
        // Predicated region
        $region29: #{tpu_custom_call.1} parent=27 // pred_check
          %p165 = pneg %p58
        $region30: #{tpu_custom_call.1} parent=27 // pred_check_branch
          %167 = sbr.rel (%p165) target = $region32
        $region31: #{tpu_custom_call.1} parent=27 // pred_region
          %168 = dma.done %s161, 12288
        $region32: #{tpu_custom_call.1} parent=27 // pred_fallthru
          _
        %s169 = sand.u32 %s45, 1
        %s170 = scalar_lea.sflag [#allocation9], %s169
        %s171 = sand.u32 %s45, 1
        %s172 = smul.addr %s171, 768
        %s173 = scalar_lea.vmem [#allocation8], %s172
        %p174 = pneg %p58
        %p175 = pneg %p55
        %p176 = pneg %p79
        %p177 = pneg %p76
        %p178 = pneg %p107
        %p179 = pneg %p104
        %s180 = smul.u32 32, %s22
        %p181 = scmp.lt.s32.totalorder %s21, 1
        %s182 = scalar_select %p181, %s21, 1
        %p183 = scmp.lt.s32.totalorder %s180, 31
        %s184 = scalar_select %p183, %s180, 31
        %s185 = smul.addr %s182, 32
        %s186 = sadd.s32 %s184, %s185
        %s187 = smul.addr %s186, 8
        %s188 = scalar_lea.vmem %s2, %s187
        %s189 = smul.u32 32, %s22
        %s190 = smul.u32 32, %s22
        %p191 = scmp.lt.s32.totalorder %s21, 1
        %s192 = scalar_select %p191, %s21, 1
        %p193 = scmp.lt.s32.totalorder %s190, 31
        %s194 = scalar_select %p193, %s190, 31
        %s195 = smul.addr %s192, 32
        %s196 = sadd.s32 %s194, %s195
        %s197 = smul.addr %s196, 8
        %s198 = scalar_lea.vmem %s2, %s197
        %s199 = smul.u32 32, %s22
        %p201 = scmp.eq.s32.totalorder %s23, 0
        // Predicated region
        $region33: #{tpu_custom_call.1} parent=27 // pred_check
          %p202 = pneg %p201
        $region34: #{tpu_custom_call.1} parent=27 // pred_check_branch
          %204 = sbr.rel (%p202) target = $region36
        $region35: #{tpu_custom_call.1} parent=27 // pred_region
          %v205 = vld [vmem:[%s164] sm:$0xff]
          %v206 = vld [vmem:[%s164 + $0x8] sm:$0xff]
          %v207 = vld [vmem:[%s164 + $0x10] sm:$0xff]
          %v208 = vld [vmem:[%s164 + $0x18] sm:$0xff]
          %v209 = vld [vmem:[%s164 + $0x20] sm:$0xff]
          %v210 = vld [vmem:[%s164 + $0x28] sm:$0xff]
          %v211 = vld [vmem:[%s164 + $0x30] sm:$0xff]
          %v212 = vld [vmem:[%s164 + $0x38] sm:$0xff]
          %v213 = vld [vmem:[%s164 + $0x40] sm:$0xff]
          %v214 = vld [vmem:[%s164 + $0x48] sm:$0xff]
          %v215 = vld [vmem:[%s164 + $0x50] sm:$0xff]
          %v216 = vld [vmem:[%s164 + $0x58] sm:$0xff]
          %v217 = vld [vmem:[%s164 + $0x60] sm:$0xff]
          %v218 = vld [vmem:[%s164 + $0x68] sm:$0xff]
          %v219 = vld [vmem:[%s164 + $0x70] sm:$0xff]
          %v220 = vld [vmem:[%s164 + $0x78] sm:$0xff]
          %v221 = vld [vmem:[%s164 + $0x80] sm:$0xff]
          %v222 = vld [vmem:[%s164 + $0x88] sm:$0xff]
          %v223 = vld [vmem:[%s164 + $0x90] sm:$0xff]
          %v224 = vld [vmem:[%s164 + $0x98] sm:$0xff]
          %v225 = vld [vmem:[%s164 + $0xa0] sm:$0xff]
          %v226 = vld [vmem:[%s164 + $0xa8] sm:$0xff]
          %v227 = vld [vmem:[%s164 + $0xb0] sm:$0xff]
          %v228 = vld [vmem:[%s164 + $0xb8] sm:$0xff]
          %v229 = vld [vmem:[%s164 + $0xc0] sm:$0xff]
          %v230 = vld [vmem:[%s164 + $0xc8] sm:$0xff]
          %v231 = vld [vmem:[%s164 + $0xd0] sm:$0xff]
          %v232 = vld [vmem:[%s164 + $0xd8] sm:$0xff]
          %v233 = vld [vmem:[%s164 + $0xe0] sm:$0xff]
          %v234 = vld [vmem:[%s164 + $0xe8] sm:$0xff]
          %v235 = vld [vmem:[%s164 + $0xf0] sm:$0xff]
          %v236 = vld [vmem:[%s164 + $0xf8] sm:$0xff]
          %v237 = vld [vmem:[%s164 + $0x100] sm:$0xff]
          %v238 = vld [vmem:[%s164 + $0x108] sm:$0xff]
          %v239 = vld [vmem:[%s164 + $0x110] sm:$0xff]
          %v240 = vld [vmem:[%s164 + $0x118] sm:$0xff]
          %v241 = vld [vmem:[%s164 + $0x120] sm:$0xff]
          %v242 = vld [vmem:[%s164 + $0x128] sm:$0xff]
          %v243 = vld [vmem:[%s164 + $0x130] sm:$0xff]
          %v244 = vld [vmem:[%s164 + $0x138] sm:$0xff]
          %v245 = vld [vmem:[%s164 + $0x140] sm:$0xff]
          %v246 = vld [vmem:[%s164 + $0x148] sm:$0xff]
          %v247 = vld [vmem:[%s164 + $0x150] sm:$0xff]
          %v248 = vld [vmem:[%s164 + $0x158] sm:$0xff]
          %v249 = vld [vmem:[%s164 + $0x160] sm:$0xff]
          %v250 = vld [vmem:[%s164 + $0x168] sm:$0xff]
          %v251 = vld [vmem:[%s164 + $0x170] sm:$0xff]
          %v252 = vld [vmem:[%s164 + $0x178] sm:$0xff]
          %v253 = vld [vmem:[%s164 + $0x180] sm:$0xff]
          %v254 = vld [vmem:[%s164 + $0x188] sm:$0xff]
          %v255 = vld [vmem:[%s164 + $0x190] sm:$0xff]
          %v256 = vld [vmem:[%s164 + $0x198] sm:$0xff]
          %v257 = vld [vmem:[%s164 + $0x1a0] sm:$0xff]
          %v258 = vld [vmem:[%s164 + $0x1a8] sm:$0xff]
          %v259 = vld [vmem:[%s164 + $0x1b0] sm:$0xff]
          %v260 = vld [vmem:[%s164 + $0x1b8] sm:$0xff]
          %v261 = vld [vmem:[%s164 + $0x1c0] sm:$0xff]
          %v262 = vld [vmem:[%s164 + $0x1c8] sm:$0xff]
          %v263 = vld [vmem:[%s164 + $0x1d0] sm:$0xff]
          %v264 = vld [vmem:[%s164 + $0x1d8] sm:$0xff]
          %v265 = vld [vmem:[%s164 + $0x1e0] sm:$0xff]
          %v266 = vld [vmem:[%s164 + $0x1e8] sm:$0xff]
          %v267 = vld [vmem:[%s164 + $0x1f0] sm:$0xff]
          %v268 = vld [vmem:[%s164 + $0x1f8] sm:$0xff]
          %v269 = vld [vmem:[%s164 + $0x200] sm:$0xff]
          %v270 = vld [vmem:[%s164 + $0x208] sm:$0xff]
          %v271 = vld [vmem:[%s164 + $0x210] sm:$0xff]
          %v272 = vld [vmem:[%s164 + $0x218] sm:$0xff]
          %v273 = vld [vmem:[%s164 + $0x220] sm:$0xff]
          %v274 = vld [vmem:[%s164 + $0x228] sm:$0xff]
          %v275 = vld [vmem:[%s164 + $0x230] sm:$0xff]
          %v276 = vld [vmem:[%s164 + $0x238] sm:$0xff]
          %v277 = vld [vmem:[%s164 + $0x240] sm:$0xff]
          %v278 = vld [vmem:[%s164 + $0x248] sm:$0xff]
          %v279 = vld [vmem:[%s164 + $0x250] sm:$0xff]
          %v280 = vld [vmem:[%s164 + $0x258] sm:$0xff]
          %v281 = vld [vmem:[%s164 + $0x260] sm:$0xff]
          %v282 = vld [vmem:[%s164 + $0x268] sm:$0xff]
          %v283 = vld [vmem:[%s164 + $0x270] sm:$0xff]
          %v284 = vld [vmem:[%s164 + $0x278] sm:$0xff]
          %v285 = vld [vmem:[%s164 + $0x280] sm:$0xff]
          %v286 = vld [vmem:[%s164 + $0x288] sm:$0xff]
          %v287 = vld [vmem:[%s164 + $0x290] sm:$0xff]
          %v288 = vld [vmem:[%s164 + $0x298] sm:$0xff]
          %v289 = vld [vmem:[%s164 + $0x2a0] sm:$0xff]
          %v290 = vld [vmem:[%s164 + $0x2a8] sm:$0xff]
          %v291 = vld [vmem:[%s164 + $0x2b0] sm:$0xff]
          %v292 = vld [vmem:[%s164 + $0x2b8] sm:$0xff]
          %v293 = vld [vmem:[%s164 + $0x2c0] sm:$0xff]
          %v294 = vld [vmem:[%s164 + $0x2c8] sm:$0xff]
          %v295 = vld [vmem:[%s164 + $0x2d0] sm:$0xff]
          %v296 = vld [vmem:[%s164 + $0x2d8] sm:$0xff]
          %v297 = vld [vmem:[%s164 + $0x2e0] sm:$0xff]
          %v298 = vld [vmem:[%s164 + $0x2e8] sm:$0xff]
          %v299 = vld [vmem:[%s164 + $0x2f0] sm:$0xff]
          %v300 = vld [vmem:[%s164 + $0x2f8] sm:$0xff]
          %v301 = vpack.c.bf16 %v208, %v205
          %v302 = vpack.c.bf16 %v209, %v206
          %v303 = vpack.c.bf16 %v210, %v207
          %v304 = vpack.c.bf16 %v214, %v211
          %v305 = vpack.c.bf16 %v215, %v212
          %v306 = vpack.c.bf16 %v216, %v213
          %v307 = vpack.c.bf16 %v220, %v217
          %v308 = vpack.c.bf16 %v221, %v218
          %v309 = vpack.c.bf16 %v222, %v219
          %v310 = vpack.c.bf16 %v226, %v223
          %v311 = vpack.c.bf16 %v227, %v224
          %v312 = vpack.c.bf16 %v228, %v225
          %v313 = vpack.c.bf16 %v232, %v229
          %v314 = vpack.c.bf16 %v233, %v230
          %v315 = vpack.c.bf16 %v234, %v231
          %v316 = vpack.c.bf16 %v238, %v235
          %v317 = vpack.c.bf16 %v239, %v236
          %v318 = vpack.c.bf16 %v240, %v237
          %v319 = vpack.c.bf16 %v244, %v241
          %v320 = vpack.c.bf16 %v245, %v242
          %v321 = vpack.c.bf16 %v246, %v243
          %v322 = vpack.c.bf16 %v250, %v247
          %v323 = vpack.c.bf16 %v251, %v248
          %v324 = vpack.c.bf16 %v252, %v249
          %v325 = vpack.c.bf16 %v256, %v253
          %v326 = vpack.c.bf16 %v257, %v254
          %v327 = vpack.c.bf16 %v258, %v255
          %v328 = vpack.c.bf16 %v262, %v259
          %v329 = vpack.c.bf16 %v263, %v260
          %v330 = vpack.c.bf16 %v264, %v261
          %v331 = vpack.c.bf16 %v268, %v265
          %v332 = vpack.c.bf16 %v269, %v266
          %v333 = vpack.c.bf16 %v270, %v267
          %v334 = vpack.c.bf16 %v274, %v271
          %v335 = vpack.c.bf16 %v275, %v272
          %v336 = vpack.c.bf16 %v276, %v273
          %v337 = vpack.c.bf16 %v280, %v277
          %v338 = vpack.c.bf16 %v281, %v278
          %v339 = vpack.c.bf16 %v282, %v279
          %v340 = vpack.c.bf16 %v286, %v283
          %v341 = vpack.c.bf16 %v287, %v284
          %v342 = vpack.c.bf16 %v288, %v285
          %v343 = vpack.c.bf16 %v292, %v289
          %v344 = vpack.c.bf16 %v293, %v290
          %v345 = vpack.c.bf16 %v294, %v291
          %v346 = vpack.c.bf16 %v298, %v295
          %v347 = vpack.c.bf16 %v299, %v296
          %v348 = vpack.c.bf16 %v300, %v297
          %v349 = vld [vmem:[%s1] sm:$0xff]
          %v350 = vld [vmem:[%s1 + $0x8] sm:$0xff]
          %v351 = vld [vmem:[%s1 + $0x10] sm:$0xff]
          %v352 = vld [vmem:[%s1 + $0x18] sm:$0xff]
          %v353 = vld [vmem:[%s1 + $0x20] sm:$0xff]
          %v354 = vld [vmem:[%s1 + $0x28] sm:$0xff]
          %v355 = vld [vmem:[%s1 + $0x30] sm:$0xff]
          %v356 = vld [vmem:[%s1 + $0x38] sm:$0xff]
          %v357 = vld [vmem:[%s1 + $0x40] sm:$0xff]
          %v358 = vld [vmem:[%s1 + $0x48] sm:$0xff]
          %v359 = vld [vmem:[%s1 + $0x50] sm:$0xff]
          %v360 = vld [vmem:[%s1 + $0x58] sm:$0xff]
          %v361 = vld [vmem:[%s1 + $0x60] sm:$0xff]
          %v362 = vld [vmem:[%s1 + $0x68] sm:$0xff]
          %v363 = vld [vmem:[%s1 + $0x70] sm:$0xff]
          %v364 = vld [vmem:[%s1 + $0x78] sm:$0xff]
          %v365 = vld [vmem:[%s1 + $0x80] sm:$0xff]
          %v366 = vld [vmem:[%s1 + $0x88] sm:$0xff]
          %v367 = vld [vmem:[%s1 + $0x90] sm:$0xff]
          %v368 = vld [vmem:[%s1 + $0x98] sm:$0xff]
          %v369 = vld [vmem:[%s1 + $0xa0] sm:$0xff]
          %v370 = vld [vmem:[%s1 + $0xa8] sm:$0xff]
          %v371 = vld [vmem:[%s1 + $0xb0] sm:$0xff]
          %v372 = vld [vmem:[%s1 + $0xb8] sm:$0xff]
          %v373 = vld [vmem:[%s1 + $0xc0] sm:$0xff]
          %v374 = vld [vmem:[%s1 + $0xc8] sm:$0xff]
          %v375 = vld [vmem:[%s1 + $0xd0] sm:$0xff]
          %v376 = vld [vmem:[%s1 + $0xd8] sm:$0xff]
          %v377 = vld [vmem:[%s1 + $0xe0] sm:$0xff]
          %v378 = vld [vmem:[%s1 + $0xe8] sm:$0xff]
          %v379 = vld [vmem:[%s1 + $0xf0] sm:$0xff]
          %v380 = vld [vmem:[%s1 + $0xf8] sm:$0xff]
          %v381 = vld [vmem:[%s1 + $0x100] sm:$0xff]
          %v382 = vld [vmem:[%s1 + $0x108] sm:$0xff]
          %v383 = vld [vmem:[%s1 + $0x110] sm:$0xff]
          %v384 = vld [vmem:[%s1 + $0x118] sm:$0xff]
          %v385 = vld [vmem:[%s1 + $0x120] sm:$0xff]
          %v386 = vld [vmem:[%s1 + $0x128] sm:$0xff]
          %v387 = vld [vmem:[%s1 + $0x130] sm:$0xff]
          %v388 = vld [vmem:[%s1 + $0x138] sm:$0xff]
          %v389 = vld [vmem:[%s1 + $0x140] sm:$0xff]
          %v390 = vld [vmem:[%s1 + $0x148] sm:$0xff]
          %v391 = vld [vmem:[%s1 + $0x150] sm:$0xff]
          %v392 = vld [vmem:[%s1 + $0x158] sm:$0xff]
          %v393 = vld [vmem:[%s1 + $0x160] sm:$0xff]
          %v394 = vld [vmem:[%s1 + $0x168] sm:$0xff]
          %v395 = vld [vmem:[%s1 + $0x170] sm:$0xff]
          %v396 = vld [vmem:[%s1 + $0x178] sm:$0xff]
          %v445 = vunpack.c.l.b16 %v349
          %v446 = vunpack.c.h.b16 %v349
          %v447 = vunpack.c.l.b16 %v350
          %v448 = vunpack.c.h.b16 %v350
          %v449 = vunpack.c.l.b16 %v351
          %v450 = vunpack.c.h.b16 %v351
          %v451 = vunpack.c.l.b16 %v352
          %v452 = vunpack.c.h.b16 %v352
          %v453 = vunpack.c.l.b16 %v353
          %v454 = vunpack.c.h.b16 %v353
          %v455 = vunpack.c.l.b16 %v354
          %v456 = vunpack.c.h.b16 %v354
          %v457 = vunpack.c.l.b16 %v355
          %v458 = vunpack.c.h.b16 %v355
          %v459 = vunpack.c.l.b16 %v356
          %v460 = vunpack.c.h.b16 %v356
          %v461 = vunpack.c.l.b16 %v357
          %v462 = vunpack.c.h.b16 %v357
          %v463 = vunpack.c.l.b16 %v358
          %v464 = vunpack.c.h.b16 %v358
          %v465 = vunpack.c.l.b16 %v359
          %v466 = vunpack.c.h.b16 %v359
          %v467 = vunpack.c.l.b16 %v360
          %v468 = vunpack.c.h.b16 %v360
          %v469 = vunpack.c.l.b16 %v361
          %v470 = vunpack.c.h.b16 %v361
          %v471 = vunpack.c.l.b16 %v362
          %v472 = vunpack.c.h.b16 %v362
          %v473 = vunpack.c.l.b16 %v363
          %v474 = vunpack.c.h.b16 %v363
          %v475 = vunpack.c.l.b16 %v364
          %v476 = vunpack.c.h.b16 %v364
          %v477 = vunpack.c.l.b16 %v365
          %v478 = vunpack.c.h.b16 %v365
          %v479 = vunpack.c.l.b16 %v366
          %v480 = vunpack.c.h.b16 %v366
          %v481 = vunpack.c.l.b16 %v367
          %v482 = vunpack.c.h.b16 %v367
          %v483 = vunpack.c.l.b16 %v368
          %v484 = vunpack.c.h.b16 %v368
          %v485 = vunpack.c.l.b16 %v369
          %v486 = vunpack.c.h.b16 %v369
          %v487 = vunpack.c.l.b16 %v370
          %v488 = vunpack.c.h.b16 %v370
          %v489 = vunpack.c.l.b16 %v371
          %v490 = vunpack.c.h.b16 %v371
          %v491 = vunpack.c.l.b16 %v372
          %v492 = vunpack.c.h.b16 %v372
          %v493 = vunpack.c.l.b16 %v373
          %v494 = vunpack.c.h.b16 %v373
          %v495 = vunpack.c.l.b16 %v374
          %v496 = vunpack.c.h.b16 %v374
          %v497 = vunpack.c.l.b16 %v375
          %v498 = vunpack.c.h.b16 %v375
          %v499 = vunpack.c.l.b16 %v376
          %v500 = vunpack.c.h.b16 %v376
          %v501 = vunpack.c.l.b16 %v377
          %v502 = vunpack.c.h.b16 %v377
          %v503 = vunpack.c.l.b16 %v378
          %v504 = vunpack.c.h.b16 %v378
          %v505 = vunpack.c.l.b16 %v379
          %v506 = vunpack.c.h.b16 %v379
          %v507 = vunpack.c.l.b16 %v380
          %v508 = vunpack.c.h.b16 %v380
          %v509 = vunpack.c.l.b16 %v381
          %v510 = vunpack.c.h.b16 %v381
          %v511 = vunpack.c.l.b16 %v382
          %v512 = vunpack.c.h.b16 %v382
          %v513 = vunpack.c.l.b16 %v383
          %v514 = vunpack.c.h.b16 %v383
          %v515 = vunpack.c.l.b16 %v384
          %v516 = vunpack.c.h.b16 %v384
          %v517 = vunpack.c.l.b16 %v385
          %v518 = vunpack.c.h.b16 %v385
          %v519 = vunpack.c.l.b16 %v386
          %v520 = vunpack.c.h.b16 %v386
          %v521 = vunpack.c.l.b16 %v387
          %v522 = vunpack.c.h.b16 %v387
          %v523 = vunpack.c.l.b16 %v388
          %v524 = vunpack.c.h.b16 %v388
          %v525 = vunpack.c.l.b16 %v389
          %v526 = vunpack.c.h.b16 %v389
          %v527 = vunpack.c.l.b16 %v390
          %v528 = vunpack.c.h.b16 %v390
          %v529 = vunpack.c.l.b16 %v391
          %v530 = vunpack.c.h.b16 %v391
          %v531 = vunpack.c.l.b16 %v392
          %v532 = vunpack.c.h.b16 %v392
          %v533 = vunpack.c.l.b16 %v393
          %v534 = vunpack.c.h.b16 %v393
          %v535 = vunpack.c.l.b16 %v394
          %v536 = vunpack.c.h.b16 %v394
          %v537 = vunpack.c.l.b16 %v395
          %v538 = vunpack.c.h.b16 %v395
          %v539 = vunpack.c.l.b16 %v396
          %v540 = vunpack.c.h.b16 %v396
          %v541 = vpack.c.b16 %v447, %v445
          %v542 = vpack.c.b16 %v448, %v446
          %v543 = vpack.c.b16 %v451, %v449
          %v544 = vpack.c.b16 %v452, %v450
          %v545 = vpack.c.b16 %v455, %v453
          %v546 = vpack.c.b16 %v456, %v454
          %v547 = vpack.c.b16 %v459, %v457
          %v548 = vpack.c.b16 %v460, %v458
          %v549 = vpack.c.b16 %v463, %v461
          %v550 = vpack.c.b16 %v464, %v462
          %v551 = vpack.c.b16 %v467, %v465
          %v552 = vpack.c.b16 %v468, %v466
          %v553 = vpack.c.b16 %v471, %v469
          %v554 = vpack.c.b16 %v472, %v470
          %v555 = vpack.c.b16 %v475, %v473
          %v556 = vpack.c.b16 %v476, %v474
          %v557 = vpack.c.b16 %v479, %v477
          %v558 = vpack.c.b16 %v480, %v478
          %v559 = vpack.c.b16 %v483, %v481
          %v560 = vpack.c.b16 %v484, %v482
          %v561 = vpack.c.b16 %v487, %v485
          %v562 = vpack.c.b16 %v488, %v486
          %v563 = vpack.c.b16 %v491, %v489
          %v564 = vpack.c.b16 %v492, %v490
          %v565 = vpack.c.b16 %v495, %v493
          %v566 = vpack.c.b16 %v496, %v494
          %v567 = vpack.c.b16 %v499, %v497
          %v568 = vpack.c.b16 %v500, %v498
          %v569 = vpack.c.b16 %v503, %v501
          %v570 = vpack.c.b16 %v504, %v502
          %v571 = vpack.c.b16 %v507, %v505
          %v572 = vpack.c.b16 %v508, %v506
          %v573 = vpack.c.b16 %v511, %v509
          %v574 = vpack.c.b16 %v512, %v510
          %v575 = vpack.c.b16 %v515, %v513
          %v576 = vpack.c.b16 %v516, %v514
          %v577 = vpack.c.b16 %v519, %v517
          %v578 = vpack.c.b16 %v520, %v518
          %v579 = vpack.c.b16 %v523, %v521
          %v580 = vpack.c.b16 %v524, %v522
          %v581 = vpack.c.b16 %v527, %v525
          %v582 = vpack.c.b16 %v528, %v526
          %v583 = vpack.c.b16 %v531, %v529
          %v584 = vpack.c.b16 %v532, %v530
          %v585 = vpack.c.b16 %v535, %v533
          %v586 = vpack.c.b16 %v536, %v534
          %v587 = vpack.c.b16 %v539, %v537
          %v588 = vpack.c.b16 %v540, %v538
          %637 = vmatprep.subr.bf16.mxu0 %v542
          %638 = vmatpush1.bf16.msra.mxu0 %v541
          %639 = vmatprep.subr.bf16.mxu0 %v544
          %640 = vmatpush1.bf16.msra.mxu0 %v543
          %641 = vmatprep.subr.bf16.mxu0 %v546
          %642 = vmatpush1.bf16.msra.mxu0 %v545
          %643 = vmatprep.subr.bf16.mxu0 %v548
          %644 = vmatpush1.bf16.msra.mxu0 %v547
          %645 = vmatprep.subr.bf16.mxu0 %v550
          %646 = vmatpush1.bf16.msra.mxu0 %v549
          %647 = vmatprep.subr.bf16.mxu0 %v552
          %648 = vmatpush1.bf16.msra.mxu0 %v551
          %649 = vmatprep.subr.bf16.mxu0 %v554
          %650 = vmatpush1.bf16.msra.mxu0 %v553
          %651 = vmatprep.subr.bf16.mxu0 %v556
          %652 = vmatpush1.bf16.msra.mxu0 %v555
          %653 = vmatprep.subr.bf16.mxu0 %v558
          %654 = vmatpush1.bf16.msra.mxu0 %v557
          %655 = vmatprep.subr.bf16.mxu0 %v560
          %656 = vmatpush1.bf16.msra.mxu0 %v559
          %657 = vmatprep.subr.bf16.mxu0 %v562
          %658 = vmatpush1.bf16.msra.mxu0 %v561
          %659 = vmatprep.subr.bf16.mxu0 %v564
          %660 = vmatpush1.bf16.msra.mxu0 %v563
          %661 = vmatprep.subr.bf16.mxu0 %v566
          %662 = vmatpush1.bf16.msra.mxu0 %v565
          %663 = vmatprep.subr.bf16.mxu0 %v568
          %664 = vmatpush1.bf16.msra.mxu0 %v567
          %665 = vmatprep.subr.bf16.mxu0 %v570
          %666 = vmatpush1.bf16.msra.mxu0 %v569
          %667 = vmatprep.subr.bf16.mxu0 %v572
          %668 = vmatpush1.bf16.msra.mxu0 %v571
          %669 = vmatprep.mubr.bf16.mxu0 %v302
          %670 = vmatmul.mubr.bf16.gmra.mrb[0].mxu0 %v301
          %v671 = vpop.f32.mrb[0].mxu0
          %v672 = vadd.f32 0.0, %v671
          %v673 = vpop.f32.mrb[0].mxu0
          %v674 = vadd.f32 0.0, %v673
          %v675 = vpop.f32.mrb[0].mxu0
          %v676 = vadd.f32 0.0, %v675
          %v677 = vpop.f32.mrb[0].mxu0
          %v678 = vadd.f32 0.0, %v677
          %679 = vmatprep.mubr.bf16.mxu0 %v305
          %680 = vmatmul.mubr.bf16.gmra.mrb[0].mxu0 %v304
          %v681 = vpop.f32.mrb[0].mxu0
          %v682 = vadd.f32 0.0, %v681
          %v683 = vpop.f32.mrb[0].mxu0
          %v684 = vadd.f32 0.0, %v683
          %v685 = vpop.f32.mrb[0].mxu0
          %v686 = vadd.f32 0.0, %v685
          %v687 = vpop.f32.mrb[0].mxu0
          %v688 = vadd.f32 0.0, %v687
          %689 = vmatprep.mubr.bf16.mxu0 %v308
          %690 = vmatmul.mubr.bf16.gmra.mrb[0].mxu0 %v307
          %v691 = vpop.f32.mrb[0].mxu0
          %v692 = vadd.f32 0.0, %v691
          %v693 = vpop.f32.mrb[0].mxu0
          %v694 = vadd.f32 0.0, %v693
          %v695 = vpop.f32.mrb[0].mxu0
          %v696 = vadd.f32 0.0, %v695
          %v697 = vpop.f32.mrb[0].mxu0
          %v698 = vadd.f32 0.0, %v697
          %699 = vmatprep.mubr.bf16.mxu0 %v311
          %700 = vmatmul.mubr.bf16.gmra.mrb[0].mxu0 %v310
          %v701 = vpop.f32.mrb[0].mxu0
          %v702 = vadd.f32 0.0, %v701
          %v703 = vpop.f32.mrb[0].mxu0
          %v704 = vadd.f32 0.0, %v703
          %v705 = vpop.f32.mrb[0].mxu0
          %v706 = vadd.f32 0.0, %v705
          %v707 = vpop.f32.mrb[0].mxu0
          %v708 = vadd.f32 0.0, %v707
          %709 = vmatprep.mubr.bf16.mxu0 %v314
          %710 = vmatmul.mubr.bf16.gmra.mrb[0].mxu0 %v313
          %v711 = vpop.f32.mrb[0].mxu0
          %v712 = vadd.f32 0.0, %v711
          %v713 = vpop.f32.mrb[0].mxu0
          %v714 = vadd.f32 0.0, %v713
          %v715 = vpop.f32.mrb[0].mxu0
          %v716 = vadd.f32 0.0, %v715
          %v717 = vpop.f32.mrb[0].mxu0
          %v718 = vadd.f32 0.0, %v717
          %719 = vmatprep.mubr.bf16.mxu0 %v317
          %720 = vmatmul.mubr.bf16.gmra.mrb[0].mxu0 %v316
          %v721 = vpop.f32.mrb[0].mxu0
          %v722 = vadd.f32 0.0, %v721
          %v723 = vpop.f32.mrb[0].mxu0
          %v724 = vadd.f32 0.0, %v723
          %v725 = vpop.f32.mrb[0].mxu0
          %v726 = vadd.f32 0.0, %v725
          %v727 = vpop.f32.mrb[0].mxu0
          %v728 = vadd.f32 0.0, %v727
          %729 = vmatprep.mubr.bf16.mxu0 %v320
          %730 = vmatmul.mubr.bf16.gmra.mrb[0].mxu0 %v319
          %v731 = vpop.f32.mrb[0].mxu0
          %v732 = vadd.f32 0.0, %v731
          %v733 = vpop.f32.mrb[0].mxu0
          %v734 = vadd.f32 0.0, %v733
          %v735 = vpop.f32.mrb[0].mxu0
          %v736 = vadd.f32 0.0, %v735
          %v737 = vpop.f32.mrb[0].mxu0
          %v738 = vadd.f32 0.0, %v737
          %739 = vmatprep.mubr.bf16.mxu0 %v323
          %740 = vmatmul.mubr.bf16.gmra.mrb[0].mxu0 %v322
          %v741 = vpop.f32.mrb[0].mxu0
          %v742 = vadd.f32 0.0, %v741
          %v743 = vpop.f32.mrb[0].mxu0
          %v744 = vadd.f32 0.0, %v743
          %v745 = vpop.f32.mrb[0].mxu0
          %v746 = vadd.f32 0.0, %v745
          %v747 = vpop.f32.mrb[0].mxu0
          %v748 = vadd.f32 0.0, %v747
          %749 = vmatprep.mubr.bf16.mxu0 %v326
          %750 = vmatmul.mubr.bf16.gmra.mrb[0].mxu0 %v325
          %v751 = vpop.f32.mrb[0].mxu0
          %v752 = vadd.f32 0.0, %v751
          %v753 = vpop.f32.mrb[0].mxu0
          %v754 = vadd.f32 0.0, %v753
          %v755 = vpop.f32.mrb[0].mxu0
          %v756 = vadd.f32 0.0, %v755
          %v757 = vpop.f32.mrb[0].mxu0
          %v758 = vadd.f32 0.0, %v757
          %759 = vmatprep.mubr.bf16.mxu0 %v329
          %760 = vmatmul.mubr.bf16.gmra.mrb[0].mxu0 %v328
          %v761 = vpop.f32.mrb[0].mxu0
          %v762 = vadd.f32 0.0, %v761
          %v763 = vpop.f32.mrb[0].mxu0
          %v764 = vadd.f32 0.0, %v763
          %v765 = vpop.f32.mrb[0].mxu0
          %v766 = vadd.f32 0.0, %v765
          %v767 = vpop.f32.mrb[0].mxu0
          %v768 = vadd.f32 0.0, %v767
          %769 = vmatprep.mubr.bf16.mxu0 %v332
          %770 = vmatmul.mubr.bf16.gmra.mrb[0].mxu0 %v331
          %v771 = vpop.f32.mrb[0].mxu0
          %v772 = vadd.f32 0.0, %v771
          %v773 = vpop.f32.mrb[0].mxu0
          %v774 = vadd.f32 0.0, %v773
          %v775 = vpop.f32.mrb[0].mxu0
          %v776 = vadd.f32 0.0, %v775
          %v777 = vpop.f32.mrb[0].mxu0
          %v778 = vadd.f32 0.0, %v777
          %779 = vmatprep.mubr.bf16.mxu0 %v335
          %780 = vmatmul.mubr.bf16.gmra.mrb[0].mxu0 %v334
          %v781 = vpop.f32.mrb[0].mxu0
          %v782 = vadd.f32 0.0, %v781
          %v783 = vpop.f32.mrb[0].mxu0
          %v784 = vadd.f32 0.0, %v783
          %v785 = vpop.f32.mrb[0].mxu0
          %v786 = vadd.f32 0.0, %v785
          %v787 = vpop.f32.mrb[0].mxu0
          %v788 = vadd.f32 0.0, %v787
          %789 = vmatprep.mubr.bf16.mxu0 %v338
          %790 = vmatmul.mubr.bf16.gmra.mrb[0].mxu0 %v337
          %v791 = vpop.f32.mrb[0].mxu0
          %v792 = vadd.f32 0.0, %v791
          %v793 = vpop.f32.mrb[0].mxu0
          %v794 = vadd.f32 0.0, %v793
          %v795 = vpop.f32.mrb[0].mxu0
          %v796 = vadd.f32 0.0, %v795
          %v797 = vpop.f32.mrb[0].mxu0
          %v798 = vadd.f32 0.0, %v797
          %799 = vmatprep.mubr.bf16.mxu0 %v341
          %800 = vmatmul.mubr.bf16.gmra.mrb[0].mxu0 %v340
          %v801 = vpop.f32.mrb[0].mxu0
          %v802 = vadd.f32 0.0, %v801
          %v803 = vpop.f32.mrb[0].mxu0
          %v804 = vadd.f32 0.0, %v803
          %v805 = vpop.f32.mrb[0].mxu0
          %v806 = vadd.f32 0.0, %v805
          %v807 = vpop.f32.mrb[0].mxu0
          %v808 = vadd.f32 0.0, %v807
          %809 = vmatprep.mubr.bf16.mxu0 %v344
          %810 = vmatmul.mubr.bf16.gmra.mrb[0].mxu0 %v343
          %v811 = vpop.f32.mrb[0].mxu0
          %v812 = vadd.f32 0.0, %v811
          %v813 = vpop.f32.mrb[0].mxu0
          %v814 = vadd.f32 0.0, %v813
          %v815 = vpop.f32.mrb[0].mxu0
          %v816 = vadd.f32 0.0, %v815
          %v817 = vpop.f32.mrb[0].mxu0
          %v818 = vadd.f32 0.0, %v817
          %819 = vmatprep.mubr.bf16.mxu0 %v347
          %820 = vmatmul.mubr.bf16.gmra.mrb[0].mxu0 %v346
          %v821 = vpop.f32.mrb[0].mxu0
          %v822 = vadd.f32 0.0, %v821
          %v823 = vpop.f32.mrb[0].mxu0
          %v824 = vadd.f32 0.0, %v823
          %v825 = vpop.f32.mrb[0].mxu0
          %v826 = vadd.f32 0.0, %v825
          %v827 = vpop.f32.mrb[0].mxu0
          %v828 = vadd.f32 0.0, %v827
          %829 = vdwg.mxu0
          %830 = vmatprep.subr.bf16.mxu0 %v574
          %831 = vmatpush1.bf16.msra.mxu0 %v573
          %832 = vmatprep.subr.bf16.mxu0 %v576
          %833 = vmatpush1.bf16.msra.mxu0 %v575
          %834 = vmatprep.subr.bf16.mxu0 %v578
          %835 = vmatpush1.bf16.msra.mxu0 %v577
          %836 = vmatprep.subr.bf16.mxu0 %v580
          %837 = vmatpush1.bf16.msra.mxu0 %v579
          %838 = vmatprep.subr.bf16.mxu0 %v582
          %839 = vmatpush1.bf16.msra.mxu0 %v581
          %840 = vmatprep.subr.bf16.mxu0 %v584
          %841 = vmatpush1.bf16.msra.mxu0 %v583
          %842 = vmatprep.subr.bf16.mxu0 %v586
          %843 = vmatpush1.bf16.msra.mxu0 %v585
          %844 = vmatprep.subr.bf16.mxu0 %v588
          %845 = vmatpush1.bf16.msra.mxu0 %v587
          %846 = vmatprep.subr.bf16.mxu0 0
          %847 = vmatpush1.bf16.msra.mxu0 0
          %848 = vmatprep.subr.bf16.mxu0 0
          %849 = vmatpush1.bf16.msra.mxu0 0
          %850 = vmatprep.subr.bf16.mxu0 0
          %851 = vmatpush1.bf16.msra.mxu0 0
          %852 = vmatprep.subr.bf16.mxu0 0
          %853 = vmatpush1.bf16.msra.mxu0 0
          %854 = vmatprep.subr.bf16.mxu0 0
          %855 = vmatpush1.bf16.msra.mxu0 0
          %856 = vmatprep.subr.bf16.mxu0 0
          %857 = vmatpush1.bf16.msra.mxu0 0
          %858 = vmatprep.subr.bf16.mxu0 0
          %859 = vmatpush1.bf16.msra.mxu0 0
          %860 = vmatprep.subr.bf16.mxu0 0
          %861 = vmatpush1.bf16.msra.mxu0 0
          %862 = vmatprep.mubr.bf16.mxu0 0
          %863 = vmatmul.mubr.bf16.gmra.mrb[0].mxu0 %v303
          %v864 = vpop.f32.mrb[0].mxu0
          %v865 = vadd.f32 %v672, %v864
          %v866 = vpop.f32.mrb[0].mxu0
          %v867 = vadd.f32 %v674, %v866
          %v868 = vpop.f32.mrb[0].mxu0
          %v869 = vadd.f32 %v676, %v868
          %v870 = vpop.f32.mrb[0].mxu0
          %v871 = vadd.f32 %v678, %v870
          %872 = vmatprep.mubr.bf16.mxu0 0
          %873 = vmatmul.mubr.bf16.gmra.mrb[0].mxu0 %v306
          %v874 = vpop.f32.mrb[0].mxu0
          %v875 = vadd.f32 %v682, %v874
          %v876 = vpop.f32.mrb[0].mxu0
          %v877 = vadd.f32 %v684, %v876
          %v878 = vpop.f32.mrb[0].mxu0
          %v879 = vadd.f32 %v686, %v878
          %v880 = vpop.f32.mrb[0].mxu0
          %v881 = vadd.f32 %v688, %v880
          %882 = vmatprep.mubr.bf16.mxu0 0
          %883 = vmatmul.mubr.bf16.gmra.mrb[0].mxu0 %v309
          %v884 = vpop.f32.mrb[0].mxu0
          %v885 = vadd.f32 %v692, %v884
          %v886 = vpop.f32.mrb[0].mxu0
          %v887 = vadd.f32 %v694, %v886
          %v888 = vpop.f32.mrb[0].mxu0
          %v889 = vadd.f32 %v696, %v888
          %v890 = vpop.f32.mrb[0].mxu0
          %v891 = vadd.f32 %v698, %v890
          %892 = vmatprep.mubr.bf16.mxu0 0
          %893 = vmatmul.mubr.bf16.gmra.mrb[0].mxu0 %v312
          %v894 = vpop.f32.mrb[0].mxu0
          %v895 = vadd.f32 %v702, %v894
          %v896 = vpop.f32.mrb[0].mxu0
          %v897 = vadd.f32 %v704, %v896
          %v898 = vpop.f32.mrb[0].mxu0
          %v899 = vadd.f32 %v706, %v898
          %v900 = vpop.f32.mrb[0].mxu0
          %v901 = vadd.f32 %v708, %v900
          %902 = vmatprep.mubr.bf16.mxu0 0
          %903 = vmatmul.mubr.bf16.gmra.mrb[0].mxu0 %v315
          %v904 = vpop.f32.mrb[0].mxu0
          %v905 = vadd.f32 %v712, %v904
          %v906 = vpop.f32.mrb[0].mxu0
          %v907 = vadd.f32 %v714, %v906
          %v908 = vpop.f32.mrb[0].mxu0
          %v909 = vadd.f32 %v716, %v908
          %v910 = vpop.f32.mrb[0].mxu0
          %v911 = vadd.f32 %v718, %v910
          %912 = vmatprep.mubr.bf16.mxu0 0
          %913 = vmatmul.mubr.bf16.gmra.mrb[0].mxu0 %v318
          %v914 = vpop.f32.mrb[0].mxu0
          %v915 = vadd.f32 %v722, %v914
          %v916 = vpop.f32.mrb[0].mxu0
          %v917 = vadd.f32 %v724, %v916
          %v918 = vpop.f32.mrb[0].mxu0
          %v919 = vadd.f32 %v726, %v918
          %v920 = vpop.f32.mrb[0].mxu0
          %v921 = vadd.f32 %v728, %v920
          %922 = vmatprep.mubr.bf16.mxu0 0
          %923 = vmatmul.mubr.bf16.gmra.mrb[0].mxu0 %v321
          %v924 = vpop.f32.mrb[0].mxu0
          %v925 = vadd.f32 %v732, %v924
          %v926 = vpop.f32.mrb[0].mxu0
          %v927 = vadd.f32 %v734, %v926
          %v928 = vpop.f32.mrb[0].mxu0
          %v929 = vadd.f32 %v736, %v928
          %v930 = vpop.f32.mrb[0].mxu0
          %v931 = vadd.f32 %v738, %v930
          %932 = vmatprep.mubr.bf16.mxu0 0
          %933 = vmatmul.mubr.bf16.gmra.mrb[0].mxu0 %v324
          %v934 = vpop.f32.mrb[0].mxu0
          %v935 = vadd.f32 %v742, %v934
          %v936 = vpop.f32.mrb[0].mxu0
          %v937 = vadd.f32 %v744, %v936
          %v938 = vpop.f32.mrb[0].mxu0
          %v939 = vadd.f32 %v746, %v938
          %v940 = vpop.f32.mrb[0].mxu0
          %v941 = vadd.f32 %v748, %v940
          %942 = vmatprep.mubr.bf16.mxu0 0
          %943 = vmatmul.mubr.bf16.gmra.mrb[0].mxu0 %v327
          %v944 = vpop.f32.mrb[0].mxu0
          %v945 = vadd.f32 %v752, %v944
          %v946 = vpop.f32.mrb[0].mxu0
          %v947 = vadd.f32 %v754, %v946
          %v948 = vpop.f32.mrb[0].mxu0
          %v949 = vadd.f32 %v756, %v948
          %v950 = vpop.f32.mrb[0].mxu0
          %v951 = vadd.f32 %v758, %v950
          %952 = vmatprep.mubr.bf16.mxu0 0
          %953 = vmatmul.mubr.bf16.gmra.mrb[0].mxu0 %v330
          %v954 = vpop.f32.mrb[0].mxu0
          %v955 = vadd.f32 %v762, %v954
          %v956 = vpop.f32.mrb[0].mxu0
          %v957 = vadd.f32 %v764, %v956
          %v958 = vpop.f32.mrb[0].mxu0
          %v959 = vadd.f32 %v766, %v958
          %v960 = vpop.f32.mrb[0].mxu0
          %v961 = vadd.f32 %v768, %v960
          %962 = vmatprep.mubr.bf16.mxu0 0
          %963 = vmatmul.mubr.bf16.gmra.mrb[0].mxu0 %v333
          %v964 = vpop.f32.mrb[0].mxu0
          %v965 = vadd.f32 %v772, %v964
          %v966 = vpop.f32.mrb[0].mxu0
          %v967 = vadd.f32 %v774, %v966
          %v968 = vpop.f32.mrb[0].mxu0
          %v969 = vadd.f32 %v776, %v968
          %v970 = vpop.f32.mrb[0].mxu0
          %v971 = vadd.f32 %v778, %v970
          %972 = vmatprep.mubr.bf16.mxu0 0
          %973 = vmatmul.mubr.bf16.gmra.mrb[0].mxu0 %v336
          %v974 = vpop.f32.mrb[0].mxu0
          %v975 = vadd.f32 %v782, %v974
          %v976 = vpop.f32.mrb[0].mxu0
          %v977 = vadd.f32 %v784, %v976
          %v978 = vpop.f32.mrb[0].mxu0
          %v979 = vadd.f32 %v786, %v978
          %v980 = vpop.f32.mrb[0].mxu0
          %v981 = vadd.f32 %v788, %v980
          %982 = vmatprep.mubr.bf16.mxu0 0
          %983 = vmatmul.mubr.bf16.gmra.mrb[0].mxu0 %v339
          %v984 = vpop.f32.mrb[0].mxu0
          %v985 = vadd.f32 %v792, %v984
          %v986 = vpop.f32.mrb[0].mxu0
          %v987 = vadd.f32 %v794, %v986
          %v988 = vpop.f32.mrb[0].mxu0
          %v989 = vadd.f32 %v796, %v988
          %v990 = vpop.f32.mrb[0].mxu0
          %v991 = vadd.f32 %v798, %v990
          %992 = vmatprep.mubr.bf16.mxu0 0
          %993 = vmatmul.mubr.bf16.gmra.mrb[0].mxu0 %v342
          %v994 = vpop.f32.mrb[0].mxu0
          %v995 = vadd.f32 %v802, %v994
          %v996 = vpop.f32.mrb[0].mxu0
          %v997 = vadd.f32 %v804, %v996
          %v998 = vpop.f32.mrb[0].mxu0
          %v999 = vadd.f32 %v806, %v998
          %v1000 = vpop.f32.mrb[0].mxu0
          %v1001 = vadd.f32 %v808, %v1000
          %1002 = vmatprep.mubr.bf16.mxu0 0
          %1003 = vmatmul.mubr.bf16.gmra.mrb[0].mxu0 %v345
          %v1004 = vpop.f32.mrb[0].mxu0
          %v1005 = vadd.f32 %v812, %v1004
          %v1006 = vpop.f32.mrb[0].mxu0
          %v1007 = vadd.f32 %v814, %v1006
          %v1008 = vpop.f32.mrb[0].mxu0
          %v1009 = vadd.f32 %v816, %v1008
          %v1010 = vpop.f32.mrb[0].mxu0
          %v1011 = vadd.f32 %v818, %v1010
          %1012 = vmatprep.mubr.bf16.mxu0 0
          %1013 = vmatmul.mubr.bf16.gmra.mrb[0].mxu0 %v348
          %v1014 = vpop.f32.mrb[0].mxu0
          %v1015 = vadd.f32 %v822, %v1014
          %v1016 = vpop.f32.mrb[0].mxu0
          %v1017 = vadd.f32 %v824, %v1016
          %v1018 = vpop.f32.mrb[0].mxu0
          %v1019 = vadd.f32 %v826, %v1018
          %v1020 = vpop.f32.mrb[0].mxu0
          %v1021 = vadd.f32 %v828, %v1020
          %1022 = vdwg.mxu0
          %v1023 = vpack.c.bf16 %v869, %v865
          %v1024 = vpack.c.bf16 %v879, %v875
          %v1025 = vpack.c.bf16 %v889, %v885
          %v1026 = vpack.c.bf16 %v899, %v895
          %v1027 = vpack.c.bf16 %v909, %v905
          %v1028 = vpack.c.bf16 %v919, %v915
          %v1029 = vpack.c.bf16 %v929, %v925
          %v1030 = vpack.c.bf16 %v939, %v935
          %v1031 = vpack.c.bf16 %v949, %v945
          %v1032 = vpack.c.bf16 %v959, %v955
          %v1033 = vpack.c.bf16 %v969, %v965
          %v1034 = vpack.c.bf16 %v979, %v975
          %v1035 = vpack.c.bf16 %v989, %v985
          %v1036 = vpack.c.bf16 %v999, %v995
          %v1037 = vpack.c.bf16 %v1009, %v1005
          %v1038 = vpack.c.bf16 %v1019, %v1015
          %vm1039 = vcmask 523264
          %1040 = vst.msk [vmem:[#allocation2] sm:$0xff] %vm1039, %v1023
          %1041 = vst.msk [vmem:[#allocation2 + $0x8] sm:$0xff] %vm1039, %v1024
          %1042 = vst.msk [vmem:[#allocation2 + $0x10] sm:$0xff] %vm1039, %v1025
          %1043 = vst.msk [vmem:[#allocation2 + $0x18] sm:$0xff] %vm1039, %v1026
          %1044 = vst.msk [vmem:[#allocation2 + $0x20] sm:$0xff] %vm1039, %v1027
          %1045 = vst.msk [vmem:[#allocation2 + $0x28] sm:$0xff] %vm1039, %v1028
          %1046 = vst.msk [vmem:[#allocation2 + $0x30] sm:$0xff] %vm1039, %v1029
          %1047 = vst.msk [vmem:[#allocation2 + $0x38] sm:$0xff] %vm1039, %v1030
          %1048 = vst.msk [vmem:[#allocation2 + $0x40] sm:$0xff] %vm1039, %v1031
          %1049 = vst.msk [vmem:[#allocation2 + $0x48] sm:$0xff] %vm1039, %v1032
          %1050 = vst.msk [vmem:[#allocation2 + $0x50] sm:$0xff] %vm1039, %v1033
          %1051 = vst.msk [vmem:[#allocation2 + $0x58] sm:$0xff] %vm1039, %v1034
          %1052 = vst.msk [vmem:[#allocation2 + $0x60] sm:$0xff] %vm1039, %v1035
          %1053 = vst.msk [vmem:[#allocation2 + $0x68] sm:$0xff] %vm1039, %v1036
          %1054 = vst.msk [vmem:[#allocation2 + $0x70] sm:$0xff] %vm1039, %v1037
          %1055 = vst.msk [vmem:[#allocation2 + $0x78] sm:$0xff] %vm1039, %v1038
          %s1056 = smul.u32 %s22, 256
          %1073 = vrot.lane.b32.xlu0 %v1023, 64
          %v1074 = vpop.permute.xlu0 %1073
          %1075 = vrot.lane.b32.xlu0 %v1024, 64
          %v1076 = vpop.permute.xlu0 %1075
          %1077 = vrot.lane.b32.xlu0 %v1025, 64
          %v1078 = vpop.permute.xlu0 %1077
          %1079 = vrot.lane.b32.xlu0 %v1026, 64
          %v1080 = vpop.permute.xlu0 %1079
          %1081 = vrot.lane.b32.xlu0 %v1027, 64
          %v1082 = vpop.permute.xlu0 %1081
          %1083 = vrot.lane.b32.xlu0 %v1028, 64
          %v1084 = vpop.permute.xlu0 %1083
          %1085 = vrot.lane.b32.xlu0 %v1029, 64
          %v1086 = vpop.permute.xlu0 %1085
          %1087 = vrot.lane.b32.xlu0 %v1030, 64
          %v1088 = vpop.permute.xlu0 %1087
          %1089 = vrot.lane.b32.xlu0 %v1031, 64
          %v1090 = vpop.permute.xlu0 %1089
          %1091 = vrot.lane.b32.xlu0 %v1032, 64
          %v1092 = vpop.permute.xlu0 %1091
          %1093 = vrot.lane.b32.xlu0 %v1033, 64
          %v1094 = vpop.permute.xlu0 %1093
          %1095 = vrot.lane.b32.xlu0 %v1034, 64
          %v1096 = vpop.permute.xlu0 %1095
          %1097 = vrot.lane.b32.xlu0 %v1035, 64
          %v1098 = vpop.permute.xlu0 %1097
          %1099 = vrot.lane.b32.xlu0 %v1036, 64
          %v1100 = vpop.permute.xlu0 %1099
          %1101 = vrot.lane.b32.xlu0 %v1037, 64
          %v1102 = vpop.permute.xlu0 %1101
          %1103 = vrot.lane.b32.xlu0 %v1038, 64
          %v1104 = vpop.permute.xlu0 %1103
          %s1121 = sshra.s32 %s1056, 4
          %s1122 = sand.u32 %s1056, 15
          %s1123 = smul.addr %s1121, 8
          %s1124 = scalar_lea.vmem [#allocation3], %s1123
          %1125 = vst.msk [vmem:[%s1124] sm:$0xff] %vm1039, %v1074
          %1126 = vst.msk [vmem:[%s1124 + $0x8] sm:$0xff] %vm1039, %v1076
          %1127 = vst.msk [vmem:[%s1124 + $0x10] sm:$0xff] %vm1039, %v1078
          %1128 = vst.msk [vmem:[%s1124 + $0x18] sm:$0xff] %vm1039, %v1080
          %1129 = vst.msk [vmem:[%s1124 + $0x20] sm:$0xff] %vm1039, %v1082
          %1130 = vst.msk [vmem:[%s1124 + $0x28] sm:$0xff] %vm1039, %v1084
          %1131 = vst.msk [vmem:[%s1124 + $0x30] sm:$0xff] %vm1039, %v1086
          %1132 = vst.msk [vmem:[%s1124 + $0x38] sm:$0xff] %vm1039, %v1088
          %1133 = vst.msk [vmem:[%s1124 + $0x40] sm:$0xff] %vm1039, %v1090
          %1134 = vst.msk [vmem:[%s1124 + $0x48] sm:$0xff] %vm1039, %v1092
          %1135 = vst.msk [vmem:[%s1124 + $0x50] sm:$0xff] %vm1039, %v1094
          %1136 = vst.msk [vmem:[%s1124 + $0x58] sm:$0xff] %vm1039, %v1096
          %1137 = vst.msk [vmem:[%s1124 + $0x60] sm:$0xff] %vm1039, %v1098
          %1138 = vst.msk [vmem:[%s1124 + $0x68] sm:$0xff] %vm1039, %v1100
          %1139 = vst.msk [vmem:[%s1124 + $0x70] sm:$0xff] %vm1039, %v1102
          %1140 = vst.msk [vmem:[%s1124 + $0x78] sm:$0xff] %vm1039, %v1104
          %v1141 = vpack.c.bf16 %v871, %v867
          %v1142 = vpack.c.bf16 %v881, %v877
          %v1143 = vpack.c.bf16 %v891, %v887
          %v1144 = vpack.c.bf16 %v901, %v897
          %v1145 = vpack.c.bf16 %v911, %v907
          %v1146 = vpack.c.bf16 %v921, %v917
          %v1147 = vpack.c.bf16 %v931, %v927
          %v1148 = vpack.c.bf16 %v941, %v937
          %v1149 = vpack.c.bf16 %v951, %v947
          %v1150 = vpack.c.bf16 %v961, %v957
          %v1151 = vpack.c.bf16 %v971, %v967
          %v1152 = vpack.c.bf16 %v981, %v977
          %v1153 = vpack.c.bf16 %v991, %v987
          %v1154 = vpack.c.bf16 %v1001, %v997
          %v1155 = vpack.c.bf16 %v1011, %v1007
          %v1156 = vpack.c.bf16 %v1021, %v1017
          %s1157 = smul.addr %s1121, 8
          %s1158 = scalar_lea.vmem [#allocation4], %s1157
          %1159 = vst.msk [vmem:[%s1158] sm:$0xff] %vm1039, %v1141
          %1160 = vst.msk [vmem:[%s1158 + $0x8] sm:$0xff] %vm1039, %v1142
          %1161 = vst.msk [vmem:[%s1158 + $0x10] sm:$0xff] %vm1039, %v1143
          %1162 = vst.msk [vmem:[%s1158 + $0x18] sm:$0xff] %vm1039, %v1144
          %1163 = vst.msk [vmem:[%s1158 + $0x20] sm:$0xff] %vm1039, %v1145
          %1164 = vst.msk [vmem:[%s1158 + $0x28] sm:$0xff] %vm1039, %v1146
          %1165 = vst.msk [vmem:[%s1158 + $0x30] sm:$0xff] %vm1039, %v1147
          %1166 = vst.msk [vmem:[%s1158 + $0x38] sm:$0xff] %vm1039, %v1148
          %1167 = vst.msk [vmem:[%s1158 + $0x40] sm:$0xff] %vm1039, %v1149
          %1168 = vst.msk [vmem:[%s1158 + $0x48] sm:$0xff] %vm1039, %v1150
          %1169 = vst.msk [vmem:[%s1158 + $0x50] sm:$0xff] %vm1039, %v1151
          %1170 = vst.msk [vmem:[%s1158 + $0x58] sm:$0xff] %vm1039, %v1152
          %1171 = vst.msk [vmem:[%s1158 + $0x60] sm:$0xff] %vm1039, %v1153
          %1172 = vst.msk [vmem:[%s1158 + $0x68] sm:$0xff] %vm1039, %v1154
          %1173 = vst.msk [vmem:[%s1158 + $0x70] sm:$0xff] %vm1039, %v1155
          %1174 = vst.msk [vmem:[%s1158 + $0x78] sm:$0xff] %vm1039, %v1156
          %vm1175 = vcmask 7168
          %1176 = vst.msk [vmem:[#allocation5] sm:$0xff] %vm1175, -1e+30
          %1177 = vst.msk [vmem:[#allocation5 + $0x8] sm:$0xff] %vm1175, -1e+30
          %1178 = vst.msk [vmem:[#allocation5 + $0x10] sm:$0xff] %vm1175, -1e+30
          %1179 = vst.msk [vmem:[#allocation5 + $0x18] sm:$0xff] %vm1175, -1e+30
          %1180 = vst.msk [vmem:[#allocation5 + $0x20] sm:$0xff] %vm1175, -1e+30
          %1181 = vst.msk [vmem:[#allocation5 + $0x28] sm:$0xff] %vm1175, -1e+30
          %1182 = vst.msk [vmem:[#allocation5 + $0x30] sm:$0xff] %vm1175, -1e+30
          %1183 = vst.msk [vmem:[#allocation5 + $0x38] sm:$0xff] %vm1175, -1e+30
          %1184 = vst.msk [vmem:[#allocation5 + $0x40] sm:$0xff] %vm1175, -1e+30
          %1185 = vst.msk [vmem:[#allocation5 + $0x48] sm:$0xff] %vm1175, -1e+30
          %1186 = vst.msk [vmem:[#allocation5 + $0x50] sm:$0xff] %vm1175, -1e+30
          %1187 = vst.msk [vmem:[#allocation5 + $0x58] sm:$0xff] %vm1175, -1e+30
          %1188 = vst.msk [vmem:[#allocation5 + $0x60] sm:$0xff] %vm1175, -1e+30
          %1189 = vst.msk [vmem:[#allocation5 + $0x68] sm:$0xff] %vm1175, -1e+30
          %1190 = vst.msk [vmem:[#allocation5 + $0x70] sm:$0xff] %vm1175, -1e+30
          %1191 = vst.msk [vmem:[#allocation5 + $0x78] sm:$0xff] %vm1175, -1e+30
          %1192 = vst.msk [vmem:[#allocation5 + $0x80] sm:$0xff] %vm1175, -1e+30
          %1193 = vst.msk [vmem:[#allocation5 + $0x88] sm:$0xff] %vm1175, -1e+30
          %1194 = vst.msk [vmem:[#allocation5 + $0x90] sm:$0xff] %vm1175, -1e+30
          %1195 = vst.msk [vmem:[#allocation5 + $0x98] sm:$0xff] %vm1175, -1e+30
          %1196 = vst.msk [vmem:[#allocation5 + $0xa0] sm:$0xff] %vm1175, -1e+30
          %1197 = vst.msk [vmem:[#allocation5 + $0xa8] sm:$0xff] %vm1175, -1e+30
          %1198 = vst.msk [vmem:[#allocation5 + $0xb0] sm:$0xff] %vm1175, -1e+30
          %1199 = vst.msk [vmem:[#allocation5 + $0xb8] sm:$0xff] %vm1175, -1e+30
          %1200 = vst.msk [vmem:[#allocation5 + $0xc0] sm:$0xff] %vm1175, -1e+30
          %1201 = vst.msk [vmem:[#allocation5 + $0xc8] sm:$0xff] %vm1175, -1e+30
          %1202 = vst.msk [vmem:[#allocation5 + $0xd0] sm:$0xff] %vm1175, -1e+30
          %1203 = vst.msk [vmem:[#allocation5 + $0xd8] sm:$0xff] %vm1175, -1e+30
          %1204 = vst.msk [vmem:[#allocation5 + $0xe0] sm:$0xff] %vm1175, -1e+30
          %1205 = vst.msk [vmem:[#allocation5 + $0xe8] sm:$0xff] %vm1175, -1e+30
          %1206 = vst.msk [vmem:[#allocation5 + $0xf0] sm:$0xff] %vm1175, -1e+30
          %1207 = vst.msk [vmem:[#allocation5 + $0xf8] sm:$0xff] %vm1175, -1e+30
          %1208 = vst.msk [vmem:[#allocation6] sm:$0xff] %vm1175, 0.0
          %1209 = vst.msk [vmem:[#allocation6 + $0x8] sm:$0xff] %vm1175, 0.0
          %1210 = vst.msk [vmem:[#allocation6 + $0x10] sm:$0xff] %vm1175, 0.0
          %1211 = vst.msk [vmem:[#allocation6 + $0x18] sm:$0xff] %vm1175, 0.0
          %1212 = vst.msk [vmem:[#allocation6 + $0x20] sm:$0xff] %vm1175, 0.0
          %1213 = vst.msk [vmem:[#allocation6 + $0x28] sm:$0xff] %vm1175, 0.0
          %1214 = vst.msk [vmem:[#allocation6 + $0x30] sm:$0xff] %vm1175, 0.0
          %1215 = vst.msk [vmem:[#allocation6 + $0x38] sm:$0xff] %vm1175, 0.0
          %1216 = vst.msk [vmem:[#allocation6 + $0x40] sm:$0xff] %vm1175, 0.0
          %1217 = vst.msk [vmem:[#allocation6 + $0x48] sm:$0xff] %vm1175, 0.0
          %1218 = vst.msk [vmem:[#allocation6 + $0x50] sm:$0xff] %vm1175, 0.0
          %1219 = vst.msk [vmem:[#allocation6 + $0x58] sm:$0xff] %vm1175, 0.0
          %1220 = vst.msk [vmem:[#allocation6 + $0x60] sm:$0xff] %vm1175, 0.0
          %1221 = vst.msk [vmem:[#allocation6 + $0x68] sm:$0xff] %vm1175, 0.0
          %1222 = vst.msk [vmem:[#allocation6 + $0x70] sm:$0xff] %vm1175, 0.0
          %1223 = vst.msk [vmem:[#allocation6 + $0x78] sm:$0xff] %vm1175, 0.0
          %1224 = vst.msk [vmem:[#allocation6 + $0x80] sm:$0xff] %vm1175, 0.0
          %1225 = vst.msk [vmem:[#allocation6 + $0x88] sm:$0xff] %vm1175, 0.0
          %1226 = vst.msk [vmem:[#allocation6 + $0x90] sm:$0xff] %vm1175, 0.0
          %1227 = vst.msk [vmem:[#allocation6 + $0x98] sm:$0xff] %vm1175, 0.0
          %1228 = vst.msk [vmem:[#allocation6 + $0xa0] sm:$0xff] %vm1175, 0.0
          %1229 = vst.msk [vmem:[#allocation6 + $0xa8] sm:$0xff] %vm1175, 0.0
          %1230 = vst.msk [vmem:[#allocation6 + $0xb0] sm:$0xff] %vm1175, 0.0
          %1231 = vst.msk [vmem:[#allocation6 + $0xb8] sm:$0xff] %vm1175, 0.0
          %1232 = vst.msk [vmem:[#allocation6 + $0xc0] sm:$0xff] %vm1175, 0.0
          %1233 = vst.msk [vmem:[#allocation6 + $0xc8] sm:$0xff] %vm1175, 0.0
          %1234 = vst.msk [vmem:[#allocation6 + $0xd0] sm:$0xff] %vm1175, 0.0
          %1235 = vst.msk [vmem:[#allocation6 + $0xd8] sm:$0xff] %vm1175, 0.0
          %1236 = vst.msk [vmem:[#allocation6 + $0xe0] sm:$0xff] %vm1175, 0.0
          %1237 = vst.msk [vmem:[#allocation6 + $0xe8] sm:$0xff] %vm1175, 0.0
          %1238 = vst.msk [vmem:[#allocation6 + $0xf0] sm:$0xff] %vm1175, 0.0
          %1239 = vst.msk [vmem:[#allocation6 + $0xf8] sm:$0xff] %vm1175, 0.0
          %1240 = vst.msk [vmem:[#allocation7] sm:$0xff] %vm1039, 0.0
          %1241 = vst.msk [vmem:[#allocation7 + $0x8] sm:$0xff] %vm1039, 0.0
          %1242 = vst.msk [vmem:[#allocation7 + $0x10] sm:$0xff] %vm1039, 0.0
          %1243 = vst.msk [vmem:[#allocation7 + $0x18] sm:$0xff] %vm1039, 0.0
          %1244 = vst.msk [vmem:[#allocation7 + $0x20] sm:$0xff] %vm1039, 0.0
          %1245 = vst.msk [vmem:[#allocation7 + $0x28] sm:$0xff] %vm1039, 0.0
          %1246 = vst.msk [vmem:[#allocation7 + $0x30] sm:$0xff] %vm1039, 0.0
          %1247 = vst.msk [vmem:[#allocation7 + $0x38] sm:$0xff] %vm1039, 0.0
          %1248 = vst.msk [vmem:[#allocation7 + $0x40] sm:$0xff] %vm1039, 0.0
          %1249 = vst.msk [vmem:[#allocation7 + $0x48] sm:$0xff] %vm1039, 0.0
          %1250 = vst.msk [vmem:[#allocation7 + $0x50] sm:$0xff] %vm1039, 0.0
          %1251 = vst.msk [vmem:[#allocation7 + $0x58] sm:$0xff] %vm1039, 0.0
          %1252 = vst.msk [vmem:[#allocation7 + $0x60] sm:$0xff] %vm1039, 0.0
          %1253 = vst.msk [vmem:[#allocation7 + $0x68] sm:$0xff] %vm1039, 0.0
          %1254 = vst.msk [vmem:[#allocation7 + $0x70] sm:$0xff] %vm1039, 0.0
          %1255 = vst.msk [vmem:[#allocation7 + $0x78] sm:$0xff] %vm1039, 0.0
          %1256 = vst.msk [vmem:[#allocation7 + $0x80] sm:$0xff] %vm1039, 0.0
          %1257 = vst.msk [vmem:[#allocation7 + $0x88] sm:$0xff] %vm1039, 0.0
          %1258 = vst.msk [vmem:[#allocation7 + $0x90] sm:$0xff] %vm1039, 0.0
          %1259 = vst.msk [vmem:[#allocation7 + $0x98] sm:$0xff] %vm1039, 0.0
          %1260 = vst.msk [vmem:[#allocation7 + $0xa0] sm:$0xff] %vm1039, 0.0
          %1261 = vst.msk [vmem:[#allocation7 + $0xa8] sm:$0xff] %vm1039, 0.0
          %1262 = vst.msk [vmem:[#allocation7 + $0xb0] sm:$0xff] %vm1039, 0.0
          %1263 = vst.msk [vmem:[#allocation7 + $0xb8] sm:$0xff] %vm1039, 0.0
          %1264 = vst.msk [vmem:[#allocation7 + $0xc0] sm:$0xff] %vm1039, 0.0
          %1265 = vst.msk [vmem:[#allocation7 + $0xc8] sm:$0xff] %vm1039, 0.0
          %1266 = vst.msk [vmem:[#allocation7 + $0xd0] sm:$0xff] %vm1039, 0.0
          %1267 = vst.msk [vmem:[#allocation7 + $0xd8] sm:$0xff] %vm1039, 0.0
          %1268 = vst.msk [vmem:[#allocation7 + $0xe0] sm:$0xff] %vm1039, 0.0
          %1269 = vst.msk [vmem:[#allocation7 + $0xe8] sm:$0xff] %vm1039, 0.0
          %1270 = vst.msk [vmem:[#allocation7 + $0xf0] sm:$0xff] %vm1039, 0.0
          %1271 = vst.msk [vmem:[#allocation7 + $0xf8] sm:$0xff] %vm1039, 0.0
        $region36: #{tpu_custom_call.1} parent=27 // pred_fallthru
          _
        %p1272 = scmp.eq.s32.totalorder %s23, %s22
        // Predicated region
        $region37: #{tpu_custom_call.1} parent=27 // pred_check
          %p1273 = pneg %p1272
        $region38: #{tpu_custom_call.1} parent=27 // pred_check_branch
          %1275 = sbr.rel (%p1273) target = $region40
        $region39: #{tpu_custom_call.1} parent=27 // pred_region
          %s1276 = smul.u32 %s23, 256
          %s1277 = sshra.s32 %s1276, 4
          %s1278 = sand.u32 %s1276, 15
          %s1279 = smul.addr %s1277, 8
          %s1280 = scalar_lea.vmem [#allocation3], %s1279
          %v1281 = vld [vmem:[%s1280] sm:$0xff]
          %v1282 = vld [vmem:[%s1280 + $0x8] sm:$0xff]
          %v1283 = vld [vmem:[%s1280 + $0x10] sm:$0xff]
          %v1284 = vld [vmem:[%s1280 + $0x18] sm:$0xff]
          %v1285 = vld [vmem:[%s1280 + $0x20] sm:$0xff]
          %v1286 = vld [vmem:[%s1280 + $0x28] sm:$0xff]
          %v1287 = vld [vmem:[%s1280 + $0x30] sm:$0xff]
          %v1288 = vld [vmem:[%s1280 + $0x38] sm:$0xff]
          %v1289 = vld [vmem:[%s1280 + $0x40] sm:$0xff]
          %v1290 = vld [vmem:[%s1280 + $0x48] sm:$0xff]
          %v1291 = vld [vmem:[%s1280 + $0x50] sm:$0xff]
          %v1292 = vld [vmem:[%s1280 + $0x58] sm:$0xff]
          %v1293 = vld [vmem:[%s1280 + $0x60] sm:$0xff]
          %v1294 = vld [vmem:[%s1280 + $0x68] sm:$0xff]
          %v1295 = vld [vmem:[%s1280 + $0x70] sm:$0xff]
          %v1296 = vld [vmem:[%s1280 + $0x78] sm:$0xff]
          %s1297 = smul.addr %s1277, 8
          %s1298 = scalar_lea.vmem [#allocation4], %s1297
          %v1299 = vld [vmem:[%s1298] sm:$0xff]
          %v1300 = vld [vmem:[%s1298 + $0x8] sm:$0xff]
          %v1301 = vld [vmem:[%s1298 + $0x10] sm:$0xff]
          %v1302 = vld [vmem:[%s1298 + $0x18] sm:$0xff]
          %v1303 = vld [vmem:[%s1298 + $0x20] sm:$0xff]
          %v1304 = vld [vmem:[%s1298 + $0x28] sm:$0xff]
          %v1305 = vld [vmem:[%s1298 + $0x30] sm:$0xff]
          %v1306 = vld [vmem:[%s1298 + $0x38] sm:$0xff]
          %v1307 = vld [vmem:[%s1298 + $0x40] sm:$0xff]
          %v1308 = vld [vmem:[%s1298 + $0x48] sm:$0xff]
          %v1309 = vld [vmem:[%s1298 + $0x50] sm:$0xff]
          %v1310 = vld [vmem:[%s1298 + $0x58] sm:$0xff]
          %v1311 = vld [vmem:[%s1298 + $0x60] sm:$0xff]
          %v1312 = vld [vmem:[%s1298 + $0x68] sm:$0xff]
          %v1313 = vld [vmem:[%s1298 + $0x70] sm:$0xff]
          %v1314 = vld [vmem:[%s1298 + $0x78] sm:$0xff]
          %v1315 = vld [vmem:[#allocation2] sm:$0xff]
          %v1316 = vld [vmem:[#allocation2 + $0x8] sm:$0xff]
          %v1317 = vld [vmem:[#allocation2 + $0x10] sm:$0xff]
          %v1318 = vld [vmem:[#allocation2 + $0x18] sm:$0xff]
          %v1319 = vld [vmem:[#allocation2 + $0x20] sm:$0xff]
          %v1320 = vld [vmem:[#allocation2 + $0x28] sm:$0xff]
          %v1321 = vld [vmem:[#allocation2 + $0x30] sm:$0xff]
          %v1322 = vld [vmem:[#allocation2 + $0x38] sm:$0xff]
          %v1323 = vld [vmem:[#allocation2 + $0x40] sm:$0xff]
          %v1324 = vld [vmem:[#allocation2 + $0x48] sm:$0xff]
          %v1325 = vld [vmem:[#allocation2 + $0x50] sm:$0xff]
          %v1326 = vld [vmem:[#allocation2 + $0x58] sm:$0xff]
          %v1327 = vld [vmem:[#allocation2 + $0x60] sm:$0xff]
          %v1328 = vld [vmem:[#allocation2 + $0x68] sm:$0xff]
          %v1329 = vld [vmem:[#allocation2 + $0x70] sm:$0xff]
          %v1330 = vld [vmem:[#allocation2 + $0x78] sm:$0xff]
          %vm1331 = vcmask 523264
          %v1333 = vsel %vm1331, %v1315, 0
          %v1336 = vsel %vm1331, %v1316, 0
          %v1339 = vsel %vm1331, %v1317, 0
          %v1342 = vsel %vm1331, %v1318, 0
          %v1345 = vsel %vm1331, %v1319, 0
          %v1348 = vsel %vm1331, %v1320, 0
          %v1351 = vsel %vm1331, %v1321, 0
          %v1354 = vsel %vm1331, %v1322, 0
          %v1357 = vsel %vm1331, %v1323, 0
          %v1360 = vsel %vm1331, %v1324, 0
          %v1363 = vsel %vm1331, %v1325, 0
          %v1366 = vsel %vm1331, %v1326, 0
          %v1369 = vsel %vm1331, %v1327, 0
          %v1372 = vsel %vm1331, %v1328, 0
          %v1375 = vsel %vm1331, %v1329, 0
          %v1378 = vsel %vm1331, %v1330, 0
          %v1381 = vsel %vm1331, %v1281, 0
          %v1384 = vsel %vm1331, %v1282, 0
          %v1387 = vsel %vm1331, %v1283, 0
          %v1390 = vsel %vm1331, %v1284, 0
          %v1393 = vsel %vm1331, %v1285, 0
          %v1396 = vsel %vm1331, %v1286, 0
          %v1399 = vsel %vm1331, %v1287, 0
          %v1402 = vsel %vm1331, %v1288, 0
          %v1405 = vsel %vm1331, %v1289, 0
          %v1408 = vsel %vm1331, %v1290, 0
          %v1411 = vsel %vm1331, %v1291, 0
          %v1414 = vsel %vm1331, %v1292, 0
          %v1417 = vsel %vm1331, %v1293, 0
          %v1420 = vsel %vm1331, %v1294, 0
          %v1423 = vsel %vm1331, %v1295, 0
          %v1426 = vsel %vm1331, %v1296, 0
          %1428 = vmatprep.subr.bf16.mxu0 0
          %1429 = vmatpush1.bf16.xpose.msra.mxu0 %v1381
          %1430 = vmatprep.subr.bf16.mxu0 0
          %1431 = vmatpush1.bf16.xpose.msra.mxu0 %v1384
          %1432 = vmatprep.subr.bf16.mxu0 0
          %1433 = vmatpush1.bf16.xpose.msra.mxu0 %v1387
          %1434 = vmatprep.subr.bf16.mxu0 0
          %1435 = vmatpush1.bf16.xpose.msra.mxu0 %v1390
          %1436 = vmatprep.subr.bf16.mxu0 0
          %1437 = vmatpush1.bf16.xpose.msra.mxu0 %v1393
          %1438 = vmatprep.subr.bf16.mxu0 0
          %1439 = vmatpush1.bf16.xpose.msra.mxu0 %v1396
          %1440 = vmatprep.subr.bf16.mxu0 0
          %1441 = vmatpush1.bf16.xpose.msra.mxu0 %v1399
          %1442 = vmatprep.subr.bf16.mxu0 0
          %1443 = vmatpush1.bf16.xpose.msra.mxu0 %v1402
          %1444 = vmatprep.subr.bf16.mxu0 0
          %1445 = vmatpush1.bf16.xpose.msra.mxu0 %v1405
          %1446 = vmatprep.subr.bf16.mxu0 0
          %1447 = vmatpush1.bf16.xpose.msra.mxu0 %v1408
          %1448 = vmatprep.subr.bf16.mxu0 0
          %1449 = vmatpush1.bf16.xpose.msra.mxu0 %v1411
          %1450 = vmatprep.subr.bf16.mxu0 0
          %1451 = vmatpush1.bf16.xpose.msra.mxu0 %v1414
          %1452 = vmatprep.subr.bf16.mxu0 0
          %1453 = vmatpush1.bf16.xpose.msra.mxu0 %v1417
          %1454 = vmatprep.subr.bf16.mxu0 0
          %1455 = vmatpush1.bf16.xpose.msra.mxu0 %v1420
          %1456 = vmatprep.subr.bf16.mxu0 0
          %1457 = vmatpush1.bf16.xpose.msra.mxu0 %v1423
          %1458 = vmatprep.subr.bf16.mxu0 0
          %1459 = vmatpush1.bf16.xpose.msra.mxu0 %v1426
          %1460 = vmatprep.mubr.bf16.mxu0 0
          %1461 = vmatmul.mubr.bf16.gmra.mrb[0].mxu0 %v1333
          %v1462 = vpop.f32.mrb[0].mxu0
          %v1463 = vadd.f32 0.0, %v1462
          %v1464 = vpop.f32.mrb[0].mxu0
          %v1465 = vadd.f32 0.0, %v1464
          %v1466 = vpop.f32.mrb[0].mxu0
          %v1467 = vadd.f32 0.0, %v1466
          %v1468 = vpop.f32.mrb[0].mxu0
          %v1469 = vadd.f32 0.0, %v1468
          %1470 = vmatprep.mubr.bf16.mxu0 0
          %1471 = vmatmul.mubr.bf16.gmra.mrb[0].mxu0 %v1336
          %v1472 = vpop.f32.mrb[0].mxu0
          %v1473 = vadd.f32 0.0, %v1472
          %v1474 = vpop.f32.mrb[0].mxu0
          %v1475 = vadd.f32 0.0, %v1474
          %v1476 = vpop.f32.mrb[0].mxu0
          %v1477 = vadd.f32 0.0, %v1476
          %v1478 = vpop.f32.mrb[0].mxu0
          %v1479 = vadd.f32 0.0, %v1478
          %1480 = vmatprep.mubr.bf16.mxu0 0
          %1481 = vmatmul.mubr.bf16.gmra.mrb[0].mxu0 %v1339
          %v1482 = vpop.f32.mrb[0].mxu0
          %v1483 = vadd.f32 0.0, %v1482
          %v1484 = vpop.f32.mrb[0].mxu0
          %v1485 = vadd.f32 0.0, %v1484
          %v1486 = vpop.f32.mrb[0].mxu0
          %v1487 = vadd.f32 0.0, %v1486
          %v1488 = vpop.f32.mrb[0].mxu0
          %v1489 = vadd.f32 0.0, %v1488
          %1490 = vmatprep.mubr.bf16.mxu0 0
          %1491 = vmatmul.mubr.bf16.gmra.mrb[0].mxu0 %v1342
          %v1492 = vpop.f32.mrb[0].mxu0
          %v1493 = vadd.f32 0.0, %v1492
          %v1494 = vpop.f32.mrb[0].mxu0
          %v1495 = vadd.f32 0.0, %v1494
          %v1496 = vpop.f32.mrb[0].mxu0
          %v1497 = vadd.f32 0.0, %v1496
          %v1498 = vpop.f32.mrb[0].mxu0
          %v1499 = vadd.f32 0.0, %v1498
          %1500 = vmatprep.mubr.bf16.mxu0 0
          %1501 = vmatmul.mubr.bf16.gmra.mrb[0].mxu0 %v1345
          %v1502 = vpop.f32.mrb[0].mxu0
          %v1503 = vadd.f32 0.0, %v1502
          %v1504 = vpop.f32.mrb[0].mxu0
          %v1505 = vadd.f32 0.0, %v1504
          %v1506 = vpop.f32.mrb[0].mxu0
          %v1507 = vadd.f32 0.0, %v1506
          %v1508 = vpop.f32.mrb[0].mxu0
          %v1509 = vadd.f32 0.0, %v1508
          %1510 = vmatprep.mubr.bf16.mxu0 0
          %1511 = vmatmul.mubr.bf16.gmra.mrb[0].mxu0 %v1348
          %v1512 = vpop.f32.mrb[0].mxu0
          %v1513 = vadd.f32 0.0, %v1512
          %v1514 = vpop.f32.mrb[0].mxu0
          %v1515 = vadd.f32 0.0, %v1514
          %v1516 = vpop.f32.mrb[0].mxu0
          %v1517 = vadd.f32 0.0, %v1516
          %v1518 = vpop.f32.mrb[0].mxu0
          %v1519 = vadd.f32 0.0, %v1518
          %1520 = vmatprep.mubr.bf16.mxu0 0
          %1521 = vmatmul.mubr.bf16.gmra.mrb[0].mxu0 %v1351
          %v1522 = vpop.f32.mrb[0].mxu0
          %v1523 = vadd.f32 0.0, %v1522
          %v1524 = vpop.f32.mrb[0].mxu0
          %v1525 = vadd.f32 0.0, %v1524
          %v1526 = vpop.f32.mrb[0].mxu0
          %v1527 = vadd.f32 0.0, %v1526
          %v1528 = vpop.f32.mrb[0].mxu0
          %v1529 = vadd.f32 0.0, %v1528
          %1530 = vmatprep.mubr.bf16.mxu0 0
          %1531 = vmatmul.mubr.bf16.gmra.mrb[0].mxu0 %v1354
          %v1532 = vpop.f32.mrb[0].mxu0
          %v1533 = vadd.f32 0.0, %v1532
          %v1534 = vpop.f32.mrb[0].mxu0
          %v1535 = vadd.f32 0.0, %v1534
          %v1536 = vpop.f32.mrb[0].mxu0
          %v1537 = vadd.f32 0.0, %v1536
          %v1538 = vpop.f32.mrb[0].mxu0
          %v1539 = vadd.f32 0.0, %v1538
          %1540 = vmatprep.mubr.bf16.mxu0 0
          %1541 = vmatmul.mubr.bf16.gmra.mrb[0].mxu0 %v1357
          %v1542 = vpop.f32.mrb[0].mxu0
          %v1543 = vadd.f32 0.0, %v1542
          %v1544 = vpop.f32.mrb[0].mxu0
          %v1545 = vadd.f32 0.0, %v1544
          %v1546 = vpop.f32.mrb[0].mxu0
          %v1547 = vadd.f32 0.0, %v1546
          %v1548 = vpop.f32.mrb[0].mxu0
          %v1549 = vadd.f32 0.0, %v1548
          %1550 = vmatprep.mubr.bf16.mxu0 0
          %1551 = vmatmul.mubr.bf16.gmra.mrb[0].mxu0 %v1360
          %v1552 = vpop.f32.mrb[0].mxu0
          %v1553 = vadd.f32 0.0, %v1552
          %v1554 = vpop.f32.mrb[0].mxu0
          %v1555 = vadd.f32 0.0, %v1554
          %v1556 = vpop.f32.mrb[0].mxu0
          %v1557 = vadd.f32 0.0, %v1556
          %v1558 = vpop.f32.mrb[0].mxu0
          %v1559 = vadd.f32 0.0, %v1558
          %1560 = vmatprep.mubr.bf16.mxu0 0
          %1561 = vmatmul.mubr.bf16.gmra.mrb[0].mxu0 %v1363
          %v1562 = vpop.f32.mrb[0].mxu0
          %v1563 = vadd.f32 0.0, %v1562
          %v1564 = vpop.f32.mrb[0].mxu0
          %v1565 = vadd.f32 0.0, %v1564
          %v1566 = vpop.f32.mrb[0].mxu0
          %v1567 = vadd.f32 0.0, %v1566
          %v1568 = vpop.f32.mrb[0].mxu0
          %v1569 = vadd.f32 0.0, %v1568
          %1570 = vmatprep.mubr.bf16.mxu0 0
          %1571 = vmatmul.mubr.bf16.gmra.mrb[0].mxu0 %v1366
          %v1572 = vpop.f32.mrb[0].mxu0
          %v1573 = vadd.f32 0.0, %v1572
          %v1574 = vpop.f32.mrb[0].mxu0
          %v1575 = vadd.f32 0.0, %v1574
          %v1576 = vpop.f32.mrb[0].mxu0
          %v1577 = vadd.f32 0.0, %v1576
          %v1578 = vpop.f32.mrb[0].mxu0
          %v1579 = vadd.f32 0.0, %v1578
          %1580 = vmatprep.mubr.bf16.mxu0 0
          %1581 = vmatmul.mubr.bf16.gmra.mrb[0].mxu0 %v1369
          %v1582 = vpop.f32.mrb[0].mxu0
          %v1583 = vadd.f32 0.0, %v1582
          %v1584 = vpop.f32.mrb[0].mxu0
          %v1585 = vadd.f32 0.0, %v1584
          %v1586 = vpop.f32.mrb[0].mxu0
          %v1587 = vadd.f32 0.0, %v1586
          %v1588 = vpop.f32.mrb[0].mxu0
          %v1589 = vadd.f32 0.0, %v1588
          %1590 = vmatprep.mubr.bf16.mxu0 0
          %1591 = vmatmul.mubr.bf16.gmra.mrb[0].mxu0 %v1372
          %v1592 = vpop.f32.mrb[0].mxu0
          %v1593 = vadd.f32 0.0, %v1592
          %v1594 = vpop.f32.mrb[0].mxu0
          %v1595 = vadd.f32 0.0, %v1594
          %v1596 = vpop.f32.mrb[0].mxu0
          %v1597 = vadd.f32 0.0, %v1596
          %v1598 = vpop.f32.mrb[0].mxu0
          %v1599 = vadd.f32 0.0, %v1598
          %1600 = vmatprep.mubr.bf16.mxu0 0
          %1601 = vmatmul.mubr.bf16.gmra.mrb[0].mxu0 %v1375
          %v1602 = vpop.f32.mrb[0].mxu0
          %v1603 = vadd.f32 0.0, %v1602
          %v1604 = vpop.f32.mrb[0].mxu0
          %v1605 = vadd.f32 0.0, %v1604
          %v1606 = vpop.f32.mrb[0].mxu0
          %v1607 = vadd.f32 0.0, %v1606
          %v1608 = vpop.f32.mrb[0].mxu0
          %v1609 = vadd.f32 0.0, %v1608
          %1610 = vmatprep.mubr.bf16.mxu0 0
          %1611 = vmatmul.mubr.bf16.gmra.mrb[0].mxu0 %v1378
          %v1612 = vpop.f32.mrb[0].mxu0
          %v1613 = vadd.f32 0.0, %v1612
          %v1614 = vpop.f32.mrb[0].mxu0
          %v1615 = vadd.f32 0.0, %v1614
          %v1616 = vpop.f32.mrb[0].mxu0
          %v1617 = vadd.f32 0.0, %v1616
          %v1618 = vpop.f32.mrb[0].mxu0
          %v1619 = vadd.f32 0.0, %v1618
          %1620 = vdwg.mxu0
          %v1621 = vlaneseq
          %v1622 = vshrl.u32 %v1621, 7
          %v1623 = vadd.s32 %v1622, 8
          %v1624 = vadd.s32 %v1622, 16
          %v1625 = vadd.s32 %v1622, 24
          %v1626 = vadd.s32 %v1622, 32
          %v1627 = vadd.s32 %v1622, 40
          %v1628 = vadd.s32 %v1622, 48
          %v1629 = vadd.s32 %v1622, 56
          %v1630 = vadd.s32 %v1622, 64
          %v1631 = vadd.s32 %v1622, 72
          %v1632 = vadd.s32 %v1622, 80
          %v1633 = vadd.s32 %v1622, 88
          %v1634 = vadd.s32 %v1622, 96
          %v1635 = vadd.s32 %v1622, 104
          %v1636 = vadd.s32 %v1622, 112
          %v1637 = vadd.s32 %v1622, 120
          %v1638 = vadd.s32 %v1622, 128
          %v1639 = vadd.s32 %v1622, 136
          %v1640 = vadd.s32 %v1622, 144
          %v1641 = vadd.s32 %v1622, 152
          %v1642 = vadd.s32 %v1622, 160
          %v1643 = vadd.s32 %v1622, 168
          %v1644 = vadd.s32 %v1622, 176
          %v1645 = vadd.s32 %v1622, 184
          %v1646 = vadd.s32 %v1622, 192
          %v1647 = vadd.s32 %v1622, 200
          %v1648 = vadd.s32 %v1622, 208
          %v1649 = vadd.s32 %v1622, 216
          %v1650 = vadd.s32 %v1622, 224
          %v1651 = vadd.s32 %v1622, 232
          %v1652 = vadd.s32 %v1622, 240
          %v1653 = vadd.s32 %v1622, 248
          %v1654 = vlaneseq
          %v1655 = vand.u32 %v1654, 127
          %v1656 = vadd.s32 %v1655, 128
          %vm1657 = vcmp.le.s32.totalorder %v1655, %v1622
          %vm1658 = vcmp.le.s32.totalorder %v1656, %v1622
          %vm1659 = vcmp.le.s32.totalorder %v1655, %v1623
          %vm1660 = vcmp.le.s32.totalorder %v1656, %v1623
          %vm1661 = vcmp.le.s32.totalorder %v1655, %v1624
          %vm1662 = vcmp.le.s32.totalorder %v1656, %v1624
          %vm1663 = vcmp.le.s32.totalorder %v1655, %v1625
          %vm1664 = vcmp.le.s32.totalorder %v1656, %v1625
          %vm1665 = vcmp.le.s32.totalorder %v1655, %v1626
          %vm1666 = vcmp.le.s32.totalorder %v1656, %v1626
          %vm1667 = vcmp.le.s32.totalorder %v1655, %v1627
          %vm1668 = vcmp.le.s32.totalorder %v1656, %v1627
          %vm1669 = vcmp.le.s32.totalorder %v1655, %v1628
          %vm1670 = vcmp.le.s32.totalorder %v1656, %v1628
          %vm1671 = vcmp.le.s32.totalorder %v1655, %v1629
          %vm1672 = vcmp.le.s32.totalorder %v1656, %v1629
          %vm1673 = vcmp.le.s32.totalorder %v1655, %v1630
          %vm1674 = vcmp.le.s32.totalorder %v1656, %v1630
          %vm1675 = vcmp.le.s32.totalorder %v1655, %v1631
          %vm1676 = vcmp.le.s32.totalorder %v1656, %v1631
          %vm1677 = vcmp.le.s32.totalorder %v1655, %v1632
          %vm1678 = vcmp.le.s32.totalorder %v1656, %v1632
          %vm1679 = vcmp.le.s32.totalorder %v1655, %v1633
          %vm1680 = vcmp.le.s32.totalorder %v1656, %v1633
          %vm1681 = vcmp.le.s32.totalorder %v1655, %v1634
          %vm1682 = vcmp.le.s32.totalorder %v1656, %v1634
          %vm1683 = vcmp.le.s32.totalorder %v1655, %v1635
          %vm1684 = vcmp.le.s32.totalorder %v1656, %v1635
          %vm1685 = vcmp.le.s32.totalorder %v1655, %v1636
          %vm1686 = vcmp.le.s32.totalorder %v1656, %v1636
          %vm1687 = vcmp.le.s32.totalorder %v1655, %v1637
          %vm1688 = vcmp.le.s32.totalorder %v1656, %v1637
          %vm1689 = vcmp.le.s32.totalorder %v1655, %v1638
          %vm1690 = vcmp.le.s32.totalorder %v1656, %v1638
          %vm1691 = vcmp.le.s32.totalorder %v1655, %v1639
          %vm1692 = vcmp.le.s32.totalorder %v1656, %v1639
          %vm1693 = vcmp.le.s32.totalorder %v1655, %v1640
          %vm1694 = vcmp.le.s32.totalorder %v1656, %v1640
          %vm1695 = vcmp.le.s32.totalorder %v1655, %v1641
          %vm1696 = vcmp.le.s32.totalorder %v1656, %v1641
          %vm1697 = vcmp.le.s32.totalorder %v1655, %v1642
          %vm1698 = vcmp.le.s32.totalorder %v1656, %v1642
          %vm1699 = vcmp.le.s32.totalorder %v1655, %v1643
          %vm1700 = vcmp.le.s32.totalorder %v1656, %v1643
          %vm1701 = vcmp.le.s32.totalorder %v1655, %v1644
          %vm1702 = vcmp.le.s32.totalorder %v1656, %v1644
          %vm1703 = vcmp.le.s32.totalorder %v1655, %v1645
          %vm1704 = vcmp.le.s32.totalorder %v1656, %v1645
          %vm1705 = vcmp.le.s32.totalorder %v1655, %v1646
          %vm1706 = vcmp.le.s32.totalorder %v1656, %v1646
          %vm1707 = vcmp.le.s32.totalorder %v1655, %v1647
          %vm1708 = vcmp.le.s32.totalorder %v1656, %v1647
          %vm1709 = vcmp.le.s32.totalorder %v1655, %v1648
          %vm1710 = vcmp.le.s32.totalorder %v1656, %v1648
          %vm1711 = vcmp.le.s32.totalorder %v1655, %v1649
          %vm1712 = vcmp.le.s32.totalorder %v1656, %v1649
          %vm1713 = vcmp.le.s32.totalorder %v1655, %v1650
          %vm1714 = vcmp.le.s32.totalorder %v1656, %v1650
          %vm1715 = vcmp.le.s32.totalorder %v1655, %v1651
          %vm1716 = vcmp.le.s32.totalorder %v1656, %v1651
          %vm1717 = vcmp.le.s32.totalorder %v1655, %v1652
          %vm1718 = vcmp.le.s32.totalorder %v1656, %v1652
          %vm1719 = vcmp.le.s32.totalorder %v1655, %v1653
          %vm1720 = vcmp.le.s32.totalorder %v1656, %v1653
          %v1721 = vsel %vm1657, %v1463, -1e+30
          %v1722 = vsel %vm1658, %v1465, -1e+30
          %v1723 = vsel %vm1659, %v1467, -1e+30
          %v1724 = vsel %vm1660, %v1469, -1e+30
          %v1725 = vsel %vm1661, %v1473, -1e+30
          %v1726 = vsel %vm1662, %v1475, -1e+30
          %v1727 = vsel %vm1663, %v1477, -1e+30
          %v1728 = vsel %vm1664, %v1479, -1e+30
          %v1729 = vsel %vm1665, %v1483, -1e+30
          %v1730 = vsel %vm1666, %v1485, -1e+30
          %v1731 = vsel %vm1667, %v1487, -1e+30
          %v1732 = vsel %vm1668, %v1489, -1e+30
          %v1733 = vsel %vm1669, %v1493, -1e+30
          %v1734 = vsel %vm1670, %v1495, -1e+30
          %v1735 = vsel %vm1671, %v1497, -1e+30
          %v1736 = vsel %vm1672, %v1499, -1e+30
          %v1737 = vsel %vm1673, %v1503, -1e+30
          %v1738 = vsel %vm1674, %v1505, -1e+30
          %v1739 = vsel %vm1675, %v1507, -1e+30
          %v1740 = vsel %vm1676, %v1509, -1e+30
          %v1741 = vsel %vm1677, %v1513, -1e+30
          %v1742 = vsel %vm1678, %v1515, -1e+30
          %v1743 = vsel %vm1679, %v1517, -1e+30
          %v1744 = vsel %vm1680, %v1519, -1e+30
          %v1745 = vsel %vm1681, %v1523, -1e+30
          %v1746 = vsel %vm1682, %v1525, -1e+30
          %v1747 = vsel %vm1683, %v1527, -1e+30
          %v1748 = vsel %vm1684, %v1529, -1e+30
          %v1749 = vsel %vm1685, %v1533, -1e+30
          %v1750 = vsel %vm1686, %v1535, -1e+30
          %v1751 = vsel %vm1687, %v1537, -1e+30
          %v1752 = vsel %vm1688, %v1539, -1e+30
          %v1753 = vsel %vm1689, %v1543, -1e+30
          %v1754 = vsel %vm1690, %v1545, -1e+30
          %v1755 = vsel %vm1691, %v1547, -1e+30
          %v1756 = vsel %vm1692, %v1549, -1e+30
          %v1757 = vsel %vm1693, %v1553, -1e+30
          %v1758 = vsel %vm1694, %v1555, -1e+30
          %v1759 = vsel %vm1695, %v1557, -1e+30
          %v1760 = vsel %vm1696, %v1559, -1e+30
          %v1761 = vsel %vm1697, %v1563, -1e+30
          %v1762 = vsel %vm1698, %v1565, -1e+30
          %v1763 = vsel %vm1699, %v1567, -1e+30
          %v1764 = vsel %vm1700, %v1569, -1e+30
          %v1765 = vsel %vm1701, %v1573, -1e+30
          %v1766 = vsel %vm1702, %v1575, -1e+30
          %v1767 = vsel %vm1703, %v1577, -1e+30
          %v1768 = vsel %vm1704, %v1579, -1e+30
          %v1769 = vsel %vm1705, %v1583, -1e+30
          %v1770 = vsel %vm1706, %v1585, -1e+30
          %v1771 = vsel %vm1707, %v1587, -1e+30
          %v1772 = vsel %vm1708, %v1589, -1e+30
          %v1773 = vsel %vm1709, %v1593, -1e+30
          %v1774 = vsel %vm1710, %v1595, -1e+30
          %v1775 = vsel %vm1711, %v1597, -1e+30
          %v1776 = vsel %vm1712, %v1599, -1e+30
          %v1777 = vsel %vm1713, %v1603, -1e+30
          %v1778 = vsel %vm1714, %v1605, -1e+30
          %v1779 = vsel %vm1715, %v1607, -1e+30
          %v1780 = vsel %vm1716, %v1609, -1e+30
          %v1781 = vsel %vm1717, %v1613, -1e+30
          %v1782 = vsel %vm1718, %v1615, -1e+30
          %v1783 = vsel %vm1719, %v1617, -1e+30
          %v1784 = vsel %vm1720, %v1619, -1e+30
          %v1785 = vld [vmem:[#allocation5] sm:$0xff]
          %v1786 = vld [vmem:[#allocation5 + $0x8] sm:$0xff]
          %v1787 = vld [vmem:[#allocation5 + $0x10] sm:$0xff]
          %v1788 = vld [vmem:[#allocation5 + $0x18] sm:$0xff]
          %v1789 = vld [vmem:[#allocation5 + $0x20] sm:$0xff]
          %v1790 = vld [vmem:[#allocation5 + $0x28] sm:$0xff]
          %v1791 = vld [vmem:[#allocation5 + $0x30] sm:$0xff]
          %v1792 = vld [vmem:[#allocation5 + $0x38] sm:$0xff]
          %v1793 = vld [vmem:[#allocation5 + $0x40] sm:$0xff]
          %v1794 = vld [vmem:[#allocation5 + $0x48] sm:$0xff]
          %v1795 = vld [vmem:[#allocation5 + $0x50] sm:$0xff]
          %v1796 = vld [vmem:[#allocation5 + $0x58] sm:$0xff]
          %v1797 = vld [vmem:[#allocation5 + $0x60] sm:$0xff]
          %v1798 = vld [vmem:[#allocation5 + $0x68] sm:$0xff]
          %v1799 = vld [vmem:[#allocation5 + $0x70] sm:$0xff]
          %v1800 = vld [vmem:[#allocation5 + $0x78] sm:$0xff]
          %v1801 = vld [vmem:[#allocation5 + $0x80] sm:$0xff]
          %v1802 = vld [vmem:[#allocation5 + $0x88] sm:$0xff]
          %v1803 = vld [vmem:[#allocation5 + $0x90] sm:$0xff]
          %v1804 = vld [vmem:[#allocation5 + $0x98] sm:$0xff]
          %v1805 = vld [vmem:[#allocation5 + $0xa0] sm:$0xff]
          %v1806 = vld [vmem:[#allocation5 + $0xa8] sm:$0xff]
          %v1807 = vld [vmem:[#allocation5 + $0xb0] sm:$0xff]
          %v1808 = vld [vmem:[#allocation5 + $0xb8] sm:$0xff]
          %v1809 = vld [vmem:[#allocation5 + $0xc0] sm:$0xff]
          %v1810 = vld [vmem:[#allocation5 + $0xc8] sm:$0xff]
          %v1811 = vld [vmem:[#allocation5 + $0xd0] sm:$0xff]
          %v1812 = vld [vmem:[#allocation5 + $0xd8] sm:$0xff]
          %v1813 = vld [vmem:[#allocation5 + $0xe0] sm:$0xff]
          %v1814 = vld [vmem:[#allocation5 + $0xe8] sm:$0xff]
          %v1815 = vld [vmem:[#allocation5 + $0xf0] sm:$0xff]
          %v1816 = vld [vmem:[#allocation5 + $0xf8] sm:$0xff]
          %v1817 = vmax.f32 %v1721, %v1722
          %1818 = vmax.xlane.f32.xlu0 %v1817
          %v1819 = vpop.xlane.xlu0 %1818
          %v1820 = vmax.f32 %v1723, %v1724
          %1821 = vmax.xlane.f32.xlu0 %v1820
          %v1822 = vpop.xlane.xlu0 %1821
          %v1823 = vmax.f32 %v1725, %v1726
          %1824 = vmax.xlane.f32.xlu0 %v1823
          %v1825 = vpop.xlane.xlu0 %1824
          %v1826 = vmax.f32 %v1727, %v1728
          %1827 = vmax.xlane.f32.xlu0 %v1826
          %v1828 = vpop.xlane.xlu0 %1827
          %v1829 = vmax.f32 %v1729, %v1730
          %1830 = vmax.xlane.f32.xlu0 %v1829
          %v1831 = vpop.xlane.xlu0 %1830
          %v1832 = vmax.f32 %v1731, %v1732
          %1833 = vmax.xlane.f32.xlu0 %v1832
          %v1834 = vpop.xlane.xlu0 %1833
          %v1835 = vmax.f32 %v1733, %v1734
          %1836 = vmax.xlane.f32.xlu0 %v1835
          %v1837 = vpop.xlane.xlu0 %1836
          %v1838 = vmax.f32 %v1735, %v1736
          %1839 = vmax.xlane.f32.xlu0 %v1838
          %v1840 = vpop.xlane.xlu0 %1839
          %v1841 = vmax.f32 %v1737, %v1738
          %1842 = vmax.xlane.f32.xlu0 %v1841
          %v1843 = vpop.xlane.xlu0 %1842
          %v1844 = vmax.f32 %v1739, %v1740
          %1845 = vmax.xlane.f32.xlu0 %v1844
          %v1846 = vpop.xlane.xlu0 %1845
          %v1847 = vmax.f32 %v1741, %v1742
          %1848 = vmax.xlane.f32.xlu0 %v1847
          %v1849 = vpop.xlane.xlu0 %1848
          %v1850 = vmax.f32 %v1743, %v1744
          %1851 = vmax.xlane.f32.xlu0 %v1850
          %v1852 = vpop.xlane.xlu0 %1851
          %v1853 = vmax.f32 %v1745, %v1746
          %1854 = vmax.xlane.f32.xlu0 %v1853
          %v1855 = vpop.xlane.xlu0 %1854
          %v1856 = vmax.f32 %v1747, %v1748
          %1857 = vmax.xlane.f32.xlu0 %v1856
          %v1858 = vpop.xlane.xlu0 %1857
          %v1859 = vmax.f32 %v1749, %v1750
          %1860 = vmax.xlane.f32.xlu0 %v1859
          %v1861 = vpop.xlane.xlu0 %1860
          %v1862 = vmax.f32 %v1751, %v1752
          %1863 = vmax.xlane.f32.xlu0 %v1862
          %v1864 = vpop.xlane.xlu0 %1863
          %v1865 = vmax.f32 %v1753, %v1754
          %1866 = vmax.xlane.f32.xlu0 %v1865
          %v1867 = vpop.xlane.xlu0 %1866
          %v1868 = vmax.f32 %v1755, %v1756
          %1869 = vmax.xlane.f32.xlu0 %v1868
          %v1870 = vpop.xlane.xlu0 %1869
          %v1871 = vmax.f32 %v1757, %v1758
          %1872 = vmax.xlane.f32.xlu0 %v1871
          %v1873 = vpop.xlane.xlu0 %1872
          %v1874 = vmax.f32 %v1759, %v1760
          %1875 = vmax.xlane.f32.xlu0 %v1874
          %v1876 = vpop.xlane.xlu0 %1875
          %v1877 = vmax.f32 %v1761, %v1762
          %1878 = vmax.xlane.f32.xlu0 %v1877
          %v1879 = vpop.xlane.xlu0 %1878
          %v1880 = vmax.f32 %v1763, %v1764
          %1881 = vmax.xlane.f32.xlu0 %v1880
          %v1882 = vpop.xlane.xlu0 %1881
          %v1883 = vmax.f32 %v1765, %v1766
          %1884 = vmax.xlane.f32.xlu0 %v1883
          %v1885 = vpop.xlane.xlu0 %1884
          %v1886 = vmax.f32 %v1767, %v1768
          %1887 = vmax.xlane.f32.xlu0 %v1886
          %v1888 = vpop.xlane.xlu0 %1887
          %v1889 = vmax.f32 %v1769, %v1770
          %1890 = vmax.xlane.f32.xlu0 %v1889
          %v1891 = vpop.xlane.xlu0 %1890
          %v1892 = vmax.f32 %v1771, %v1772
          %1893 = vmax.xlane.f32.xlu0 %v1892
          %v1894 = vpop.xlane.xlu0 %1893
          %v1895 = vmax.f32 %v1773, %v1774
          %1896 = vmax.xlane.f32.xlu0 %v1895
          %v1897 = vpop.xlane.xlu0 %1896
          %v1898 = vmax.f32 %v1775, %v1776
          %1899 = vmax.xlane.f32.xlu0 %v1898
          %v1900 = vpop.xlane.xlu0 %1899
          %v1901 = vmax.f32 %v1777, %v1778
          %1902 = vmax.xlane.f32.xlu0 %v1901
          %v1903 = vpop.xlane.xlu0 %1902
          %v1904 = vmax.f32 %v1779, %v1780
          %1905 = vmax.xlane.f32.xlu0 %v1904
          %v1906 = vpop.xlane.xlu0 %1905
          %v1907 = vmax.f32 %v1781, %v1782
          %1908 = vmax.xlane.f32.xlu0 %v1907
          %v1909 = vpop.xlane.xlu0 %1908
          %v1910 = vmax.f32 %v1783, %v1784
          %1911 = vmax.xlane.f32.xlu0 %v1910
          %v1912 = vpop.xlane.xlu0 %1911
          %v1913 = vmax.f32 %v1785, %v1819
          %v1914 = vmax.f32 %v1786, %v1822
          %v1915 = vmax.f32 %v1787, %v1825
          %v1916 = vmax.f32 %v1788, %v1828
          %v1917 = vmax.f32 %v1789, %v1831
          %v1918 = vmax.f32 %v1790, %v1834
          %v1919 = vmax.f32 %v1791, %v1837
          %v1920 = vmax.f32 %v1792, %v1840
          %v1921 = vmax.f32 %v1793, %v1843
          %v1922 = vmax.f32 %v1794, %v1846
          %v1923 = vmax.f32 %v1795, %v1849
          %v1924 = vmax.f32 %v1796, %v1852
          %v1925 = vmax.f32 %v1797, %v1855
          %v1926 = vmax.f32 %v1798, %v1858
          %v1927 = vmax.f32 %v1799, %v1861
          %v1928 = vmax.f32 %v1800, %v1864
          %v1929 = vmax.f32 %v1801, %v1867
          %v1930 = vmax.f32 %v1802, %v1870
          %v1931 = vmax.f32 %v1803, %v1873
          %v1932 = vmax.f32 %v1804, %v1876
          %v1933 = vmax.f32 %v1805, %v1879
          %v1934 = vmax.f32 %v1806, %v1882
          %v1935 = vmax.f32 %v1807, %v1885
          %v1936 = vmax.f32 %v1808, %v1888
          %v1937 = vmax.f32 %v1809, %v1891
          %v1938 = vmax.f32 %v1810, %v1894
          %v1939 = vmax.f32 %v1811, %v1897
          %v1940 = vmax.f32 %v1812, %v1900
          %v1941 = vmax.f32 %v1813, %v1903
          %v1942 = vmax.f32 %v1814, %v1906
          %v1943 = vmax.f32 %v1815, %v1909
          %v1944 = vmax.f32 %v1816, %v1912
          %v1945 = vsub.f32 %v1785, %v1913
          %v1946 = vsub.f32 %v1786, %v1914
          %v1947 = vsub.f32 %v1787, %v1915
          %v1948 = vsub.f32 %v1788, %v1916
          %v1949 = vsub.f32 %v1789, %v1917
          %v1950 = vsub.f32 %v1790, %v1918
          %v1951 = vsub.f32 %v1791, %v1919
          %v1952 = vsub.f32 %v1792, %v1920
          %v1953 = vsub.f32 %v1793, %v1921
          %v1954 = vsub.f32 %v1794, %v1922
          %v1955 = vsub.f32 %v1795, %v1923
          %v1956 = vsub.f32 %v1796, %v1924
          %v1957 = vsub.f32 %v1797, %v1925
          %v1958 = vsub.f32 %v1798, %v1926
          %v1959 = vsub.f32 %v1799, %v1927
          %v1960 = vsub.f32 %v1800, %v1928
          %v1961 = vsub.f32 %v1801, %v1929
          %v1962 = vsub.f32 %v1802, %v1930
          %v1963 = vsub.f32 %v1803, %v1931
          %v1964 = vsub.f32 %v1804, %v1932
          %v1965 = vsub.f32 %v1805, %v1933
          %v1966 = vsub.f32 %v1806, %v1934
          %v1967 = vsub.f32 %v1807, %v1935
          %v1968 = vsub.f32 %v1808, %v1936
          %v1969 = vsub.f32 %v1809, %v1937
          %v1970 = vsub.f32 %v1810, %v1938
          %v1971 = vsub.f32 %v1811, %v1939
          %v1972 = vsub.f32 %v1812, %v1940
          %v1973 = vsub.f32 %v1813, %v1941
          %v1974 = vsub.f32 %v1814, %v1942
          %v1975 = vsub.f32 %v1815, %v1943
          %v1976 = vsub.f32 %v1816, %v1944
          %v1977 = vmul.f32 %v1945, 1.442695
          %v1978 = vpow.pop %v1977
          %v1979 = vmul.f32 %v1946, 1.442695
          %v1980 = vpow.pop %v1979
          %v1981 = vmul.f32 %v1947, 1.442695
          %v1982 = vpow.pop %v1981
          %v1983 = vmul.f32 %v1948, 1.442695
          %v1984 = vpow.pop %v1983
          %v1985 = vmul.f32 %v1949, 1.442695
          %v1986 = vpow.pop %v1985
          %v1987 = vmul.f32 %v1950, 1.442695
          %v1988 = vpow.pop %v1987
          %v1989 = vmul.f32 %v1951, 1.442695
          %v1990 = vpow.pop %v1989
          %v1991 = vmul.f32 %v1952, 1.442695
          %v1992 = vpow.pop %v1991
          %v1993 = vmul.f32 %v1953, 1.442695
          %v1994 = vpow.pop %v1993
          %v1995 = vmul.f32 %v1954, 1.442695
          %v1996 = vpow.pop %v1995
          %v1997 = vmul.f32 %v1955, 1.442695
          %v1998 = vpow.pop %v1997
          %v1999 = vmul.f32 %v1956, 1.442695
          %v2000 = vpow.pop %v1999
          %v2001 = vmul.f32 %v1957, 1.442695
          %v2002 = vpow.pop %v2001
          %v2003 = vmul.f32 %v1958, 1.442695
          %v2004 = vpow.pop %v2003
          %v2005 = vmul.f32 %v1959, 1.442695
          %v2006 = vpow.pop %v2005
          %v2007 = vmul.f32 %v1960, 1.442695
          %v2008 = vpow.pop %v2007
          %v2009 = vmul.f32 %v1961, 1.442695
          %v2010 = vpow.pop %v2009
          %v2011 = vmul.f32 %v1962, 1.442695
          %v2012 = vpow.pop %v2011
          %v2013 = vmul.f32 %v1963, 1.442695
          %v2014 = vpow.pop %v2013
          %v2015 = vmul.f32 %v1964, 1.442695
          %v2016 = vpow.pop %v2015
          %v2017 = vmul.f32 %v1965, 1.442695
          %v2018 = vpow.pop %v2017
          %v2019 = vmul.f32 %v1966, 1.442695
          %v2020 = vpow.pop %v2019
          %v2021 = vmul.f32 %v1967, 1.442695
          %v2022 = vpow.pop %v2021
          %v2023 = vmul.f32 %v1968, 1.442695
          %v2024 = vpow.pop %v2023
          %v2025 = vmul.f32 %v1969, 1.442695
          %v2026 = vpow.pop %v2025
          %v2027 = vmul.f32 %v1970, 1.442695
          %v2028 = vpow.pop %v2027
          %v2029 = vmul.f32 %v1971, 1.442695
          %v2030 = vpow.pop %v2029
          %v2031 = vmul.f32 %v1972, 1.442695
          %v2032 = vpow.pop %v2031
          %v2033 = vmul.f32 %v1973, 1.442695
          %v2034 = vpow.pop %v2033
          %v2035 = vmul.f32 %v1974, 1.442695
          %v2036 = vpow.pop %v2035
          %v2037 = vmul.f32 %v1975, 1.442695
          %v2038 = vpow.pop %v2037
          %v2039 = vmul.f32 %v1976, 1.442695
          %v2040 = vpow.pop %v2039
          %2042 = vset.pattern.permute.xlu0 0
          %2043 = vperm.xlu0 %2042, %v1913
          %v2044 = vpop.permute.xlu0 %2043
          %2047 = vset.pattern.permute.xlu0 0
          %2048 = vperm.xlu0 %2047, %v1914
          %v2049 = vpop.permute.xlu0 %2048
          %2052 = vset.pattern.permute.xlu0 0
          %2053 = vperm.xlu0 %2052, %v1915
          %v2054 = vpop.permute.xlu0 %2053
          %2057 = vset.pattern.permute.xlu0 0
          %2058 = vperm.xlu0 %2057, %v1916
          %v2059 = vpop.permute.xlu0 %2058
          %2062 = vset.pattern.permute.xlu0 0
          %2063 = vperm.xlu0 %2062, %v1917
          %v2064 = vpop.permute.xlu0 %2063
          %2067 = vset.pattern.permute.xlu0 0
          %2068 = vperm.xlu0 %2067, %v1918
          %v2069 = vpop.permute.xlu0 %2068
          %2072 = vset.pattern.permute.xlu0 0
          %2073 = vperm.xlu0 %2072, %v1919
          %v2074 = vpop.permute.xlu0 %2073
          %2077 = vset.pattern.permute.xlu0 0
          %2078 = vperm.xlu0 %2077, %v1920
          %v2079 = vpop.permute.xlu0 %2078
          %2082 = vset.pattern.permute.xlu0 0
          %2083 = vperm.xlu0 %2082, %v1921
          %v2084 = vpop.permute.xlu0 %2083
          %2087 = vset.pattern.permute.xlu0 0
          %2088 = vperm.xlu0 %2087, %v1922
          %v2089 = vpop.permute.xlu0 %2088
          %2092 = vset.pattern.permute.xlu0 0
          %2093 = vperm.xlu0 %2092, %v1923
          %v2094 = vpop.permute.xlu0 %2093
          %2097 = vset.pattern.permute.xlu0 0
          %2098 = vperm.xlu0 %2097, %v1924
          %v2099 = vpop.permute.xlu0 %2098
          %2102 = vset.pattern.permute.xlu0 0
          %2103 = vperm.xlu0 %2102, %v1925
          %v2104 = vpop.permute.xlu0 %2103
          %2107 = vset.pattern.permute.xlu0 0
          %2108 = vperm.xlu0 %2107, %v1926
          %v2109 = vpop.permute.xlu0 %2108
          %2112 = vset.pattern.permute.xlu0 0
          %2113 = vperm.xlu0 %2112, %v1927
          %v2114 = vpop.permute.xlu0 %2113
          %2117 = vset.pattern.permute.xlu0 0
          %2118 = vperm.xlu0 %2117, %v1928
          %v2119 = vpop.permute.xlu0 %2118
          %2122 = vset.pattern.permute.xlu0 0
          %2123 = vperm.xlu0 %2122, %v1929
          %v2124 = vpop.permute.xlu0 %2123
          %2127 = vset.pattern.permute.xlu0 0
          %2128 = vperm.xlu0 %2127, %v1930
          %v2129 = vpop.permute.xlu0 %2128
          %2132 = vset.pattern.permute.xlu0 0
          %2133 = vperm.xlu0 %2132, %v1931
          %v2134 = vpop.permute.xlu0 %2133
          %2137 = vset.pattern.permute.xlu0 0
          %2138 = vperm.xlu0 %2137, %v1932
          %v2139 = vpop.permute.xlu0 %2138
          %2142 = vset.pattern.permute.xlu0 0
          %2143 = vperm.xlu0 %2142, %v1933
          %v2144 = vpop.permute.xlu0 %2143
          %2147 = vset.pattern.permute.xlu0 0
          %2148 = vperm.xlu0 %2147, %v1934
          %v2149 = vpop.permute.xlu0 %2148
          %2152 = vset.pattern.permute.xlu0 0
          %2153 = vperm.xlu0 %2152, %v1935
          %v2154 = vpop.permute.xlu0 %2153
          %2157 = vset.pattern.permute.xlu0 0
          %2158 = vperm.xlu0 %2157, %v1936
          %v2159 = vpop.permute.xlu0 %2158
          %2162 = vset.pattern.permute.xlu0 0
          %2163 = vperm.xlu0 %2162, %v1937
          %v2164 = vpop.permute.xlu0 %2163
          %2167 = vset.pattern.permute.xlu0 0
          %2168 = vperm.xlu0 %2167, %v1938
          %v2169 = vpop.permute.xlu0 %2168
          %2172 = vset.pattern.permute.xlu0 0
          %2173 = vperm.xlu0 %2172, %v1939
          %v2174 = vpop.permute.xlu0 %2173
          %2177 = vset.pattern.permute.xlu0 0
          %2178 = vperm.xlu0 %2177, %v1940
          %v2179 = vpop.permute.xlu0 %2178
          %2182 = vset.pattern.permute.xlu0 0
          %2183 = vperm.xlu0 %2182, %v1941
          %v2184 = vpop.permute.xlu0 %2183
          %2187 = vset.pattern.permute.xlu0 0
          %2188 = vperm.xlu0 %2187, %v1942
          %v2189 = vpop.permute.xlu0 %2188
          %2192 = vset.pattern.permute.xlu0 0
          %2193 = vperm.xlu0 %2192, %v1943
          %v2194 = vpop.permute.xlu0 %2193
          %2197 = vset.pattern.permute.xlu0 0
          %2198 = vperm.xlu0 %2197, %v1944
          %v2199 = vpop.permute.xlu0 %2198
          %v2201 = vsub.f32 %v1721, %v2044
          %v2202 = vsub.f32 %v1722, %v2044
          %v2203 = vsub.f32 %v1723, %v2049
          %v2204 = vsub.f32 %v1724, %v2049
          %v2205 = vsub.f32 %v1725, %v2054
          %v2206 = vsub.f32 %v1726, %v2054
          %v2207 = vsub.f32 %v1727, %v2059
          %v2208 = vsub.f32 %v1728, %v2059
          %v2209 = vsub.f32 %v1729, %v2064
          %v2210 = vsub.f32 %v1730, %v2064
          %v2211 = vsub.f32 %v1731, %v2069
          %v2212 = vsub.f32 %v1732, %v2069
          %v2213 = vsub.f32 %v1733, %v2074
          %v2214 = vsub.f32 %v1734, %v2074
          %v2215 = vsub.f32 %v1735, %v2079
          %v2216 = vsub.f32 %v1736, %v2079
          %v2217 = vsub.f32 %v1737, %v2084
          %v2218 = vsub.f32 %v1738, %v2084
          %v2219 = vsub.f32 %v1739, %v2089
          %v2220 = vsub.f32 %v1740, %v2089
          %v2221 = vsub.f32 %v1741, %v2094
          %v2222 = vsub.f32 %v1742, %v2094
          %v2223 = vsub.f32 %v1743, %v2099
          %v2224 = vsub.f32 %v1744, %v2099
          %v2225 = vsub.f32 %v1745, %v2104
          %v2226 = vsub.f32 %v1746, %v2104
          %v2227 = vsub.f32 %v1747, %v2109
          %v2228 = vsub.f32 %v1748, %v2109
          %v2229 = vsub.f32 %v1749, %v2114
          %v2230 = vsub.f32 %v1750, %v2114
          %v2231 = vsub.f32 %v1751, %v2119
          %v2232 = vsub.f32 %v1752, %v2119
          %v2233 = vsub.f32 %v1753, %v2124
          %v2234 = vsub.f32 %v1754, %v2124
          %v2235 = vsub.f32 %v1755, %v2129
          %v2236 = vsub.f32 %v1756, %v2129
          %v2237 = vsub.f32 %v1757, %v2134
          %v2238 = vsub.f32 %v1758, %v2134
          %v2239 = vsub.f32 %v1759, %v2139
          %v2240 = vsub.f32 %v1760, %v2139
          %v2241 = vsub.f32 %v1761, %v2144
          %v2242 = vsub.f32 %v1762, %v2144
          %v2243 = vsub.f32 %v1763, %v2149
          %v2244 = vsub.f32 %v1764, %v2149
          %v2245 = vsub.f32 %v1765, %v2154
          %v2246 = vsub.f32 %v1766, %v2154
          %v2247 = vsub.f32 %v1767, %v2159
          %v2248 = vsub.f32 %v1768, %v2159
          %v2249 = vsub.f32 %v1769, %v2164
          %v2250 = vsub.f32 %v1770, %v2164
          %v2251 = vsub.f32 %v1771, %v2169
          %v2252 = vsub.f32 %v1772, %v2169
          %v2253 = vsub.f32 %v1773, %v2174
          %v2254 = vsub.f32 %v1774, %v2174
          %v2255 = vsub.f32 %v1775, %v2179
          %v2256 = vsub.f32 %v1776, %v2179
          %v2257 = vsub.f32 %v1777, %v2184
          %v2258 = vsub.f32 %v1778, %v2184
          %v2259 = vsub.f32 %v1779, %v2189
          %v2260 = vsub.f32 %v1780, %v2189
          %v2261 = vsub.f32 %v1781, %v2194
          %v2262 = vsub.f32 %v1782, %v2194
          %v2263 = vsub.f32 %v1783, %v2199
          %v2264 = vsub.f32 %v1784, %v2199
          %v2265 = vmul.f32 %v2201, 1.442695
          %v2266 = vpow.pop %v2265
          %v2267 = vmul.f32 %v2202, 1.442695
          %v2268 = vpow.pop %v2267
          %v2269 = vmul.f32 %v2203, 1.442695
          %v2270 = vpow.pop %v2269
          %v2271 = vmul.f32 %v2204, 1.442695
          %v2272 = vpow.pop %v2271
          %v2273 = vmul.f32 %v2205, 1.442695
          %v2274 = vpow.pop %v2273
          %v2275 = vmul.f32 %v2206, 1.442695
          %v2276 = vpow.pop %v2275
          %v2277 = vmul.f32 %v2207, 1.442695
          %v2278 = vpow.pop %v2277
          %v2279 = vmul.f32 %v2208, 1.442695
          %v2280 = vpow.pop %v2279
          %v2281 = vmul.f32 %v2209, 1.442695
          %v2282 = vpow.pop %v2281
          %v2283 = vmul.f32 %v2210, 1.442695
          %v2284 = vpow.pop %v2283
          %v2285 = vmul.f32 %v2211, 1.442695
          %v2286 = vpow.pop %v2285
          %v2287 = vmul.f32 %v2212, 1.442695
          %v2288 = vpow.pop %v2287
          %v2289 = vmul.f32 %v2213, 1.442695
          %v2290 = vpow.pop %v2289
          %v2291 = vmul.f32 %v2214, 1.442695
          %v2292 = vpow.pop %v2291
          %v2293 = vmul.f32 %v2215, 1.442695
          %v2294 = vpow.pop %v2293
          %v2295 = vmul.f32 %v2216, 1.442695
          %v2296 = vpow.pop %v2295
          %v2297 = vmul.f32 %v2217, 1.442695
          %v2298 = vpow.pop %v2297
          %v2299 = vmul.f32 %v2218, 1.442695
          %v2300 = vpow.pop %v2299
          %v2301 = vmul.f32 %v2219, 1.442695
          %v2302 = vpow.pop %v2301
          %v2303 = vmul.f32 %v2220, 1.442695
          %v2304 = vpow.pop %v2303
          %v2305 = vmul.f32 %v2221, 1.442695
          %v2306 = vpow.pop %v2305
          %v2307 = vmul.f32 %v2222, 1.442695
          %v2308 = vpow.pop %v2307
          %v2309 = vmul.f32 %v2223, 1.442695
          %v2310 = vpow.pop %v2309
          %v2311 = vmul.f32 %v2224, 1.442695
          %v2312 = vpow.pop %v2311
          %v2313 = vmul.f32 %v2225, 1.442695
          %v2314 = vpow.pop %v2313
          %v2315 = vmul.f32 %v2226, 1.442695
          %v2316 = vpow.pop %v2315
          %v2317 = vmul.f32 %v2227, 1.442695
          %v2318 = vpow.pop %v2317
          %v2319 = vmul.f32 %v2228, 1.442695
          %v2320 = vpow.pop %v2319
          %v2321 = vmul.f32 %v2229, 1.442695
          %v2322 = vpow.pop %v2321
          %v2323 = vmul.f32 %v2230, 1.442695
          %v2324 = vpow.pop %v2323
          %v2325 = vmul.f32 %v2231, 1.442695
          %v2326 = vpow.pop %v2325
          %v2327 = vmul.f32 %v2232, 1.442695
          %v2328 = vpow.pop %v2327
          %v2329 = vmul.f32 %v2233, 1.442695
          %v2330 = vpow.pop %v2329
          %v2331 = vmul.f32 %v2234, 1.442695
          %v2332 = vpow.pop %v2331
          %v2333 = vmul.f32 %v2235, 1.442695
          %v2334 = vpow.pop %v2333
          %v2335 = vmul.f32 %v2236, 1.442695
          %v2336 = vpow.pop %v2335
          %v2337 = vmul.f32 %v2237, 1.442695
          %v2338 = vpow.pop %v2337
          %v2339 = vmul.f32 %v2238, 1.442695
          %v2340 = vpow.pop %v2339
          %v2341 = vmul.f32 %v2239, 1.442695
          %v2342 = vpow.pop %v2341
          %v2343 = vmul.f32 %v2240, 1.442695
          %v2344 = vpow.pop %v2343
          %v2345 = vmul.f32 %v2241, 1.442695
          %v2346 = vpow.pop %v2345
          %v2347 = vmul.f32 %v2242, 1.442695
          %v2348 = vpow.pop %v2347
          %v2349 = vmul.f32 %v2243, 1.442695
          %v2350 = vpow.pop %v2349
          %v2351 = vmul.f32 %v2244, 1.442695
          %v2352 = vpow.pop %v2351
          %v2353 = vmul.f32 %v2245, 1.442695
          %v2354 = vpow.pop %v2353
          %v2355 = vmul.f32 %v2246, 1.442695
          %v2356 = vpow.pop %v2355
          %v2357 = vmul.f32 %v2247, 1.442695
          %v2358 = vpow.pop %v2357
          %v2359 = vmul.f32 %v2248, 1.442695
          %v2360 = vpow.pop %v2359
          %v2361 = vmul.f32 %v2249, 1.442695
          %v2362 = vpow.pop %v2361
          %v2363 = vmul.f32 %v2250, 1.442695
          %v2364 = vpow.pop %v2363
          %v2365 = vmul.f32 %v2251, 1.442695
          %v2366 = vpow.pop %v2365
          %v2367 = vmul.f32 %v2252, 1.442695
          %v2368 = vpow.pop %v2367
          %v2369 = vmul.f32 %v2253, 1.442695
          %v2370 = vpow.pop %v2369
          %v2371 = vmul.f32 %v2254, 1.442695
          %v2372 = vpow.pop %v2371
          %v2373 = vmul.f32 %v2255, 1.442695
          %v2374 = vpow.pop %v2373
          %v2375 = vmul.f32 %v2256, 1.442695
          %v2376 = vpow.pop %v2375
          %v2377 = vmul.f32 %v2257, 1.442695
          %v2378 = vpow.pop %v2377
          %v2379 = vmul.f32 %v2258, 1.442695
          %v2380 = vpow.pop %v2379
          %v2381 = vmul.f32 %v2259, 1.442695
          %v2382 = vpow.pop %v2381
          %v2383 = vmul.f32 %v2260, 1.442695
          %v2384 = vpow.pop %v2383
          %v2385 = vmul.f32 %v2261, 1.442695
          %v2386 = vpow.pop %v2385
          %v2387 = vmul.f32 %v2262, 1.442695
          %v2388 = vpow.pop %v2387
          %v2389 = vmul.f32 %v2263, 1.442695
          %v2390 = vpow.pop %v2389
          %v2391 = vmul.f32 %v2264, 1.442695
          %v2392 = vpow.pop %v2391
          %v2393 = vld [vmem:[#allocation6] sm:$0xff]
          %v2394 = vld [vmem:[#allocation6 + $0x8] sm:$0xff]
          %v2395 = vld [vmem:[#allocation6 + $0x10] sm:$0xff]
          %v2396 = vld [vmem:[#allocation6 + $0x18] sm:$0xff]
          %v2397 = vld [vmem:[#allocation6 + $0x20] sm:$0xff]
          %v2398 = vld [vmem:[#allocation6 + $0x28] sm:$0xff]
          %v2399 = vld [vmem:[#allocation6 + $0x30] sm:$0xff]
          %v2400 = vld [vmem:[#allocation6 + $0x38] sm:$0xff]
          %v2401 = vld [vmem:[#allocation6 + $0x40] sm:$0xff]
          %v2402 = vld [vmem:[#allocation6 + $0x48] sm:$0xff]
          %v2403 = vld [vmem:[#allocation6 + $0x50] sm:$0xff]
          %v2404 = vld [vmem:[#allocation6 + $0x58] sm:$0xff]
          %v2405 = vld [vmem:[#allocation6 + $0x60] sm:$0xff]
          %v2406 = vld [vmem:[#allocation6 + $0x68] sm:$0xff]
          %v2407 = vld [vmem:[#allocation6 + $0x70] sm:$0xff]
          %v2408 = vld [vmem:[#allocation6 + $0x78] sm:$0xff]
          %v2409 = vld [vmem:[#allocation6 + $0x80] sm:$0xff]
          %v2410 = vld [vmem:[#allocation6 + $0x88] sm:$0xff]
          %v2411 = vld [vmem:[#allocation6 + $0x90] sm:$0xff]
          %v2412 = vld [vmem:[#allocation6 + $0x98] sm:$0xff]
          %v2413 = vld [vmem:[#allocation6 + $0xa0] sm:$0xff]
          %v2414 = vld [vmem:[#allocation6 + $0xa8] sm:$0xff]
          %v2415 = vld [vmem:[#allocation6 + $0xb0] sm:$0xff]
          %v2416 = vld [vmem:[#allocation6 + $0xb8] sm:$0xff]
          %v2417 = vld [vmem:[#allocation6 + $0xc0] sm:$0xff]
          %v2418 = vld [vmem:[#allocation6 + $0xc8] sm:$0xff]
          %v2419 = vld [vmem:[#allocation6 + $0xd0] sm:$0xff]
          %v2420 = vld [vmem:[#allocation6 + $0xd8] sm:$0xff]
          %v2421 = vld [vmem:[#allocation6 + $0xe0] sm:$0xff]
          %v2422 = vld [vmem:[#allocation6 + $0xe8] sm:$0xff]
          %v2423 = vld [vmem:[#allocation6 + $0xf0] sm:$0xff]
          %v2424 = vld [vmem:[#allocation6 + $0xf8] sm:$0xff]
          %v2425 = vmul.f32 %v1978, %v2393
          %v2426 = vmul.f32 %v1980, %v2394
          %v2427 = vmul.f32 %v1982, %v2395
          %v2428 = vmul.f32 %v1984, %v2396
          %v2429 = vmul.f32 %v1986, %v2397
          %v2430 = vmul.f32 %v1988, %v2398
          %v2431 = vmul.f32 %v1990, %v2399
          %v2432 = vmul.f32 %v1992, %v2400
          %v2433 = vmul.f32 %v1994, %v2401
          %v2434 = vmul.f32 %v1996, %v2402
          %v2435 = vmul.f32 %v1998, %v2403
          %v2436 = vmul.f32 %v2000, %v2404
          %v2437 = vmul.f32 %v2002, %v2405
          %v2438 = vmul.f32 %v2004, %v2406
          %v2439 = vmul.f32 %v2006, %v2407
          %v2440 = vmul.f32 %v2008, %v2408
          %v2441 = vmul.f32 %v2010, %v2409
          %v2442 = vmul.f32 %v2012, %v2410
          %v2443 = vmul.f32 %v2014, %v2411
          %v2444 = vmul.f32 %v2016, %v2412
          %v2445 = vmul.f32 %v2018, %v2413
          %v2446 = vmul.f32 %v2020, %v2414
          %v2447 = vmul.f32 %v2022, %v2415
          %v2448 = vmul.f32 %v2024, %v2416
          %v2449 = vmul.f32 %v2026, %v2417
          %v2450 = vmul.f32 %v2028, %v2418
          %v2451 = vmul.f32 %v2030, %v2419
          %v2452 = vmul.f32 %v2032, %v2420
          %v2453 = vmul.f32 %v2034, %v2421
          %v2454 = vmul.f32 %v2036, %v2422
          %v2455 = vmul.f32 %v2038, %v2423
          %v2456 = vmul.f32 %v2040, %v2424
          %v2457 = vadd.f32 %v2266, %v2268
          %2458 = vadd.xlane.f32.xlu0 %v2457
          %v2459 = vpop.xlane.xlu0 %2458
          %v2460 = vadd.f32 %v2270, %v2272
          %2461 = vadd.xlane.f32.xlu0 %v2460
          %v2462 = vpop.xlane.xlu0 %2461
          %v2463 = vadd.f32 %v2274, %v2276
          %2464 = vadd.xlane.f32.xlu0 %v2463
          %v2465 = vpop.xlane.xlu0 %2464
          %v2466 = vadd.f32 %v2278, %v2280
          %2467 = vadd.xlane.f32.xlu0 %v2466
          %v2468 = vpop.xlane.xlu0 %2467
          %v2469 = vadd.f32 %v2282, %v2284
          %2470 = vadd.xlane.f32.xlu0 %v2469
          %v2471 = vpop.xlane.xlu0 %2470
          %v2472 = vadd.f32 %v2286, %v2288
          %2473 = vadd.xlane.f32.xlu0 %v2472
          %v2474 = vpop.xlane.xlu0 %2473
          %v2475 = vadd.f32 %v2290, %v2292
          %2476 = vadd.xlane.f32.xlu0 %v2475
          %v2477 = vpop.xlane.xlu0 %2476
          %v2478 = vadd.f32 %v2294, %v2296
          %2479 = vadd.xlane.f32.xlu0 %v2478
          %v2480 = vpop.xlane.xlu0 %2479
          %v2481 = vadd.f32 %v2298, %v2300
          %2482 = vadd.xlane.f32.xlu0 %v2481
          %v2483 = vpop.xlane.xlu0 %2482
          %v2484 = vadd.f32 %v2302, %v2304
          %2485 = vadd.xlane.f32.xlu0 %v2484
          %v2486 = vpop.xlane.xlu0 %2485
          %v2487 = vadd.f32 %v2306, %v2308
          %2488 = vadd.xlane.f32.xlu0 %v2487
          %v2489 = vpop.xlane.xlu0 %2488
          %v2490 = vadd.f32 %v2310, %v2312
          %2491 = vadd.xlane.f32.xlu0 %v2490
          %v2492 = vpop.xlane.xlu0 %2491
          %v2493 = vadd.f32 %v2314, %v2316
          %2494 = vadd.xlane.f32.xlu0 %v2493
          %v2495 = vpop.xlane.xlu0 %2494
          %v2496 = vadd.f32 %v2318, %v2320
          %2497 = vadd.xlane.f32.xlu0 %v2496
          %v2498 = vpop.xlane.xlu0 %2497
          %v2499 = vadd.f32 %v2322, %v2324
          %2500 = vadd.xlane.f32.xlu0 %v2499
          %v2501 = vpop.xlane.xlu0 %2500
          %v2502 = vadd.f32 %v2326, %v2328
          %2503 = vadd.xlane.f32.xlu0 %v2502
          %v2504 = vpop.xlane.xlu0 %2503
          %v2505 = vadd.f32 %v2330, %v2332
          %2506 = vadd.xlane.f32.xlu0 %v2505
          %v2507 = vpop.xlane.xlu0 %2506
          %v2508 = vadd.f32 %v2334, %v2336
          %2509 = vadd.xlane.f32.xlu0 %v2508
          %v2510 = vpop.xlane.xlu0 %2509
          %v2511 = vadd.f32 %v2338, %v2340
          %2512 = vadd.xlane.f32.xlu0 %v2511
          %v2513 = vpop.xlane.xlu0 %2512
          %v2514 = vadd.f32 %v2342, %v2344
          %2515 = vadd.xlane.f32.xlu0 %v2514
          %v2516 = vpop.xlane.xlu0 %2515
          %v2517 = vadd.f32 %v2346, %v2348
          %2518 = vadd.xlane.f32.xlu0 %v2517
          %v2519 = vpop.xlane.xlu0 %2518
          %v2520 = vadd.f32 %v2350, %v2352
          %2521 = vadd.xlane.f32.xlu0 %v2520
          %v2522 = vpop.xlane.xlu0 %2521
          %v2523 = vadd.f32 %v2354, %v2356
          %2524 = vadd.xlane.f32.xlu0 %v2523
          %v2525 = vpop.xlane.xlu0 %2524
          %v2526 = vadd.f32 %v2358, %v2360
          %2527 = vadd.xlane.f32.xlu0 %v2526
          %v2528 = vpop.xlane.xlu0 %2527
          %v2529 = vadd.f32 %v2362, %v2364
          %2530 = vadd.xlane.f32.xlu0 %v2529
          %v2531 = vpop.xlane.xlu0 %2530
          %v2532 = vadd.f32 %v2366, %v2368
          %2533 = vadd.xlane.f32.xlu0 %v2532
          %v2534 = vpop.xlane.xlu0 %2533
          %v2535 = vadd.f32 %v2370, %v2372
          %2536 = vadd.xlane.f32.xlu0 %v2535
          %v2537 = vpop.xlane.xlu0 %2536
          %v2538 = vadd.f32 %v2374, %v2376
          %2539 = vadd.xlane.f32.xlu0 %v2538
          %v2540 = vpop.xlane.xlu0 %2539
          %v2541 = vadd.f32 %v2378, %v2380
          %2542 = vadd.xlane.f32.xlu0 %v2541
          %v2543 = vpop.xlane.xlu0 %2542
          %v2544 = vadd.f32 %v2382, %v2384
          %2545 = vadd.xlane.f32.xlu0 %v2544
          %v2546 = vpop.xlane.xlu0 %2545
          %v2547 = vadd.f32 %v2386, %v2388
          %2548 = vadd.xlane.f32.xlu0 %v2547
          %v2549 = vpop.xlane.xlu0 %2548
          %v2550 = vadd.f32 %v2390, %v2392
          %2551 = vadd.xlane.f32.xlu0 %v2550
          %v2552 = vpop.xlane.xlu0 %2551
          %v2553 = vadd.f32 %v2425, %v2459
          %v2554 = vadd.f32 %v2426, %v2462
          %v2555 = vadd.f32 %v2427, %v2465
          %v2556 = vadd.f32 %v2428, %v2468
          %v2557 = vadd.f32 %v2429, %v2471
          %v2558 = vadd.f32 %v2430, %v2474
          %v2559 = vadd.f32 %v2431, %v2477
          %v2560 = vadd.f32 %v2432, %v2480
          %v2561 = vadd.f32 %v2433, %v2483
          %v2562 = vadd.f32 %v2434, %v2486
          %v2563 = vadd.f32 %v2435, %v2489
          %v2564 = vadd.f32 %v2436, %v2492
          %v2565 = vadd.f32 %v2437, %v2495
          %v2566 = vadd.f32 %v2438, %v2498
          %v2567 = vadd.f32 %v2439, %v2501
          %v2568 = vadd.f32 %v2440, %v2504
          %v2569 = vadd.f32 %v2441, %v2507
          %v2570 = vadd.f32 %v2442, %v2510
          %v2571 = vadd.f32 %v2443, %v2513
          %v2572 = vadd.f32 %v2444, %v2516
          %v2573 = vadd.f32 %v2445, %v2519
          %v2574 = vadd.f32 %v2446, %v2522
          %v2575 = vadd.f32 %v2447, %v2525
          %v2576 = vadd.f32 %v2448, %v2528
          %v2577 = vadd.f32 %v2449, %v2531
          %v2578 = vadd.f32 %v2450, %v2534
          %v2579 = vadd.f32 %v2451, %v2537
          %v2580 = vadd.f32 %v2452, %v2540
          %v2581 = vadd.f32 %v2453, %v2543
          %v2582 = vadd.f32 %v2454, %v2546
          %v2583 = vadd.f32 %v2455, %v2549
          %v2584 = vadd.f32 %v2456, %v2552
          %vm2585 = vcmask 7168
          %2586 = vst.msk [vmem:[#allocation6] sm:$0xff] %vm2585, %v2553
          %2587 = vst.msk [vmem:[#allocation6 + $0x8] sm:$0xff] %vm2585, %v2554
          %2588 = vst.msk [vmem:[#allocation6 + $0x10] sm:$0xff] %vm2585, %v2555
          %2589 = vst.msk [vmem:[#allocation6 + $0x18] sm:$0xff] %vm2585, %v2556
          %2590 = vst.msk [vmem:[#allocation6 + $0x20] sm:$0xff] %vm2585, %v2557
          %2591 = vst.msk [vmem:[#allocation6 + $0x28] sm:$0xff] %vm2585, %v2558
          %2592 = vst.msk [vmem:[#allocation6 + $0x30] sm:$0xff] %vm2585, %v2559
          %2593 = vst.msk [vmem:[#allocation6 + $0x38] sm:$0xff] %vm2585, %v2560
          %2594 = vst.msk [vmem:[#allocation6 + $0x40] sm:$0xff] %vm2585, %v2561
          %2595 = vst.msk [vmem:[#allocation6 + $0x48] sm:$0xff] %vm2585, %v2562
          %2596 = vst.msk [vmem:[#allocation6 + $0x50] sm:$0xff] %vm2585, %v2563
          %2597 = vst.msk [vmem:[#allocation6 + $0x58] sm:$0xff] %vm2585, %v2564
          %2598 = vst.msk [vmem:[#allocation6 + $0x60] sm:$0xff] %vm2585, %v2565
          %2599 = vst.msk [vmem:[#allocation6 + $0x68] sm:$0xff] %vm2585, %v2566
          %2600 = vst.msk [vmem:[#allocation6 + $0x70] sm:$0xff] %vm2585, %v2567
          %2601 = vst.msk [vmem:[#allocation6 + $0x78] sm:$0xff] %vm2585, %v2568
          %2602 = vst.msk [vmem:[#allocation6 + $0x80] sm:$0xff] %vm2585, %v2569
          %2603 = vst.msk [vmem:[#allocation6 + $0x88] sm:$0xff] %vm2585, %v2570
          %2604 = vst.msk [vmem:[#allocation6 + $0x90] sm:$0xff] %vm2585, %v2571
          %2605 = vst.msk [vmem:[#allocation6 + $0x98] sm:$0xff] %vm2585, %v2572
          %2606 = vst.msk [vmem:[#allocation6 + $0xa0] sm:$0xff] %vm2585, %v2573
          %2607 = vst.msk [vmem:[#allocation6 + $0xa8] sm:$0xff] %vm2585, %v2574
          %2608 = vst.msk [vmem:[#allocation6 + $0xb0] sm:$0xff] %vm2585, %v2575
          %2609 = vst.msk [vmem:[#allocation6 + $0xb8] sm:$0xff] %vm2585, %v2576
          %2610 = vst.msk [vmem:[#allocation6 + $0xc0] sm:$0xff] %vm2585, %v2577
          %2611 = vst.msk [vmem:[#allocation6 + $0xc8] sm:$0xff] %vm2585, %v2578
          %2612 = vst.msk [vmem:[#allocation6 + $0xd0] sm:$0xff] %vm2585, %v2579
          %2613 = vst.msk [vmem:[#allocation6 + $0xd8] sm:$0xff] %vm2585, %v2580
          %2614 = vst.msk [vmem:[#allocation6 + $0xe0] sm:$0xff] %vm2585, %v2581
          %2615 = vst.msk [vmem:[#allocation6 + $0xe8] sm:$0xff] %vm2585, %v2582
          %2616 = vst.msk [vmem:[#allocation6 + $0xf0] sm:$0xff] %vm2585, %v2583
          %2617 = vst.msk [vmem:[#allocation6 + $0xf8] sm:$0xff] %vm2585, %v2584
          %v2618 = vld [vmem:[#allocation7] sm:$0xff]
          %v2619 = vld [vmem:[#allocation7 + $0x8] sm:$0xff]
          %v2620 = vld [vmem:[#allocation7 + $0x10] sm:$0xff]
          %v2621 = vld [vmem:[#allocation7 + $0x18] sm:$0xff]
          %v2622 = vld [vmem:[#allocation7 + $0x20] sm:$0xff]
          %v2623 = vld [vmem:[#allocation7 + $0x28] sm:$0xff]
          %v2624 = vld [vmem:[#allocation7 + $0x30] sm:$0xff]
          %v2625 = vld [vmem:[#allocation7 + $0x38] sm:$0xff]
          %v2626 = vld [vmem:[#allocation7 + $0x40] sm:$0xff]
          %v2627 = vld [vmem:[#allocation7 + $0x48] sm:$0xff]
          %v2628 = vld [vmem:[#allocation7 + $0x50] sm:$0xff]
          %v2629 = vld [vmem:[#allocation7 + $0x58] sm:$0xff]
          %v2630 = vld [vmem:[#allocation7 + $0x60] sm:$0xff]
          %v2631 = vld [vmem:[#allocation7 + $0x68] sm:$0xff]
          %v2632 = vld [vmem:[#allocation7 + $0x70] sm:$0xff]
          %v2633 = vld [vmem:[#allocation7 + $0x78] sm:$0xff]
          %v2634 = vld [vmem:[#allocation7 + $0x80] sm:$0xff]
          %v2635 = vld [vmem:[#allocation7 + $0x88] sm:$0xff]
          %v2636 = vld [vmem:[#allocation7 + $0x90] sm:$0xff]
          %v2637 = vld [vmem:[#allocation7 + $0x98] sm:$0xff]
          %v2638 = vld [vmem:[#allocation7 + $0xa0] sm:$0xff]
          %v2639 = vld [vmem:[#allocation7 + $0xa8] sm:$0xff]
          %v2640 = vld [vmem:[#allocation7 + $0xb0] sm:$0xff]
          %v2641 = vld [vmem:[#allocation7 + $0xb8] sm:$0xff]
          %v2642 = vld [vmem:[#allocation7 + $0xc0] sm:$0xff]
          %v2643 = vld [vmem:[#allocation7 + $0xc8] sm:$0xff]
          %v2644 = vld [vmem:[#allocation7 + $0xd0] sm:$0xff]
          %v2645 = vld [vmem:[#allocation7 + $0xd8] sm:$0xff]
          %v2646 = vld [vmem:[#allocation7 + $0xe0] sm:$0xff]
          %v2647 = vld [vmem:[#allocation7 + $0xe8] sm:$0xff]
          %v2648 = vld [vmem:[#allocation7 + $0xf0] sm:$0xff]
          %v2649 = vld [vmem:[#allocation7 + $0xf8] sm:$0xff]
          %2651 = vset.pattern.permute.xlu0 0
          %2652 = vperm.xlu0 %2651, %v1978
          %v2653 = vpop.permute.xlu0 %2652
          %2656 = vset.pattern.permute.xlu0 0
          %2657 = vperm.xlu0 %2656, %v1980
          %v2658 = vpop.permute.xlu0 %2657
          %2661 = vset.pattern.permute.xlu0 0
          %2662 = vperm.xlu0 %2661, %v1982
          %v2663 = vpop.permute.xlu0 %2662
          %2666 = vset.pattern.permute.xlu0 0
          %2667 = vperm.xlu0 %2666, %v1984
          %v2668 = vpop.permute.xlu0 %2667
          %2671 = vset.pattern.permute.xlu0 0
          %2672 = vperm.xlu0 %2671, %v1986
          %v2673 = vpop.permute.xlu0 %2672
          %2676 = vset.pattern.permute.xlu0 0
          %2677 = vperm.xlu0 %2676, %v1988
          %v2678 = vpop.permute.xlu0 %2677
          %2681 = vset.pattern.permute.xlu0 0
          %2682 = vperm.xlu0 %2681, %v1990
          %v2683 = vpop.permute.xlu0 %2682
          %2686 = vset.pattern.permute.xlu0 0
          %2687 = vperm.xlu0 %2686, %v1992
          %v2688 = vpop.permute.xlu0 %2687
          %2691 = vset.pattern.permute.xlu0 0
          %2692 = vperm.xlu0 %2691, %v1994
          %v2693 = vpop.permute.xlu0 %2692
          %2696 = vset.pattern.permute.xlu0 0
          %2697 = vperm.xlu0 %2696, %v1996
          %v2698 = vpop.permute.xlu0 %2697
          %2701 = vset.pattern.permute.xlu0 0
          %2702 = vperm.xlu0 %2701, %v1998
          %v2703 = vpop.permute.xlu0 %2702
          %2706 = vset.pattern.permute.xlu0 0
          %2707 = vperm.xlu0 %2706, %v2000
          %v2708 = vpop.permute.xlu0 %2707
          %2711 = vset.pattern.permute.xlu0 0
          %2712 = vperm.xlu0 %2711, %v2002
          %v2713 = vpop.permute.xlu0 %2712
          %2716 = vset.pattern.permute.xlu0 0
          %2717 = vperm.xlu0 %2716, %v2004
          %v2718 = vpop.permute.xlu0 %2717
          %2721 = vset.pattern.permute.xlu0 0
          %2722 = vperm.xlu0 %2721, %v2006
          %v2723 = vpop.permute.xlu0 %2722
          %2726 = vset.pattern.permute.xlu0 0
          %2727 = vperm.xlu0 %2726, %v2008
          %v2728 = vpop.permute.xlu0 %2727
          %2731 = vset.pattern.permute.xlu0 0
          %2732 = vperm.xlu0 %2731, %v2010
          %v2733 = vpop.permute.xlu0 %2732
          %2736 = vset.pattern.permute.xlu0 0
          %2737 = vperm.xlu0 %2736, %v2012
          %v2738 = vpop.permute.xlu0 %2737
          %2741 = vset.pattern.permute.xlu0 0
          %2742 = vperm.xlu0 %2741, %v2014
          %v2743 = vpop.permute.xlu0 %2742
          %2746 = vset.pattern.permute.xlu0 0
          %2747 = vperm.xlu0 %2746, %v2016
          %v2748 = vpop.permute.xlu0 %2747
          %2751 = vset.pattern.permute.xlu0 0
          %2752 = vperm.xlu0 %2751, %v2018
          %v2753 = vpop.permute.xlu0 %2752
          %2756 = vset.pattern.permute.xlu0 0
          %2757 = vperm.xlu0 %2756, %v2020
          %v2758 = vpop.permute.xlu0 %2757
          %2761 = vset.pattern.permute.xlu0 0
          %2762 = vperm.xlu0 %2761, %v2022
          %v2763 = vpop.permute.xlu0 %2762
          %2766 = vset.pattern.permute.xlu0 0
          %2767 = vperm.xlu0 %2766, %v2024
          %v2768 = vpop.permute.xlu0 %2767
          %2771 = vset.pattern.permute.xlu0 0
          %2772 = vperm.xlu0 %2771, %v2026
          %v2773 = vpop.permute.xlu0 %2772
          %2776 = vset.pattern.permute.xlu0 0
          %2777 = vperm.xlu0 %2776, %v2028
          %v2778 = vpop.permute.xlu0 %2777
          %2781 = vset.pattern.permute.xlu0 0
          %2782 = vperm.xlu0 %2781, %v2030
          %v2783 = vpop.permute.xlu0 %2782
          %2786 = vset.pattern.permute.xlu0 0
          %2787 = vperm.xlu0 %2786, %v2032
          %v2788 = vpop.permute.xlu0 %2787
          %2791 = vset.pattern.permute.xlu0 0
          %2792 = vperm.xlu0 %2791, %v2034
          %v2793 = vpop.permute.xlu0 %2792
          %2796 = vset.pattern.permute.xlu0 0
          %2797 = vperm.xlu0 %2796, %v2036
          %v2798 = vpop.permute.xlu0 %2797
          %2801 = vset.pattern.permute.xlu0 0
          %2802 = vperm.xlu0 %2801, %v2038
          %v2803 = vpop.permute.xlu0 %2802
          %2806 = vset.pattern.permute.xlu0 0
          %2807 = vperm.xlu0 %2806, %v2040
          %v2808 = vpop.permute.xlu0 %2807
          %v2810 = vmul.f32 %v2653, %v2618
          %v2811 = vmul.f32 %v2658, %v2619
          %v2812 = vmul.f32 %v2663, %v2620
          %v2813 = vmul.f32 %v2668, %v2621
          %v2814 = vmul.f32 %v2673, %v2622
          %v2815 = vmul.f32 %v2678, %v2623
          %v2816 = vmul.f32 %v2683, %v2624
          %v2817 = vmul.f32 %v2688, %v2625
          %v2818 = vmul.f32 %v2693, %v2626
          %v2819 = vmul.f32 %v2698, %v2627
          %v2820 = vmul.f32 %v2703, %v2628
          %v2821 = vmul.f32 %v2708, %v2629
          %v2822 = vmul.f32 %v2713, %v2630
          %v2823 = vmul.f32 %v2718, %v2631
          %v2824 = vmul.f32 %v2723, %v2632
          %v2825 = vmul.f32 %v2728, %v2633
          %v2826 = vmul.f32 %v2733, %v2634
          %v2827 = vmul.f32 %v2738, %v2635
          %v2828 = vmul.f32 %v2743, %v2636
          %v2829 = vmul.f32 %v2748, %v2637
          %v2830 = vmul.f32 %v2753, %v2638
          %v2831 = vmul.f32 %v2758, %v2639
          %v2832 = vmul.f32 %v2763, %v2640
          %v2833 = vmul.f32 %v2768, %v2641
          %v2834 = vmul.f32 %v2773, %v2642
          %v2835 = vmul.f32 %v2778, %v2643
          %v2836 = vmul.f32 %v2783, %v2644
          %v2837 = vmul.f32 %v2788, %v2645
          %v2838 = vmul.f32 %v2793, %v2646
          %v2839 = vmul.f32 %v2798, %v2647
          %v2840 = vmul.f32 %v2803, %v2648
          %v2841 = vmul.f32 %v2808, %v2649
          %v2842 = vpack.c.bf16 %v2270, %v2266
          %v2843 = vpack.c.bf16 %v2272, %v2268
          %v2844 = vpack.c.bf16 %v2278, %v2274
          %v2845 = vpack.c.bf16 %v2280, %v2276
          %v2846 = vpack.c.bf16 %v2286, %v2282
          %v2847 = vpack.c.bf16 %v2288, %v2284
          %v2848 = vpack.c.bf16 %v2294, %v2290
          %v2849 = vpack.c.bf16 %v2296, %v2292
          %v2850 = vpack.c.bf16 %v2302, %v2298
          %v2851 = vpack.c.bf16 %v2304, %v2300
          %v2852 = vpack.c.bf16 %v2310, %v2306
          %v2853 = vpack.c.bf16 %v2312, %v2308
          %v2854 = vpack.c.bf16 %v2318, %v2314
          %v2855 = vpack.c.bf16 %v2320, %v2316
          %v2856 = vpack.c.bf16 %v2326, %v2322
          %v2857 = vpack.c.bf16 %v2328, %v2324
          %v2858 = vpack.c.bf16 %v2334, %v2330
          %v2859 = vpack.c.bf16 %v2336, %v2332
          %v2860 = vpack.c.bf16 %v2342, %v2338
          %v2861 = vpack.c.bf16 %v2344, %v2340
          %v2862 = vpack.c.bf16 %v2350, %v2346
          %v2863 = vpack.c.bf16 %v2352, %v2348
          %v2864 = vpack.c.bf16 %v2358, %v2354
          %v2865 = vpack.c.bf16 %v2360, %v2356
          %v2866 = vpack.c.bf16 %v2366, %v2362
          %v2867 = vpack.c.bf16 %v2368, %v2364
          %v2868 = vpack.c.bf16 %v2374, %v2370
          %v2869 = vpack.c.bf16 %v2376, %v2372
          %v2870 = vpack.c.bf16 %v2382, %v2378
          %v2871 = vpack.c.bf16 %v2384, %v2380
          %v2872 = vpack.c.bf16 %v2390, %v2386
          %v2873 = vpack.c.bf16 %v2392, %v2388
          %2874 = vmatprep.subr.bf16.mxu0 0
          %2875 = vmatpush1.bf16.msra.mxu0 %v1299
          %2876 = vmatprep.subr.bf16.mxu0 0
          %2877 = vmatpush1.bf16.msra.mxu0 %v1300
          %2878 = vmatprep.subr.bf16.mxu0 0
          %2879 = vmatpush1.bf16.msra.mxu0 %v1301
          %2880 = vmatprep.subr.bf16.mxu0 0
          %2881 = vmatpush1.bf16.msra.mxu0 %v1302
          %2882 = vmatprep.subr.bf16.mxu0 0
          %2883 = vmatpush1.bf16.msra.mxu0 %v1303
          %2884 = vmatprep.subr.bf16.mxu0 0
          %2885 = vmatpush1.bf16.msra.mxu0 %v1304
          %2886 = vmatprep.subr.bf16.mxu0 0
          %2887 = vmatpush1.bf16.msra.mxu0 %v1305
          %2888 = vmatprep.subr.bf16.mxu0 0
          %2889 = vmatpush1.bf16.msra.mxu0 %v1306
          %2890 = vmatprep.subr.bf16.mxu0 0
          %2891 = vmatpush1.bf16.msra.mxu0 %v1307
          %2892 = vmatprep.subr.bf16.mxu0 0
          %2893 = vmatpush1.bf16.msra.mxu0 %v1308
          %2894 = vmatprep.subr.bf16.mxu0 0
          %2895 = vmatpush1.bf16.msra.mxu0 %v1309
          %2896 = vmatprep.subr.bf16.mxu0 0
          %2897 = vmatpush1.bf16.msra.mxu0 %v1310
          %2898 = vmatprep.subr.bf16.mxu0 0
          %2899 = vmatpush1.bf16.msra.mxu0 %v1311
          %2900 = vmatprep.subr.bf16.mxu0 0
          %2901 = vmatpush1.bf16.msra.mxu0 %v1312
          %2902 = vmatprep.subr.bf16.mxu0 0
          %2903 = vmatpush1.bf16.msra.mxu0 %v1313
          %2904 = vmatprep.subr.bf16.mxu0 0
          %2905 = vmatpush1.bf16.msra.mxu0 %v1314
          %2906 = vmatprep.mubr.bf16.mxu0 %v2843
          %2907 = vmatmul.mubr.bf16.gmra.mrb[0].mxu0 %v2842
          %v2908 = vpop.f32.mrb[0].mxu0
          %v2909 = vadd.f32 0.0, %v2908
          %v2910 = vpop.f32.mrb[0].mxu0
          %v2911 = vpop.f32.mrb[0].mxu0
          %v2912 = vadd.f32 0.0, %v2911
          %v2913 = vpop.f32.mrb[0].mxu0
          %2914 = vmatprep.mubr.bf16.mxu0 %v2845
          %2915 = vmatmul.mubr.bf16.gmra.mrb[0].mxu0 %v2844
          %v2916 = vpop.f32.mrb[0].mxu0
          %v2917 = vadd.f32 0.0, %v2916
          %v2918 = vpop.f32.mrb[0].mxu0
          %v2919 = vpop.f32.mrb[0].mxu0
          %v2920 = vadd.f32 0.0, %v2919
          %v2921 = vpop.f32.mrb[0].mxu0
          %2922 = vmatprep.mubr.bf16.mxu0 %v2847
          %2923 = vmatmul.mubr.bf16.gmra.mrb[0].mxu0 %v2846
          %v2924 = vpop.f32.mrb[0].mxu0
          %v2925 = vadd.f32 0.0, %v2924
          %v2926 = vpop.f32.mrb[0].mxu0
          %v2927 = vpop.f32.mrb[0].mxu0
          %v2928 = vadd.f32 0.0, %v2927
          %v2929 = vpop.f32.mrb[0].mxu0
          %2930 = vmatprep.mubr.bf16.mxu0 %v2849
          %2931 = vmatmul.mubr.bf16.gmra.mrb[0].mxu0 %v2848
          %v2932 = vpop.f32.mrb[0].mxu0
          %v2933 = vadd.f32 0.0, %v2932
          %v2934 = vpop.f32.mrb[0].mxu0
          %v2935 = vpop.f32.mrb[0].mxu0
          %v2936 = vadd.f32 0.0, %v2935
          %v2937 = vpop.f32.mrb[0].mxu0
          %2938 = vmatprep.mubr.bf16.mxu0 %v2851
          %2939 = vmatmul.mubr.bf16.gmra.mrb[0].mxu0 %v2850
          %v2940 = vpop.f32.mrb[0].mxu0
          %v2941 = vadd.f32 0.0, %v2940
          %v2942 = vpop.f32.mrb[0].mxu0
          %v2943 = vpop.f32.mrb[0].mxu0
          %v2944 = vadd.f32 0.0, %v2943
          %v2945 = vpop.f32.mrb[0].mxu0
          %2946 = vmatprep.mubr.bf16.mxu0 %v2853
          %2947 = vmatmul.mubr.bf16.gmra.mrb[0].mxu0 %v2852
          %v2948 = vpop.f32.mrb[0].mxu0
          %v2949 = vadd.f32 0.0, %v2948
          %v2950 = vpop.f32.mrb[0].mxu0
          %v2951 = vpop.f32.mrb[0].mxu0
          %v2952 = vadd.f32 0.0, %v2951
          %v2953 = vpop.f32.mrb[0].mxu0
          %2954 = vmatprep.mubr.bf16.mxu0 %v2855
          %2955 = vmatmul.mubr.bf16.gmra.mrb[0].mxu0 %v2854
          %v2956 = vpop.f32.mrb[0].mxu0
          %v2957 = vadd.f32 0.0, %v2956
          %v2958 = vpop.f32.mrb[0].mxu0
          %v2959 = vpop.f32.mrb[0].mxu0
          %v2960 = vadd.f32 0.0, %v2959
          %v2961 = vpop.f32.mrb[0].mxu0
          %2962 = vmatprep.mubr.bf16.mxu0 %v2857
          %2963 = vmatmul.mubr.bf16.gmra.mrb[0].mxu0 %v2856
          %v2964 = vpop.f32.mrb[0].mxu0
          %v2965 = vadd.f32 0.0, %v2964
          %v2966 = vpop.f32.mrb[0].mxu0
          %v2967 = vpop.f32.mrb[0].mxu0
          %v2968 = vadd.f32 0.0, %v2967
          %v2969 = vpop.f32.mrb[0].mxu0
          %2970 = vmatprep.mubr.bf16.mxu0 %v2859
          %2971 = vmatmul.mubr.bf16.gmra.mrb[0].mxu0 %v2858
          %v2972 = vpop.f32.mrb[0].mxu0
          %v2973 = vadd.f32 0.0, %v2972
          %v2974 = vpop.f32.mrb[0].mxu0
          %v2975 = vpop.f32.mrb[0].mxu0
          %v2976 = vadd.f32 0.0, %v2975
          %v2977 = vpop.f32.mrb[0].mxu0
          %2978 = vmatprep.mubr.bf16.mxu0 %v2861
          %2979 = vmatmul.mubr.bf16.gmra.mrb[0].mxu0 %v2860
          %v2980 = vpop.f32.mrb[0].mxu0
          %v2981 = vadd.f32 0.0, %v2980
          %v2982 = vpop.f32.mrb[0].mxu0
          %v2983 = vpop.f32.mrb[0].mxu0
          %v2984 = vadd.f32 0.0, %v2983
          %v2985 = vpop.f32.mrb[0].mxu0
          %2986 = vmatprep.mubr.bf16.mxu0 %v2863
          %2987 = vmatmul.mubr.bf16.gmra.mrb[0].mxu0 %v2862
          %v2988 = vpop.f32.mrb[0].mxu0
          %v2989 = vadd.f32 0.0, %v2988
          %v2990 = vpop.f32.mrb[0].mxu0
          %v2991 = vpop.f32.mrb[0].mxu0
          %v2992 = vadd.f32 0.0, %v2991
          %v2993 = vpop.f32.mrb[0].mxu0
          %2994 = vmatprep.mubr.bf16.mxu0 %v2865
          %2995 = vmatmul.mubr.bf16.gmra.mrb[0].mxu0 %v2864
          %v2996 = vpop.f32.mrb[0].mxu0
          %v2997 = vadd.f32 0.0, %v2996
          %v2998 = vpop.f32.mrb[0].mxu0
          %v2999 = vpop.f32.mrb[0].mxu0
          %v3000 = vadd.f32 0.0, %v2999
          %v3001 = vpop.f32.mrb[0].mxu0
          %3002 = vmatprep.mubr.bf16.mxu0 %v2867
          %3003 = vmatmul.mubr.bf16.gmra.mrb[0].mxu0 %v2866
          %v3004 = vpop.f32.mrb[0].mxu0
          %v3005 = vadd.f32 0.0, %v3004
          %v3006 = vpop.f32.mrb[0].mxu0
          %v3007 = vpop.f32.mrb[0].mxu0
          %v3008 = vadd.f32 0.0, %v3007
          %v3009 = vpop.f32.mrb[0].mxu0
          %3010 = vmatprep.mubr.bf16.mxu0 %v2869
          %3011 = vmatmul.mubr.bf16.gmra.mrb[0].mxu0 %v2868
          %v3012 = vpop.f32.mrb[0].mxu0
          %v3013 = vadd.f32 0.0, %v3012
          %v3014 = vpop.f32.mrb[0].mxu0
          %v3015 = vpop.f32.mrb[0].mxu0
          %v3016 = vadd.f32 0.0, %v3015
          %v3017 = vpop.f32.mrb[0].mxu0
          %3018 = vmatprep.mubr.bf16.mxu0 %v2871
          %3019 = vmatmul.mubr.bf16.gmra.mrb[0].mxu0 %v2870
          %v3020 = vpop.f32.mrb[0].mxu0
          %v3021 = vadd.f32 0.0, %v3020
          %v3022 = vpop.f32.mrb[0].mxu0
          %v3023 = vpop.f32.mrb[0].mxu0
          %v3024 = vadd.f32 0.0, %v3023
          %v3025 = vpop.f32.mrb[0].mxu0
          %3026 = vmatprep.mubr.bf16.mxu0 %v2873
          %3027 = vmatmul.mubr.bf16.gmra.mrb[0].mxu0 %v2872
          %v3028 = vpop.f32.mrb[0].mxu0
          %v3029 = vadd.f32 0.0, %v3028
          %v3030 = vpop.f32.mrb[0].mxu0
          %v3031 = vpop.f32.mrb[0].mxu0
          %v3032 = vadd.f32 0.0, %v3031
          %v3033 = vpop.f32.mrb[0].mxu0
          %3034 = vdwg.mxu0
          %v3035 = vadd.f32 %v2810, %v2909
          %v3036 = vadd.f32 %v2811, %v2912
          %v3037 = vadd.f32 %v2812, %v2917
          %v3038 = vadd.f32 %v2813, %v2920
          %v3039 = vadd.f32 %v2814, %v2925
          %v3040 = vadd.f32 %v2815, %v2928
          %v3041 = vadd.f32 %v2816, %v2933
          %v3042 = vadd.f32 %v2817, %v2936
          %v3043 = vadd.f32 %v2818, %v2941
          %v3044 = vadd.f32 %v2819, %v2944
          %v3045 = vadd.f32 %v2820, %v2949
          %v3046 = vadd.f32 %v2821, %v2952
          %v3047 = vadd.f32 %v2822, %v2957
          %v3048 = vadd.f32 %v2823, %v2960
          %v3049 = vadd.f32 %v2824, %v2965
          %v3050 = vadd.f32 %v2825, %v2968
          %v3051 = vadd.f32 %v2826, %v2973
          %v3052 = vadd.f32 %v2827, %v2976
          %v3053 = vadd.f32 %v2828, %v2981
          %v3054 = vadd.f32 %v2829, %v2984
          %v3055 = vadd.f32 %v2830, %v2989
          %v3056 = vadd.f32 %v2831, %v2992
          %v3057 = vadd.f32 %v2832, %v2997
          %v3058 = vadd.f32 %v2833, %v3000
          %v3059 = vadd.f32 %v2834, %v3005
          %v3060 = vadd.f32 %v2835, %v3008
          %v3061 = vadd.f32 %v2836, %v3013
          %v3062 = vadd.f32 %v2837, %v3016
          %v3063 = vadd.f32 %v2838, %v3021
          %v3064 = vadd.f32 %v2839, %v3024
          %v3065 = vadd.f32 %v2840, %v3029
          %v3066 = vadd.f32 %v2841, %v3032
          %3067 = vst.msk [vmem:[#allocation7] sm:$0xff] %vm1331, %v3035
          %3068 = vst.msk [vmem:[#allocation7 + $0x8] sm:$0xff] %vm1331, %v3036
          %3069 = vst.msk [vmem:[#allocation7 + $0x10] sm:$0xff] %vm1331, %v3037
          %3070 = vst.msk [vmem:[#allocation7 + $0x18] sm:$0xff] %vm1331, %v3038
          %3071 = vst.msk [vmem:[#allocation7 + $0x20] sm:$0xff] %vm1331, %v3039
          %3072 = vst.msk [vmem:[#allocation7 + $0x28] sm:$0xff] %vm1331, %v3040
          %3073 = vst.msk [vmem:[#allocation7 + $0x30] sm:$0xff] %vm1331, %v3041
          %3074 = vst.msk [vmem:[#allocation7 + $0x38] sm:$0xff] %vm1331, %v3042
          %3075 = vst.msk [vmem:[#allocation7 + $0x40] sm:$0xff] %vm1331, %v3043
          %3076 = vst.msk [vmem:[#allocation7 + $0x48] sm:$0xff] %vm1331, %v3044
          %3077 = vst.msk [vmem:[#allocation7 + $0x50] sm:$0xff] %vm1331, %v3045
          %3078 = vst.msk [vmem:[#allocation7 + $0x58] sm:$0xff] %vm1331, %v3046
          %3079 = vst.msk [vmem:[#allocation7 + $0x60] sm:$0xff] %vm1331, %v3047
          %3080 = vst.msk [vmem:[#allocation7 + $0x68] sm:$0xff] %vm1331, %v3048
          %3081 = vst.msk [vmem:[#allocation7 + $0x70] sm:$0xff] %vm1331, %v3049
          %3082 = vst.msk [vmem:[#allocation7 + $0x78] sm:$0xff] %vm1331, %v3050
          %3083 = vst.msk [vmem:[#allocation7 + $0x80] sm:$0xff] %vm1331, %v3051
          %3084 = vst.msk [vmem:[#allocation7 + $0x88] sm:$0xff] %vm1331, %v3052
          %3085 = vst.msk [vmem:[#allocation7 + $0x90] sm:$0xff] %vm1331, %v3053
          %3086 = vst.msk [vmem:[#allocation7 + $0x98] sm:$0xff] %vm1331, %v3054
          %3087 = vst.msk [vmem:[#allocation7 + $0xa0] sm:$0xff] %vm1331, %v3055
          %3088 = vst.msk [vmem:[#allocation7 + $0xa8] sm:$0xff] %vm1331, %v3056
          %3089 = vst.msk [vmem:[#allocation7 + $0xb0] sm:$0xff] %vm1331, %v3057
          %3090 = vst.msk [vmem:[#allocation7 + $0xb8] sm:$0xff] %vm1331, %v3058
          %3091 = vst.msk [vmem:[#allocation7 + $0xc0] sm:$0xff] %vm1331, %v3059
          %3092 = vst.msk [vmem:[#allocation7 + $0xc8] sm:$0xff] %vm1331, %v3060
          %3093 = vst.msk [vmem:[#allocation7 + $0xd0] sm:$0xff] %vm1331, %v3061
          %3094 = vst.msk [vmem:[#allocation7 + $0xd8] sm:$0xff] %vm1331, %v3062
          %3095 = vst.msk [vmem:[#allocation7 + $0xe0] sm:$0xff] %vm1331, %v3063
          %3096 = vst.msk [vmem:[#allocation7 + $0xe8] sm:$0xff] %vm1331, %v3064
          %3097 = vst.msk [vmem:[#allocation7 + $0xf0] sm:$0xff] %vm1331, %v3065
          %3098 = vst.msk [vmem:[#allocation7 + $0xf8] sm:$0xff] %vm1331, %v3066
          %3099 = vst.msk [vmem:[#allocation5] sm:$0xff] %vm2585, %v1913
          %3100 = vst.msk [vmem:[#allocation5 + $0x8] sm:$0xff] %vm2585, %v1914
          %3101 = vst.msk [vmem:[#allocation5 + $0x10] sm:$0xff] %vm2585, %v1915
          %3102 = vst.msk [vmem:[#allocation5 + $0x18] sm:$0xff] %vm2585, %v1916
          %3103 = vst.msk [vmem:[#allocation5 + $0x20] sm:$0xff] %vm2585, %v1917
          %3104 = vst.msk [vmem:[#allocation5 + $0x28] sm:$0xff] %vm2585, %v1918
          %3105 = vst.msk [vmem:[#allocation5 + $0x30] sm:$0xff] %vm2585, %v1919
          %3106 = vst.msk [vmem:[#allocation5 + $0x38] sm:$0xff] %vm2585, %v1920
          %3107 = vst.msk [vmem:[#allocation5 + $0x40] sm:$0xff] %vm2585, %v1921
          %3108 = vst.msk [vmem:[#allocation5 + $0x48] sm:$0xff] %vm2585, %v1922
          %3109 = vst.msk [vmem:[#allocation5 + $0x50] sm:$0xff] %vm2585, %v1923
          %3110 = vst.msk [vmem:[#allocation5 + $0x58] sm:$0xff] %vm2585, %v1924
          %3111 = vst.msk [vmem:[#allocation5 + $0x60] sm:$0xff] %vm2585, %v1925
          %3112 = vst.msk [vmem:[#allocation5 + $0x68] sm:$0xff] %vm2585, %v1926
          %3113 = vst.msk [vmem:[#allocation5 + $0x70] sm:$0xff] %vm2585, %v1927
          %3114 = vst.msk [vmem:[#allocation5 + $0x78] sm:$0xff] %vm2585, %v1928
          %3115 = vst.msk [vmem:[#allocation5 + $0x80] sm:$0xff] %vm2585, %v1929
          %3116 = vst.msk [vmem:[#allocation5 + $0x88] sm:$0xff] %vm2585, %v1930
          %3117 = vst.msk [vmem:[#allocation5 + $0x90] sm:$0xff] %vm2585, %v1931
          %3118 = vst.msk [vmem:[#allocation5 + $0x98] sm:$0xff] %vm2585, %v1932
          %3119 = vst.msk [vmem:[#allocation5 + $0xa0] sm:$0xff] %vm2585, %v1933
          %3120 = vst.msk [vmem:[#allocation5 + $0xa8] sm:$0xff] %vm2585, %v1934
          %3121 = vst.msk [vmem:[#allocation5 + $0xb0] sm:$0xff] %vm2585, %v1935
          %3122 = vst.msk [vmem:[#allocation5 + $0xb8] sm:$0xff] %vm2585, %v1936
          %3123 = vst.msk [vmem:[#allocation5 + $0xc0] sm:$0xff] %vm2585, %v1937
          %3124 = vst.msk [vmem:[#allocation5 + $0xc8] sm:$0xff] %vm2585, %v1938
          %3125 = vst.msk [vmem:[#allocation5 + $0xd0] sm:$0xff] %vm2585, %v1939
          %3126 = vst.msk [vmem:[#allocation5 + $0xd8] sm:$0xff] %vm2585, %v1940
          %3127 = vst.msk [vmem:[#allocation5 + $0xe0] sm:$0xff] %vm2585, %v1941
          %3128 = vst.msk [vmem:[#allocation5 + $0xe8] sm:$0xff] %vm2585, %v1942
          %3129 = vst.msk [vmem:[#allocation5 + $0xf0] sm:$0xff] %vm2585, %v1943
          %3130 = vst.msk [vmem:[#allocation5 + $0xf8] sm:$0xff] %vm2585, %v1944
        $region40: #{tpu_custom_call.1} parent=27 // pred_fallthru
          _
        %p3131 = scmp.lt.s32.totalorder %s23, %s22
        // Predicated region
        $region41: #{tpu_custom_call.1} parent=27 // pred_check
          %p3132 = pneg %p3131
        $region42: #{tpu_custom_call.1} parent=27 // pred_check_branch
          %3134 = sbr.rel (%p3132) target = $region44
        $region43: #{tpu_custom_call.1} parent=27 // pred_region
          %s3135 = smul.u32 %s23, 256
          %s3136 = sshra.s32 %s3135, 4
          %s3137 = sand.u32 %s3135, 15
          %s3138 = smul.addr %s3136, 8
          %s3139 = scalar_lea.vmem [#allocation3], %s3138
          %v3140 = vld [vmem:[%s3139] sm:$0xff]
          %v3141 = vld [vmem:[%s3139 + $0x8] sm:$0xff]
          %v3142 = vld [vmem:[%s3139 + $0x10] sm:$0xff]
          %v3143 = vld [vmem:[%s3139 + $0x18] sm:$0xff]
          %v3144 = vld [vmem:[%s3139 + $0x20] sm:$0xff]
          %v3145 = vld [vmem:[%s3139 + $0x28] sm:$0xff]
          %v3146 = vld [vmem:[%s3139 + $0x30] sm:$0xff]
          %v3147 = vld [vmem:[%s3139 + $0x38] sm:$0xff]
          %v3148 = vld [vmem:[%s3139 + $0x40] sm:$0xff]
          %v3149 = vld [vmem:[%s3139 + $0x48] sm:$0xff]
          %v3150 = vld [vmem:[%s3139 + $0x50] sm:$0xff]
          %v3151 = vld [vmem:[%s3139 + $0x58] sm:$0xff]
          %v3152 = vld [vmem:[%s3139 + $0x60] sm:$0xff]
          %v3153 = vld [vmem:[%s3139 + $0x68] sm:$0xff]
          %v3154 = vld [vmem:[%s3139 + $0x70] sm:$0xff]
          %v3155 = vld [vmem:[%s3139 + $0x78] sm:$0xff]
          %s3156 = smul.addr %s3136, 8
          %s3157 = scalar_lea.vmem [#allocation4], %s3156
          %v3158 = vld [vmem:[%s3157] sm:$0xff]
          %v3159 = vld [vmem:[%s3157 + $0x8] sm:$0xff]
          %v3160 = vld [vmem:[%s3157 + $0x10] sm:$0xff]
          %v3161 = vld [vmem:[%s3157 + $0x18] sm:$0xff]
          %v3162 = vld [vmem:[%s3157 + $0x20] sm:$0xff]
          %v3163 = vld [vmem:[%s3157 + $0x28] sm:$0xff]
          %v3164 = vld [vmem:[%s3157 + $0x30] sm:$0xff]
          %v3165 = vld [vmem:[%s3157 + $0x38] sm:$0xff]
          %v3166 = vld [vmem:[%s3157 + $0x40] sm:$0xff]
          %v3167 = vld [vmem:[%s3157 + $0x48] sm:$0xff]
          %v3168 = vld [vmem:[%s3157 + $0x50] sm:$0xff]
          %v3169 = vld [vmem:[%s3157 + $0x58] sm:$0xff]
          %v3170 = vld [vmem:[%s3157 + $0x60] sm:$0xff]
          %v3171 = vld [vmem:[%s3157 + $0x68] sm:$0xff]
          %v3172 = vld [vmem:[%s3157 + $0x70] sm:$0xff]
          %v3173 = vld [vmem:[%s3157 + $0x78] sm:$0xff]
          %v3174 = vld [vmem:[#allocation2] sm:$0xff]
          %v3175 = vld [vmem:[#allocation2 + $0x8] sm:$0xff]
          %v3176 = vld [vmem:[#allocation2 + $0x10] sm:$0xff]
          %v3177 = vld [vmem:[#allocation2 + $0x18] sm:$0xff]
          %v3178 = vld [vmem:[#allocation2 + $0x20] sm:$0xff]
          %v3179 = vld [vmem:[#allocation2 + $0x28] sm:$0xff]
          %v3180 = vld [vmem:[#allocation2 + $0x30] sm:$0xff]
          %v3181 = vld [vmem:[#allocation2 + $0x38] sm:$0xff]
          %v3182 = vld [vmem:[#allocation2 + $0x40] sm:$0xff]
          %v3183 = vld [vmem:[#allocation2 + $0x48] sm:$0xff]
          %v3184 = vld [vmem:[#allocation2 + $0x50] sm:$0xff]
          %v3185 = vld [vmem:[#allocation2 + $0x58] sm:$0xff]
          %v3186 = vld [vmem:[#allocation2 + $0x60] sm:$0xff]
          %v3187 = vld [vmem:[#allocation2 + $0x68] sm:$0xff]
          %v3188 = vld [vmem:[#allocation2 + $0x70] sm:$0xff]
          %v3189 = vld [vmem:[#allocation2 + $0x78] sm:$0xff]
          %vm3190 = vcmask 523264
          %v3192 = vsel %vm3190, %v3174, 0
          %v3195 = vsel %vm3190, %v3175, 0
          %v3198 = vsel %vm3190, %v3176, 0
          %v3201 = vsel %vm3190, %v3177, 0
          %v3204 = vsel %vm3190, %v3178, 0
          %v3207 = vsel %vm3190, %v3179, 0
          %v3210 = vsel %vm3190, %v3180, 0
          %v3213 = vsel %vm3190, %v3181, 0
          %v3216 = vsel %vm3190, %v3182, 0
          %v3219 = vsel %vm3190, %v3183, 0
          %v3222 = vsel %vm3190, %v3184, 0
          %v3225 = vsel %vm3190, %v3185, 0
          %v3228 = vsel %vm3190, %v3186, 0
          %v3231 = vsel %vm3190, %v3187, 0
          %v3234 = vsel %vm3190, %v3188, 0
          %v3237 = vsel %vm3190, %v3189, 0
          %v3240 = vsel %vm3190, %v3140, 0
          %v3243 = vsel %vm3190, %v3141, 0
          %v3246 = vsel %vm3190, %v3142, 0
          %v3249 = vsel %vm3190, %v3143, 0
          %v3252 = vsel %vm3190, %v3144, 0
          %v3255 = vsel %vm3190, %v3145, 0
          %v3258 = vsel %vm3190, %v3146, 0
          %v3261 = vsel %vm3190, %v3147, 0
          %v3264 = vsel %vm3190, %v3148, 0
          %v3267 = vsel %vm3190, %v3149, 0
          %v3270 = vsel %vm3190, %v3150, 0
          %v3273 = vsel %vm3190, %v3151, 0
          %v3276 = vsel %vm3190, %v3152, 0
          %v3279 = vsel %vm3190, %v3153, 0
          %v3282 = vsel %vm3190, %v3154, 0
          %v3285 = vsel %vm3190, %v3155, 0
          %3287 = vmatprep.subr.bf16.mxu0 0
          %3288 = vmatpush1.bf16.xpose.msra.mxu0 %v3240
          %3289 = vmatprep.subr.bf16.mxu0 0
          %3290 = vmatpush1.bf16.xpose.msra.mxu0 %v3243
          %3291 = vmatprep.subr.bf16.mxu0 0
          %3292 = vmatpush1.bf16.xpose.msra.mxu0 %v3246
          %3293 = vmatprep.subr.bf16.mxu0 0
          %3294 = vmatpush1.bf16.xpose.msra.mxu0 %v3249
          %3295 = vmatprep.subr.bf16.mxu0 0
          %3296 = vmatpush1.bf16.xpose.msra.mxu0 %v3252
          %3297 = vmatprep.subr.bf16.mxu0 0
          %3298 = vmatpush1.bf16.xpose.msra.mxu0 %v3255
          %3299 = vmatprep.subr.bf16.mxu0 0
          %3300 = vmatpush1.bf16.xpose.msra.mxu0 %v3258
          %3301 = vmatprep.subr.bf16.mxu0 0
          %3302 = vmatpush1.bf16.xpose.msra.mxu0 %v3261
          %3303 = vmatprep.subr.bf16.mxu0 0
          %3304 = vmatpush1.bf16.xpose.msra.mxu0 %v3264
          %3305 = vmatprep.subr.bf16.mxu0 0
          %3306 = vmatpush1.bf16.xpose.msra.mxu0 %v3267
          %3307 = vmatprep.subr.bf16.mxu0 0
          %3308 = vmatpush1.bf16.xpose.msra.mxu0 %v3270
          %3309 = vmatprep.subr.bf16.mxu0 0
          %3310 = vmatpush1.bf16.xpose.msra.mxu0 %v3273
          %3311 = vmatprep.subr.bf16.mxu0 0
          %3312 = vmatpush1.bf16.xpose.msra.mxu0 %v3276
          %3313 = vmatprep.subr.bf16.mxu0 0
          %3314 = vmatpush1.bf16.xpose.msra.mxu0 %v3279
          %3315 = vmatprep.subr.bf16.mxu0 0
          %3316 = vmatpush1.bf16.xpose.msra.mxu0 %v3282
          %3317 = vmatprep.subr.bf16.mxu0 0
          %3318 = vmatpush1.bf16.xpose.msra.mxu0 %v3285
          %3319 = vmatprep.mubr.bf16.mxu0 0
          %3320 = vmatmul.mubr.bf16.gmra.mrb[0].mxu0 %v3192
          %v3321 = vpop.f32.mrb[0].mxu0
          %v3322 = vadd.f32 0.0, %v3321
          %v3323 = vpop.f32.mrb[0].mxu0
          %v3324 = vadd.f32 0.0, %v3323
          %v3325 = vpop.f32.mrb[0].mxu0
          %v3326 = vadd.f32 0.0, %v3325
          %v3327 = vpop.f32.mrb[0].mxu0
          %v3328 = vadd.f32 0.0, %v3327
          %3329 = vmatprep.mubr.bf16.mxu0 0
          %3330 = vmatmul.mubr.bf16.gmra.mrb[0].mxu0 %v3195
          %v3331 = vpop.f32.mrb[0].mxu0
          %v3332 = vadd.f32 0.0, %v3331
          %v3333 = vpop.f32.mrb[0].mxu0
          %v3334 = vadd.f32 0.0, %v3333
          %v3335 = vpop.f32.mrb[0].mxu0
          %v3336 = vadd.f32 0.0, %v3335
          %v3337 = vpop.f32.mrb[0].mxu0
          %v3338 = vadd.f32 0.0, %v3337
          %3339 = vmatprep.mubr.bf16.mxu0 0
          %3340 = vmatmul.mubr.bf16.gmra.mrb[0].mxu0 %v3198
          %v3341 = vpop.f32.mrb[0].mxu0
          %v3342 = vadd.f32 0.0, %v3341
          %v3343 = vpop.f32.mrb[0].mxu0
          %v3344 = vadd.f32 0.0, %v3343
          %v3345 = vpop.f32.mrb[0].mxu0
          %v3346 = vadd.f32 0.0, %v3345
          %v3347 = vpop.f32.mrb[0].mxu0
          %v3348 = vadd.f32 0.0, %v3347
          %3349 = vmatprep.mubr.bf16.mxu0 0
          %3350 = vmatmul.mubr.bf16.gmra.mrb[0].mxu0 %v3201
          %v3351 = vpop.f32.mrb[0].mxu0
          %v3352 = vadd.f32 0.0, %v3351
          %v3353 = vpop.f32.mrb[0].mxu0
          %v3354 = vadd.f32 0.0, %v3353
          %v3355 = vpop.f32.mrb[0].mxu0
          %v3356 = vadd.f32 0.0, %v3355
          %v3357 = vpop.f32.mrb[0].mxu0
          %v3358 = vadd.f32 0.0, %v3357
          %3359 = vmatprep.mubr.bf16.mxu0 0
          %3360 = vmatmul.mubr.bf16.gmra.mrb[0].mxu0 %v3204
          %v3361 = vpop.f32.mrb[0].mxu0
          %v3362 = vadd.f32 0.0, %v3361
          %v3363 = vpop.f32.mrb[0].mxu0
          %v3364 = vadd.f32 0.0, %v3363
          %v3365 = vpop.f32.mrb[0].mxu0
          %v3366 = vadd.f32 0.0, %v3365
          %v3367 = vpop.f32.mrb[0].mxu0
          %v3368 = vadd.f32 0.0, %v3367
          %3369 = vmatprep.mubr.bf16.mxu0 0
          %3370 = vmatmul.mubr.bf16.gmra.mrb[0].mxu0 %v3207
          %v3371 = vpop.f32.mrb[0].mxu0
          %v3372 = vadd.f32 0.0, %v3371
          %v3373 = vpop.f32.mrb[0].mxu0
          %v3374 = vadd.f32 0.0, %v3373
          %v3375 = vpop.f32.mrb[0].mxu0
          %v3376 = vadd.f32 0.0, %v3375
          %v3377 = vpop.f32.mrb[0].mxu0
          %v3378 = vadd.f32 0.0, %v3377
          %3379 = vmatprep.mubr.bf16.mxu0 0
          %3380 = vmatmul.mubr.bf16.gmra.mrb[0].mxu0 %v3210
          %v3381 = vpop.f32.mrb[0].mxu0
          %v3382 = vadd.f32 0.0, %v3381
          %v3383 = vpop.f32.mrb[0].mxu0
          %v3384 = vadd.f32 0.0, %v3383
          %v3385 = vpop.f32.mrb[0].mxu0
          %v3386 = vadd.f32 0.0, %v3385
          %v3387 = vpop.f32.mrb[0].mxu0
          %v3388 = vadd.f32 0.0, %v3387
          %3389 = vmatprep.mubr.bf16.mxu0 0
          %3390 = vmatmul.mubr.bf16.gmra.mrb[0].mxu0 %v3213
          %v3391 = vpop.f32.mrb[0].mxu0
          %v3392 = vadd.f32 0.0, %v3391
          %v3393 = vpop.f32.mrb[0].mxu0
          %v3394 = vadd.f32 0.0, %v3393
          %v3395 = vpop.f32.mrb[0].mxu0
          %v3396 = vadd.f32 0.0, %v3395
          %v3397 = vpop.f32.mrb[0].mxu0
          %v3398 = vadd.f32 0.0, %v3397
          %3399 = vmatprep.mubr.bf16.mxu0 0
          %3400 = vmatmul.mubr.bf16.gmra.mrb[0].mxu0 %v3216
          %v3401 = vpop.f32.mrb[0].mxu0
          %v3402 = vadd.f32 0.0, %v3401
          %v3403 = vpop.f32.mrb[0].mxu0
          %v3404 = vadd.f32 0.0, %v3403
          %v3405 = vpop.f32.mrb[0].mxu0
          %v3406 = vadd.f32 0.0, %v3405
          %v3407 = vpop.f32.mrb[0].mxu0
          %v3408 = vadd.f32 0.0, %v3407
          %3409 = vmatprep.mubr.bf16.mxu0 0
          %3410 = vmatmul.mubr.bf16.gmra.mrb[0].mxu0 %v3219
          %v3411 = vpop.f32.mrb[0].mxu0
          %v3412 = vadd.f32 0.0, %v3411
          %v3413 = vpop.f32.mrb[0].mxu0
          %v3414 = vadd.f32 0.0, %v3413
          %v3415 = vpop.f32.mrb[0].mxu0
          %v3416 = vadd.f32 0.0, %v3415
          %v3417 = vpop.f32.mrb[0].mxu0
          %v3418 = vadd.f32 0.0, %v3417
          %3419 = vmatprep.mubr.bf16.mxu0 0
          %3420 = vmatmul.mubr.bf16.gmra.mrb[0].mxu0 %v3222
          %v3421 = vpop.f32.mrb[0].mxu0
          %v3422 = vadd.f32 0.0, %v3421
          %v3423 = vpop.f32.mrb[0].mxu0
          %v3424 = vadd.f32 0.0, %v3423
          %v3425 = vpop.f32.mrb[0].mxu0
          %v3426 = vadd.f32 0.0, %v3425
          %v3427 = vpop.f32.mrb[0].mxu0
          %v3428 = vadd.f32 0.0, %v3427
          %3429 = vmatprep.mubr.bf16.mxu0 0
          %3430 = vmatmul.mubr.bf16.gmra.mrb[0].mxu0 %v3225
          %v3431 = vpop.f32.mrb[0].mxu0
          %v3432 = vadd.f32 0.0, %v3431
          %v3433 = vpop.f32.mrb[0].mxu0
          %v3434 = vadd.f32 0.0, %v3433
          %v3435 = vpop.f32.mrb[0].mxu0
          %v3436 = vadd.f32 0.0, %v3435
          %v3437 = vpop.f32.mrb[0].mxu0
          %v3438 = vadd.f32 0.0, %v3437
          %3439 = vmatprep.mubr.bf16.mxu0 0
          %3440 = vmatmul.mubr.bf16.gmra.mrb[0].mxu0 %v3228
          %v3441 = vpop.f32.mrb[0].mxu0
          %v3442 = vadd.f32 0.0, %v3441
          %v3443 = vpop.f32.mrb[0].mxu0
          %v3444 = vadd.f32 0.0, %v3443
          %v3445 = vpop.f32.mrb[0].mxu0
          %v3446 = vadd.f32 0.0, %v3445
          %v3447 = vpop.f32.mrb[0].mxu0
          %v3448 = vadd.f32 0.0, %v3447
          %3449 = vmatprep.mubr.bf16.mxu0 0
          %3450 = vmatmul.mubr.bf16.gmra.mrb[0].mxu0 %v3231
          %v3451 = vpop.f32.mrb[0].mxu0
          %v3452 = vadd.f32 0.0, %v3451
          %v3453 = vpop.f32.mrb[0].mxu0
          %v3454 = vadd.f32 0.0, %v3453
          %v3455 = vpop.f32.mrb[0].mxu0
          %v3456 = vadd.f32 0.0, %v3455
          %v3457 = vpop.f32.mrb[0].mxu0
          %v3458 = vadd.f32 0.0, %v3457
          %3459 = vmatprep.mubr.bf16.mxu0 0
          %3460 = vmatmul.mubr.bf16.gmra.mrb[0].mxu0 %v3234
          %v3461 = vpop.f32.mrb[0].mxu0
          %v3462 = vadd.f32 0.0, %v3461
          %v3463 = vpop.f32.mrb[0].mxu0
          %v3464 = vadd.f32 0.0, %v3463
          %v3465 = vpop.f32.mrb[0].mxu0
          %v3466 = vadd.f32 0.0, %v3465
          %v3467 = vpop.f32.mrb[0].mxu0
          %v3468 = vadd.f32 0.0, %v3467
          %3469 = vmatprep.mubr.bf16.mxu0 0
          %3470 = vmatmul.mubr.bf16.gmra.mrb[0].mxu0 %v3237
          %v3471 = vpop.f32.mrb[0].mxu0
          %v3472 = vadd.f32 0.0, %v3471
          %v3473 = vpop.f32.mrb[0].mxu0
          %v3474 = vadd.f32 0.0, %v3473
          %v3475 = vpop.f32.mrb[0].mxu0
          %v3476 = vadd.f32 0.0, %v3475
          %v3477 = vpop.f32.mrb[0].mxu0
          %v3478 = vadd.f32 0.0, %v3477
          %3479 = vdwg.mxu0
          %v3480 = vld [vmem:[#allocation5] sm:$0xff]
          %v3481 = vld [vmem:[#allocation5 + $0x8] sm:$0xff]
          %v3482 = vld [vmem:[#allocation5 + $0x10] sm:$0xff]
          %v3483 = vld [vmem:[#allocation5 + $0x18] sm:$0xff]
          %v3484 = vld [vmem:[#allocation5 + $0x20] sm:$0xff]
          %v3485 = vld [vmem:[#allocation5 + $0x28] sm:$0xff]
          %v3486 = vld [vmem:[#allocation5 + $0x30] sm:$0xff]
          %v3487 = vld [vmem:[#allocation5 + $0x38] sm:$0xff]
          %v3488 = vld [vmem:[#allocation5 + $0x40] sm:$0xff]
          %v3489 = vld [vmem:[#allocation5 + $0x48] sm:$0xff]
          %v3490 = vld [vmem:[#allocation5 + $0x50] sm:$0xff]
          %v3491 = vld [vmem:[#allocation5 + $0x58] sm:$0xff]
          %v3492 = vld [vmem:[#allocation5 + $0x60] sm:$0xff]
          %v3493 = vld [vmem:[#allocation5 + $0x68] sm:$0xff]
          %v3494 = vld [vmem:[#allocation5 + $0x70] sm:$0xff]
          %v3495 = vld [vmem:[#allocation5 + $0x78] sm:$0xff]
          %v3496 = vld [vmem:[#allocation5 + $0x80] sm:$0xff]
          %v3497 = vld [vmem:[#allocation5 + $0x88] sm:$0xff]
          %v3498 = vld [vmem:[#allocation5 + $0x90] sm:$0xff]
          %v3499 = vld [vmem:[#allocation5 + $0x98] sm:$0xff]
          %v3500 = vld [vmem:[#allocation5 + $0xa0] sm:$0xff]
          %v3501 = vld [vmem:[#allocation5 + $0xa8] sm:$0xff]
          %v3502 = vld [vmem:[#allocation5 + $0xb0] sm:$0xff]
          %v3503 = vld [vmem:[#allocation5 + $0xb8] sm:$0xff]
          %v3504 = vld [vmem:[#allocation5 + $0xc0] sm:$0xff]
          %v3505 = vld [vmem:[#allocation5 + $0xc8] sm:$0xff]
          %v3506 = vld [vmem:[#allocation5 + $0xd0] sm:$0xff]
          %v3507 = vld [vmem:[#allocation5 + $0xd8] sm:$0xff]
          %v3508 = vld [vmem:[#allocation5 + $0xe0] sm:$0xff]
          %v3509 = vld [vmem:[#allocation5 + $0xe8] sm:$0xff]
          %v3510 = vld [vmem:[#allocation5 + $0xf0] sm:$0xff]
          %v3511 = vld [vmem:[#allocation5 + $0xf8] sm:$0xff]
          %v3512 = vmax.f32 %v3322, %v3324
          %3513 = vmax.xlane.f32.xlu0 %v3512
          %v3514 = vpop.xlane.xlu0 %3513
          %v3515 = vmax.f32 %v3326, %v3328
          %3516 = vmax.xlane.f32.xlu0 %v3515
          %v3517 = vpop.xlane.xlu0 %3516
          %v3518 = vmax.f32 %v3332, %v3334
          %3519 = vmax.xlane.f32.xlu0 %v3518
          %v3520 = vpop.xlane.xlu0 %3519
          %v3521 = vmax.f32 %v3336, %v3338
          %3522 = vmax.xlane.f32.xlu0 %v3521
          %v3523 = vpop.xlane.xlu0 %3522
          %v3524 = vmax.f32 %v3342, %v3344
          %3525 = vmax.xlane.f32.xlu0 %v3524
          %v3526 = vpop.xlane.xlu0 %3525
          %v3527 = vmax.f32 %v3346, %v3348
          %3528 = vmax.xlane.f32.xlu0 %v3527
          %v3529 = vpop.xlane.xlu0 %3528
          %v3530 = vmax.f32 %v3352, %v3354
          %3531 = vmax.xlane.f32.xlu0 %v3530
          %v3532 = vpop.xlane.xlu0 %3531
          %v3533 = vmax.f32 %v3356, %v3358
          %3534 = vmax.xlane.f32.xlu0 %v3533
          %v3535 = vpop.xlane.xlu0 %3534
          %v3536 = vmax.f32 %v3362, %v3364
          %3537 = vmax.xlane.f32.xlu0 %v3536
          %v3538 = vpop.xlane.xlu0 %3537
          %v3539 = vmax.f32 %v3366, %v3368
          %3540 = vmax.xlane.f32.xlu0 %v3539
          %v3541 = vpop.xlane.xlu0 %3540
          %v3542 = vmax.f32 %v3372, %v3374
          %3543 = vmax.xlane.f32.xlu0 %v3542
          %v3544 = vpop.xlane.xlu0 %3543
          %v3545 = vmax.f32 %v3376, %v3378
          %3546 = vmax.xlane.f32.xlu0 %v3545
          %v3547 = vpop.xlane.xlu0 %3546
          %v3548 = vmax.f32 %v3382, %v3384
          %3549 = vmax.xlane.f32.xlu0 %v3548
          %v3550 = vpop.xlane.xlu0 %3549
          %v3551 = vmax.f32 %v3386, %v3388
          %3552 = vmax.xlane.f32.xlu0 %v3551
          %v3553 = vpop.xlane.xlu0 %3552
          %v3554 = vmax.f32 %v3392, %v3394
          %3555 = vmax.xlane.f32.xlu0 %v3554
          %v3556 = vpop.xlane.xlu0 %3555
          %v3557 = vmax.f32 %v3396, %v3398
          %3558 = vmax.xlane.f32.xlu0 %v3557
          %v3559 = vpop.xlane.xlu0 %3558
          %v3560 = vmax.f32 %v3402, %v3404
          %3561 = vmax.xlane.f32.xlu0 %v3560
          %v3562 = vpop.xlane.xlu0 %3561
          %v3563 = vmax.f32 %v3406, %v3408
          %3564 = vmax.xlane.f32.xlu0 %v3563
          %v3565 = vpop.xlane.xlu0 %3564
          %v3566 = vmax.f32 %v3412, %v3414
          %3567 = vmax.xlane.f32.xlu0 %v3566
          %v3568 = vpop.xlane.xlu0 %3567
          %v3569 = vmax.f32 %v3416, %v3418
          %3570 = vmax.xlane.f32.xlu0 %v3569
          %v3571 = vpop.xlane.xlu0 %3570
          %v3572 = vmax.f32 %v3422, %v3424
          %3573 = vmax.xlane.f32.xlu0 %v3572
          %v3574 = vpop.xlane.xlu0 %3573
          %v3575 = vmax.f32 %v3426, %v3428
          %3576 = vmax.xlane.f32.xlu0 %v3575
          %v3577 = vpop.xlane.xlu0 %3576
          %v3578 = vmax.f32 %v3432, %v3434
          %3579 = vmax.xlane.f32.xlu0 %v3578
          %v3580 = vpop.xlane.xlu0 %3579
          %v3581 = vmax.f32 %v3436, %v3438
          %3582 = vmax.xlane.f32.xlu0 %v3581
          %v3583 = vpop.xlane.xlu0 %3582
          %v3584 = vmax.f32 %v3442, %v3444
          %3585 = vmax.xlane.f32.xlu0 %v3584
          %v3586 = vpop.xlane.xlu0 %3585
          %v3587 = vmax.f32 %v3446, %v3448
          %3588 = vmax.xlane.f32.xlu0 %v3587
          %v3589 = vpop.xlane.xlu0 %3588
          %v3590 = vmax.f32 %v3452, %v3454
          %3591 = vmax.xlane.f32.xlu0 %v3590
          %v3592 = vpop.xlane.xlu0 %3591
          %v3593 = vmax.f32 %v3456, %v3458
          %3594 = vmax.xlane.f32.xlu0 %v3593
          %v3595 = vpop.xlane.xlu0 %3594
          %v3596 = vmax.f32 %v3462, %v3464
          %3597 = vmax.xlane.f32.xlu0 %v3596
          %v3598 = vpop.xlane.xlu0 %3597
          %v3599 = vmax.f32 %v3466, %v3468
          %3600 = vmax.xlane.f32.xlu0 %v3599
          %v3601 = vpop.xlane.xlu0 %3600
          %v3602 = vmax.f32 %v3472, %v3474
          %3603 = vmax.xlane.f32.xlu0 %v3602
          %v3604 = vpop.xlane.xlu0 %3603
          %v3605 = vmax.f32 %v3476, %v3478
          %3606 = vmax.xlane.f32.xlu0 %v3605
          %v3607 = vpop.xlane.xlu0 %3606
          %v3608 = vmax.f32 %v3480, %v3514
          %v3609 = vmax.f32 %v3481, %v3517
          %v3610 = vmax.f32 %v3482, %v3520
          %v3611 = vmax.f32 %v3483, %v3523
          %v3612 = vmax.f32 %v3484, %v3526
          %v3613 = vmax.f32 %v3485, %v3529
          %v3614 = vmax.f32 %v3486, %v3532
          %v3615 = vmax.f32 %v3487, %v3535
          %v3616 = vmax.f32 %v3488, %v3538
          %v3617 = vmax.f32 %v3489, %v3541
          %v3618 = vmax.f32 %v3490, %v3544
          %v3619 = vmax.f32 %v3491, %v3547
          %v3620 = vmax.f32 %v3492, %v3550
          %v3621 = vmax.f32 %v3493, %v3553
          %v3622 = vmax.f32 %v3494, %v3556
          %v3623 = vmax.f32 %v3495, %v3559
          %v3624 = vmax.f32 %v3496, %v3562
          %v3625 = vmax.f32 %v3497, %v3565
          %v3626 = vmax.f32 %v3498, %v3568
          %v3627 = vmax.f32 %v3499, %v3571
          %v3628 = vmax.f32 %v3500, %v3574
          %v3629 = vmax.f32 %v3501, %v3577
          %v3630 = vmax.f32 %v3502, %v3580
          %v3631 = vmax.f32 %v3503, %v3583
          %v3632 = vmax.f32 %v3504, %v3586
          %v3633 = vmax.f32 %v3505, %v3589
          %v3634 = vmax.f32 %v3506, %v3592
          %v3635 = vmax.f32 %v3507, %v3595
          %v3636 = vmax.f32 %v3508, %v3598
          %v3637 = vmax.f32 %v3509, %v3601
          %v3638 = vmax.f32 %v3510, %v3604
          %v3639 = vmax.f32 %v3511, %v3607
          %v3640 = vsub.f32 %v3480, %v3608
          %v3641 = vsub.f32 %v3481, %v3609
          %v3642 = vsub.f32 %v3482, %v3610
          %v3643 = vsub.f32 %v3483, %v3611
          %v3644 = vsub.f32 %v3484, %v3612
          %v3645 = vsub.f32 %v3485, %v3613
          %v3646 = vsub.f32 %v3486, %v3614
          %v3647 = vsub.f32 %v3487, %v3615
          %v3648 = vsub.f32 %v3488, %v3616
          %v3649 = vsub.f32 %v3489, %v3617
          %v3650 = vsub.f32 %v3490, %v3618
          %v3651 = vsub.f32 %v3491, %v3619
          %v3652 = vsub.f32 %v3492, %v3620
          %v3653 = vsub.f32 %v3493, %v3621
          %v3654 = vsub.f32 %v3494, %v3622
          %v3655 = vsub.f32 %v3495, %v3623
          %v3656 = vsub.f32 %v3496, %v3624
          %v3657 = vsub.f32 %v3497, %v3625
          %v3658 = vsub.f32 %v3498, %v3626
          %v3659 = vsub.f32 %v3499, %v3627
          %v3660 = vsub.f32 %v3500, %v3628
          %v3661 = vsub.f32 %v3501, %v3629
          %v3662 = vsub.f32 %v3502, %v3630
          %v3663 = vsub.f32 %v3503, %v3631
          %v3664 = vsub.f32 %v3504, %v3632
          %v3665 = vsub.f32 %v3505, %v3633
          %v3666 = vsub.f32 %v3506, %v3634
          %v3667 = vsub.f32 %v3507, %v3635
          %v3668 = vsub.f32 %v3508, %v3636
          %v3669 = vsub.f32 %v3509, %v3637
          %v3670 = vsub.f32 %v3510, %v3638
          %v3671 = vsub.f32 %v3511, %v3639
          %v3672 = vmul.f32 %v3640, 1.442695
          %v3673 = vpow.pop %v3672
          %v3674 = vmul.f32 %v3641, 1.442695
          %v3675 = vpow.pop %v3674
          %v3676 = vmul.f32 %v3642, 1.442695
          %v3677 = vpow.pop %v3676
          %v3678 = vmul.f32 %v3643, 1.442695
          %v3679 = vpow.pop %v3678
          %v3680 = vmul.f32 %v3644, 1.442695
          %v3681 = vpow.pop %v3680
          %v3682 = vmul.f32 %v3645, 1.442695
          %v3683 = vpow.pop %v3682
          %v3684 = vmul.f32 %v3646, 1.442695
          %v3685 = vpow.pop %v3684
          %v3686 = vmul.f32 %v3647, 1.442695
          %v3687 = vpow.pop %v3686
          %v3688 = vmul.f32 %v3648, 1.442695
          %v3689 = vpow.pop %v3688
          %v3690 = vmul.f32 %v3649, 1.442695
          %v3691 = vpow.pop %v3690
          %v3692 = vmul.f32 %v3650, 1.442695
          %v3693 = vpow.pop %v3692
          %v3694 = vmul.f32 %v3651, 1.442695
          %v3695 = vpow.pop %v3694
          %v3696 = vmul.f32 %v3652, 1.442695
          %v3697 = vpow.pop %v3696
          %v3698 = vmul.f32 %v3653, 1.442695
          %v3699 = vpow.pop %v3698
          %v3700 = vmul.f32 %v3654, 1.442695
          %v3701 = vpow.pop %v3700
          %v3702 = vmul.f32 %v3655, 1.442695
          %v3703 = vpow.pop %v3702
          %v3704 = vmul.f32 %v3656, 1.442695
          %v3705 = vpow.pop %v3704
          %v3706 = vmul.f32 %v3657, 1.442695
          %v3707 = vpow.pop %v3706
          %v3708 = vmul.f32 %v3658, 1.442695
          %v3709 = vpow.pop %v3708
          %v3710 = vmul.f32 %v3659, 1.442695
          %v3711 = vpow.pop %v3710
          %v3712 = vmul.f32 %v3660, 1.442695
          %v3713 = vpow.pop %v3712
          %v3714 = vmul.f32 %v3661, 1.442695
          %v3715 = vpow.pop %v3714
          %v3716 = vmul.f32 %v3662, 1.442695
          %v3717 = vpow.pop %v3716
          %v3718 = vmul.f32 %v3663, 1.442695
          %v3719 = vpow.pop %v3718
          %v3720 = vmul.f32 %v3664, 1.442695
          %v3721 = vpow.pop %v3720
          %v3722 = vmul.f32 %v3665, 1.442695
          %v3723 = vpow.pop %v3722
          %v3724 = vmul.f32 %v3666, 1.442695
          %v3725 = vpow.pop %v3724
          %v3726 = vmul.f32 %v3667, 1.442695
          %v3727 = vpow.pop %v3726
          %v3728 = vmul.f32 %v3668, 1.442695
          %v3729 = vpow.pop %v3728
          %v3730 = vmul.f32 %v3669, 1.442695
          %v3731 = vpow.pop %v3730
          %v3732 = vmul.f32 %v3670, 1.442695
          %v3733 = vpow.pop %v3732
          %v3734 = vmul.f32 %v3671, 1.442695
          %v3735 = vpow.pop %v3734
          %3737 = vset.pattern.permute.xlu0 0
          %3738 = vperm.xlu0 %3737, %v3608
          %v3739 = vpop.permute.xlu0 %3738
          %3742 = vset.pattern.permute.xlu0 0
          %3743 = vperm.xlu0 %3742, %v3609
          %v3744 = vpop.permute.xlu0 %3743
          %3747 = vset.pattern.permute.xlu0 0
          %3748 = vperm.xlu0 %3747, %v3610
          %v3749 = vpop.permute.xlu0 %3748
          %3752 = vset.pattern.permute.xlu0 0
          %3753 = vperm.xlu0 %3752, %v3611
          %v3754 = vpop.permute.xlu0 %3753
          %3757 = vset.pattern.permute.xlu0 0
          %3758 = vperm.xlu0 %3757, %v3612
          %v3759 = vpop.permute.xlu0 %3758
          %3762 = vset.pattern.permute.xlu0 0
          %3763 = vperm.xlu0 %3762, %v3613
          %v3764 = vpop.permute.xlu0 %3763
          %3767 = vset.pattern.permute.xlu0 0
          %3768 = vperm.xlu0 %3767, %v3614
          %v3769 = vpop.permute.xlu0 %3768
          %3772 = vset.pattern.permute.xlu0 0
          %3773 = vperm.xlu0 %3772, %v3615
          %v3774 = vpop.permute.xlu0 %3773
          %3777 = vset.pattern.permute.xlu0 0
          %3778 = vperm.xlu0 %3777, %v3616
          %v3779 = vpop.permute.xlu0 %3778
          %3782 = vset.pattern.permute.xlu0 0
          %3783 = vperm.xlu0 %3782, %v3617
          %v3784 = vpop.permute.xlu0 %3783
          %3787 = vset.pattern.permute.xlu0 0
          %3788 = vperm.xlu0 %3787, %v3618
          %v3789 = vpop.permute.xlu0 %3788
          %3792 = vset.pattern.permute.xlu0 0
          %3793 = vperm.xlu0 %3792, %v3619
          %v3794 = vpop.permute.xlu0 %3793
          %3797 = vset.pattern.permute.xlu0 0
          %3798 = vperm.xlu0 %3797, %v3620
          %v3799 = vpop.permute.xlu0 %3798
          %3802 = vset.pattern.permute.xlu0 0
          %3803 = vperm.xlu0 %3802, %v3621
          %v3804 = vpop.permute.xlu0 %3803
          %3807 = vset.pattern.permute.xlu0 0
          %3808 = vperm.xlu0 %3807, %v3622
          %v3809 = vpop.permute.xlu0 %3808
          %3812 = vset.pattern.permute.xlu0 0
          %3813 = vperm.xlu0 %3812, %v3623
          %v3814 = vpop.permute.xlu0 %3813
          %3817 = vset.pattern.permute.xlu0 0
          %3818 = vperm.xlu0 %3817, %v3624
          %v3819 = vpop.permute.xlu0 %3818
          %3822 = vset.pattern.permute.xlu0 0
          %3823 = vperm.xlu0 %3822, %v3625
          %v3824 = vpop.permute.xlu0 %3823
          %3827 = vset.pattern.permute.xlu0 0
          %3828 = vperm.xlu0 %3827, %v3626
          %v3829 = vpop.permute.xlu0 %3828
          %3832 = vset.pattern.permute.xlu0 0
          %3833 = vperm.xlu0 %3832, %v3627
          %v3834 = vpop.permute.xlu0 %3833
          %3837 = vset.pattern.permute.xlu0 0
          %3838 = vperm.xlu0 %3837, %v3628
          %v3839 = vpop.permute.xlu0 %3838
          %3842 = vset.pattern.permute.xlu0 0
          %3843 = vperm.xlu0 %3842, %v3629
          %v3844 = vpop.permute.xlu0 %3843
          %3847 = vset.pattern.permute.xlu0 0
          %3848 = vperm.xlu0 %3847, %v3630
          %v3849 = vpop.permute.xlu0 %3848
          %3852 = vset.pattern.permute.xlu0 0
          %3853 = vperm.xlu0 %3852, %v3631
          %v3854 = vpop.permute.xlu0 %3853
          %3857 = vset.pattern.permute.xlu0 0
          %3858 = vperm.xlu0 %3857, %v3632
          %v3859 = vpop.permute.xlu0 %3858
          %3862 = vset.pattern.permute.xlu0 0
          %3863 = vperm.xlu0 %3862, %v3633
          %v3864 = vpop.permute.xlu0 %3863
          %3867 = vset.pattern.permute.xlu0 0
          %3868 = vperm.xlu0 %3867, %v3634
          %v3869 = vpop.permute.xlu0 %3868
          %3872 = vset.pattern.permute.xlu0 0
          %3873 = vperm.xlu0 %3872, %v3635
          %v3874 = vpop.permute.xlu0 %3873
          %3877 = vset.pattern.permute.xlu0 0
          %3878 = vperm.xlu0 %3877, %v3636
          %v3879 = vpop.permute.xlu0 %3878
          %3882 = vset.pattern.permute.xlu0 0
          %3883 = vperm.xlu0 %3882, %v3637
          %v3884 = vpop.permute.xlu0 %3883
          %3887 = vset.pattern.permute.xlu0 0
          %3888 = vperm.xlu0 %3887, %v3638
          %v3889 = vpop.permute.xlu0 %3888
          %3892 = vset.pattern.permute.xlu0 0
          %3893 = vperm.xlu0 %3892, %v3639
          %v3894 = vpop.permute.xlu0 %3893
          %v3896 = vsub.f32 %v3322, %v3739
          %v3897 = vsub.f32 %v3324, %v3739
          %v3898 = vsub.f32 %v3326, %v3744
          %v3899 = vsub.f32 %v3328, %v3744
          %v3900 = vsub.f32 %v3332, %v3749
          %v3901 = vsub.f32 %v3334, %v3749
          %v3902 = vsub.f32 %v3336, %v3754
          %v3903 = vsub.f32 %v3338, %v3754
          %v3904 = vsub.f32 %v3342, %v3759
          %v3905 = vsub.f32 %v3344, %v3759
          %v3906 = vsub.f32 %v3346, %v3764
          %v3907 = vsub.f32 %v3348, %v3764
          %v3908 = vsub.f32 %v3352, %v3769
          %v3909 = vsub.f32 %v3354, %v3769
          %v3910 = vsub.f32 %v3356, %v3774
          %v3911 = vsub.f32 %v3358, %v3774
          %v3912 = vsub.f32 %v3362, %v3779
          %v3913 = vsub.f32 %v3364, %v3779
          %v3914 = vsub.f32 %v3366, %v3784
          %v3915 = vsub.f32 %v3368, %v3784
          %v3916 = vsub.f32 %v3372, %v3789
          %v3917 = vsub.f32 %v3374, %v3789
          %v3918 = vsub.f32 %v3376, %v3794
          %v3919 = vsub.f32 %v3378, %v3794
          %v3920 = vsub.f32 %v3382, %v3799
          %v3921 = vsub.f32 %v3384, %v3799
          %v3922 = vsub.f32 %v3386, %v3804
          %v3923 = vsub.f32 %v3388, %v3804
          %v3924 = vsub.f32 %v3392, %v3809
          %v3925 = vsub.f32 %v3394, %v3809
          %v3926 = vsub.f32 %v3396, %v3814
          %v3927 = vsub.f32 %v3398, %v3814
          %v3928 = vsub.f32 %v3402, %v3819
          %v3929 = vsub.f32 %v3404, %v3819
          %v3930 = vsub.f32 %v3406, %v3824
          %v3931 = vsub.f32 %v3408, %v3824
          %v3932 = vsub.f32 %v3412, %v3829
          %v3933 = vsub.f32 %v3414, %v3829
          %v3934 = vsub.f32 %v3416, %v3834
          %v3935 = vsub.f32 %v3418, %v3834
          %v3936 = vsub.f32 %v3422, %v3839
          %v3937 = vsub.f32 %v3424, %v3839
          %v3938 = vsub.f32 %v3426, %v3844
          %v3939 = vsub.f32 %v3428, %v3844
          %v3940 = vsub.f32 %v3432, %v3849
          %v3941 = vsub.f32 %v3434, %v3849
          %v3942 = vsub.f32 %v3436, %v3854
          %v3943 = vsub.f32 %v3438, %v3854
          %v3944 = vsub.f32 %v3442, %v3859
          %v3945 = vsub.f32 %v3444, %v3859
          %v3946 = vsub.f32 %v3446, %v3864
          %v3947 = vsub.f32 %v3448, %v3864
          %v3948 = vsub.f32 %v3452, %v3869
          %v3949 = vsub.f32 %v3454, %v3869
          %v3950 = vsub.f32 %v3456, %v3874
          %v3951 = vsub.f32 %v3458, %v3874
          %v3952 = vsub.f32 %v3462, %v3879
          %v3953 = vsub.f32 %v3464, %v3879
          %v3954 = vsub.f32 %v3466, %v3884
          %v3955 = vsub.f32 %v3468, %v3884
          %v3956 = vsub.f32 %v3472, %v3889
          %v3957 = vsub.f32 %v3474, %v3889
          %v3958 = vsub.f32 %v3476, %v3894
          %v3959 = vsub.f32 %v3478, %v3894
          %v3960 = vmul.f32 %v3896, 1.442695
          %v3961 = vpow.pop %v3960
          %v3962 = vmul.f32 %v3897, 1.442695
          %v3963 = vpow.pop %v3962
          %v3964 = vmul.f32 %v3898, 1.442695
          %v3965 = vpow.pop %v3964
          %v3966 = vmul.f32 %v3899, 1.442695
          %v3967 = vpow.pop %v3966
          %v3968 = vmul.f32 %v3900, 1.442695
          %v3969 = vpow.pop %v3968
          %v3970 = vmul.f32 %v3901, 1.442695
          %v3971 = vpow.pop %v3970
          %v3972 = vmul.f32 %v3902, 1.442695
          %v3973 = vpow.pop %v3972
          %v3974 = vmul.f32 %v3903, 1.442695
          %v3975 = vpow.pop %v3974
          %v3976 = vmul.f32 %v3904, 1.442695
          %v3977 = vpow.pop %v3976
          %v3978 = vmul.f32 %v3905, 1.442695
          %v3979 = vpow.pop %v3978
          %v3980 = vmul.f32 %v3906, 1.442695
          %v3981 = vpow.pop %v3980
          %v3982 = vmul.f32 %v3907, 1.442695
          %v3983 = vpow.pop %v3982
          %v3984 = vmul.f32 %v3908, 1.442695
          %v3985 = vpow.pop %v3984
          %v3986 = vmul.f32 %v3909, 1.442695
          %v3987 = vpow.pop %v3986
          %v3988 = vmul.f32 %v3910, 1.442695
          %v3989 = vpow.pop %v3988
          %v3990 = vmul.f32 %v3911, 1.442695
          %v3991 = vpow.pop %v3990
          %v3992 = vmul.f32 %v3912, 1.442695
          %v3993 = vpow.pop %v3992
          %v3994 = vmul.f32 %v3913, 1.442695
          %v3995 = vpow.pop %v3994
          %v3996 = vmul.f32 %v3914, 1.442695
          %v3997 = vpow.pop %v3996
          %v3998 = vmul.f32 %v3915, 1.442695
          %v3999 = vpow.pop %v3998
          %v4000 = vmul.f32 %v3916, 1.442695
          %v4001 = vpow.pop %v4000
          %v4002 = vmul.f32 %v3917, 1.442695
          %v4003 = vpow.pop %v4002
          %v4004 = vmul.f32 %v3918, 1.442695
          %v4005 = vpow.pop %v4004
          %v4006 = vmul.f32 %v3919, 1.442695
          %v4007 = vpow.pop %v4006
          %v4008 = vmul.f32 %v3920, 1.442695
          %v4009 = vpow.pop %v4008
          %v4010 = vmul.f32 %v3921, 1.442695
          %v4011 = vpow.pop %v4010
          %v4012 = vmul.f32 %v3922, 1.442695
          %v4013 = vpow.pop %v4012
          %v4014 = vmul.f32 %v3923, 1.442695
          %v4015 = vpow.pop %v4014
          %v4016 = vmul.f32 %v3924, 1.442695
          %v4017 = vpow.pop %v4016
          %v4018 = vmul.f32 %v3925, 1.442695
          %v4019 = vpow.pop %v4018
          %v4020 = vmul.f32 %v3926, 1.442695
          %v4021 = vpow.pop %v4020
          %v4022 = vmul.f32 %v3927, 1.442695
          %v4023 = vpow.pop %v4022
          %v4024 = vmul.f32 %v3928, 1.442695
          %v4025 = vpow.pop %v4024
          %v4026 = vmul.f32 %v3929, 1.442695
          %v4027 = vpow.pop %v4026
          %v4028 = vmul.f32 %v3930, 1.442695
          %v4029 = vpow.pop %v4028
          %v4030 = vmul.f32 %v3931, 1.442695
          %v4031 = vpow.pop %v4030
          %v4032 = vmul.f32 %v3932, 1.442695
          %v4033 = vpow.pop %v4032
          %v4034 = vmul.f32 %v3933, 1.442695
          %v4035 = vpow.pop %v4034
          %v4036 = vmul.f32 %v3934, 1.442695
          %v4037 = vpow.pop %v4036
          %v4038 = vmul.f32 %v3935, 1.442695
          %v4039 = vpow.pop %v4038
          %v4040 = vmul.f32 %v3936, 1.442695
          %v4041 = vpow.pop %v4040
          %v4042 = vmul.f32 %v3937, 1.442695
          %v4043 = vpow.pop %v4042
          %v4044 = vmul.f32 %v3938, 1.442695
          %v4045 = vpow.pop %v4044
          %v4046 = vmul.f32 %v3939, 1.442695
          %v4047 = vpow.pop %v4046
          %v4048 = vmul.f32 %v3940, 1.442695
          %v4049 = vpow.pop %v4048
          %v4050 = vmul.f32 %v3941, 1.442695
          %v4051 = vpow.pop %v4050
          %v4052 = vmul.f32 %v3942, 1.442695
          %v4053 = vpow.pop %v4052
          %v4054 = vmul.f32 %v3943, 1.442695
          %v4055 = vpow.pop %v4054
          %v4056 = vmul.f32 %v3944, 1.442695
          %v4057 = vpow.pop %v4056
          %v4058 = vmul.f32 %v3945, 1.442695
          %v4059 = vpow.pop %v4058
          %v4060 = vmul.f32 %v3946, 1.442695
          %v4061 = vpow.pop %v4060
          %v4062 = vmul.f32 %v3947, 1.442695
          %v4063 = vpow.pop %v4062
          %v4064 = vmul.f32 %v3948, 1.442695
          %v4065 = vpow.pop %v4064
          %v4066 = vmul.f32 %v3949, 1.442695
          %v4067 = vpow.pop %v4066
          %v4068 = vmul.f32 %v3950, 1.442695
          %v4069 = vpow.pop %v4068
          %v4070 = vmul.f32 %v3951, 1.442695
          %v4071 = vpow.pop %v4070
          %v4072 = vmul.f32 %v3952, 1.442695
          %v4073 = vpow.pop %v4072
          %v4074 = vmul.f32 %v3953, 1.442695
          %v4075 = vpow.pop %v4074
          %v4076 = vmul.f32 %v3954, 1.442695
          %v4077 = vpow.pop %v4076
          %v4078 = vmul.f32 %v3955, 1.442695
          %v4079 = vpow.pop %v4078
          %v4080 = vmul.f32 %v3956, 1.442695
          %v4081 = vpow.pop %v4080
          %v4082 = vmul.f32 %v3957, 1.442695
          %v4083 = vpow.pop %v4082
          %v4084 = vmul.f32 %v3958, 1.442695
          %v4085 = vpow.pop %v4084
          %v4086 = vmul.f32 %v3959, 1.442695
          %v4087 = vpow.pop %v4086
          %v4088 = vld [vmem:[#allocation6] sm:$0xff]
          %v4089 = vld [vmem:[#allocation6 + $0x8] sm:$0xff]
          %v4090 = vld [vmem:[#allocation6 + $0x10] sm:$0xff]
          %v4091 = vld [vmem:[#allocation6 + $0x18] sm:$0xff]
          %v4092 = vld [vmem:[#allocation6 + $0x20] sm:$0xff]
          %v4093 = vld [vmem:[#allocation6 + $0x28] sm:$0xff]
          %v4094 = vld [vmem:[#allocation6 + $0x30] sm:$0xff]
          %v4095 = vld [vmem:[#allocation6 + $0x38] sm:$0xff]
          %v4096 = vld [vmem:[#allocation6 + $0x40] sm:$0xff]
          %v4097 = vld [vmem:[#allocation6 + $0x48] sm:$0xff]
          %v4098 = vld [vmem:[#allocation6 + $0x50] sm:$0xff]
          %v4099 = vld [vmem:[#allocation6 + $0x58] sm:$0xff]
          %v4100 = vld [vmem:[#allocation6 + $0x60] sm:$0xff]
          %v4101 = vld [vmem:[#allocation6 + $0x68] sm:$0xff]
          %v4102 = vld [vmem:[#allocation6 + $0x70] sm:$0xff]
          %v4103 = vld [vmem:[#allocation6 + $0x78] sm:$0xff]
          %v4104 = vld [vmem:[#allocation6 + $0x80] sm:$0xff]
          %v4105 = vld [vmem:[#allocation6 + $0x88] sm:$0xff]
          %v4106 = vld [vmem:[#allocation6 + $0x90] sm:$0xff]
          %v4107 = vld [vmem:[#allocation6 + $0x98] sm:$0xff]
          %v4108 = vld [vmem:[#allocation6 + $0xa0] sm:$0xff]
          %v4109 = vld [vmem:[#allocation6 + $0xa8] sm:$0xff]
          %v4110 = vld [vmem:[#allocation6 + $0xb0] sm:$0xff]
          %v4111 = vld [vmem:[#allocation6 + $0xb8] sm:$0xff]
          %v4112 = vld [vmem:[#allocation6 + $0xc0] sm:$0xff]
          %v4113 = vld [vmem:[#allocation6 + $0xc8] sm:$0xff]
          %v4114 = vld [vmem:[#allocation6 + $0xd0] sm:$0xff]
          %v4115 = vld [vmem:[#allocation6 + $0xd8] sm:$0xff]
          %v4116 = vld [vmem:[#allocation6 + $0xe0] sm:$0xff]
          %v4117 = vld [vmem:[#allocation6 + $0xe8] sm:$0xff]
          %v4118 = vld [vmem:[#allocation6 + $0xf0] sm:$0xff]
          %v4119 = vld [vmem:[#allocation6 + $0xf8] sm:$0xff]
          %v4120 = vmul.f32 %v3673, %v4088
          %v4121 = vmul.f32 %v3675, %v4089
          %v4122 = vmul.f32 %v3677, %v4090
          %v4123 = vmul.f32 %v3679, %v4091
          %v4124 = vmul.f32 %v3681, %v4092
          %v4125 = vmul.f32 %v3683, %v4093
          %v4126 = vmul.f32 %v3685, %v4094
          %v4127 = vmul.f32 %v3687, %v4095
          %v4128 = vmul.f32 %v3689, %v4096
          %v4129 = vmul.f32 %v3691, %v4097
          %v4130 = vmul.f32 %v3693, %v4098
          %v4131 = vmul.f32 %v3695, %v4099
          %v4132 = vmul.f32 %v3697, %v4100
          %v4133 = vmul.f32 %v3699, %v4101
          %v4134 = vmul.f32 %v3701, %v4102
          %v4135 = vmul.f32 %v3703, %v4103
          %v4136 = vmul.f32 %v3705, %v4104
          %v4137 = vmul.f32 %v3707, %v4105
          %v4138 = vmul.f32 %v3709, %v4106
          %v4139 = vmul.f32 %v3711, %v4107
          %v4140 = vmul.f32 %v3713, %v4108
          %v4141 = vmul.f32 %v3715, %v4109
          %v4142 = vmul.f32 %v3717, %v4110
          %v4143 = vmul.f32 %v3719, %v4111
          %v4144 = vmul.f32 %v3721, %v4112
          %v4145 = vmul.f32 %v3723, %v4113
          %v4146 = vmul.f32 %v3725, %v4114
          %v4147 = vmul.f32 %v3727, %v4115
          %v4148 = vmul.f32 %v3729, %v4116
          %v4149 = vmul.f32 %v3731, %v4117
          %v4150 = vmul.f32 %v3733, %v4118
          %v4151 = vmul.f32 %v3735, %v4119
          %v4152 = vadd.f32 %v3961, %v3963
          %4153 = vadd.xlane.f32.xlu0 %v4152
          %v4154 = vpop.xlane.xlu0 %4153
          %v4155 = vadd.f32 %v3965, %v3967
          %4156 = vadd.xlane.f32.xlu0 %v4155
          %v4157 = vpop.xlane.xlu0 %4156
          %v4158 = vadd.f32 %v3969, %v3971
          %4159 = vadd.xlane.f32.xlu0 %v4158
          %v4160 = vpop.xlane.xlu0 %4159
          %v4161 = vadd.f32 %v3973, %v3975
          %4162 = vadd.xlane.f32.xlu0 %v4161
          %v4163 = vpop.xlane.xlu0 %4162
          %v4164 = vadd.f32 %v3977, %v3979
          %4165 = vadd.xlane.f32.xlu0 %v4164
          %v4166 = vpop.xlane.xlu0 %4165
          %v4167 = vadd.f32 %v3981, %v3983
          %4168 = vadd.xlane.f32.xlu0 %v4167
          %v4169 = vpop.xlane.xlu0 %4168
          %v4170 = vadd.f32 %v3985, %v3987
          %4171 = vadd.xlane.f32.xlu0 %v4170
          %v4172 = vpop.xlane.xlu0 %4171
          %v4173 = vadd.f32 %v3989, %v3991
          %4174 = vadd.xlane.f32.xlu0 %v4173
          %v4175 = vpop.xlane.xlu0 %4174
          %v4176 = vadd.f32 %v3993, %v3995
          %4177 = vadd.xlane.f32.xlu0 %v4176
          %v4178 = vpop.xlane.xlu0 %4177
          %v4179 = vadd.f32 %v3997, %v3999
          %4180 = vadd.xlane.f32.xlu0 %v4179
          %v4181 = vpop.xlane.xlu0 %4180
          %v4182 = vadd.f32 %v4001, %v4003
          %4183 = vadd.xlane.f32.xlu0 %v4182
          %v4184 = vpop.xlane.xlu0 %4183
          %v4185 = vadd.f32 %v4005, %v4007
          %4186 = vadd.xlane.f32.xlu0 %v4185
          %v4187 = vpop.xlane.xlu0 %4186
          %v4188 = vadd.f32 %v4009, %v4011
          %4189 = vadd.xlane.f32.xlu0 %v4188
          %v4190 = vpop.xlane.xlu0 %4189
          %v4191 = vadd.f32 %v4013, %v4015
          %4192 = vadd.xlane.f32.xlu0 %v4191
          %v4193 = vpop.xlane.xlu0 %4192
          %v4194 = vadd.f32 %v4017, %v4019
          %4195 = vadd.xlane.f32.xlu0 %v4194
          %v4196 = vpop.xlane.xlu0 %4195
          %v4197 = vadd.f32 %v4021, %v4023
          %4198 = vadd.xlane.f32.xlu0 %v4197
          %v4199 = vpop.xlane.xlu0 %4198
          %v4200 = vadd.f32 %v4025, %v4027
          %4201 = vadd.xlane.f32.xlu0 %v4200
          %v4202 = vpop.xlane.xlu0 %4201
          %v4203 = vadd.f32 %v4029, %v4031
          %4204 = vadd.xlane.f32.xlu0 %v4203
          %v4205 = vpop.xlane.xlu0 %4204
          %v4206 = vadd.f32 %v4033, %v4035
          %4207 = vadd.xlane.f32.xlu0 %v4206
          %v4208 = vpop.xlane.xlu0 %4207
          %v4209 = vadd.f32 %v4037, %v4039
          %4210 = vadd.xlane.f32.xlu0 %v4209
          %v4211 = vpop.xlane.xlu0 %4210
          %v4212 = vadd.f32 %v4041, %v4043
          %4213 = vadd.xlane.f32.xlu0 %v4212
          %v4214 = vpop.xlane.xlu0 %4213
          %v4215 = vadd.f32 %v4045, %v4047
          %4216 = vadd.xlane.f32.xlu0 %v4215
          %v4217 = vpop.xlane.xlu0 %4216
          %v4218 = vadd.f32 %v4049, %v4051
          %4219 = vadd.xlane.f32.xlu0 %v4218
          %v4220 = vpop.xlane.xlu0 %4219
          %v4221 = vadd.f32 %v4053, %v4055
          %4222 = vadd.xlane.f32.xlu0 %v4221
          %v4223 = vpop.xlane.xlu0 %4222
          %v4224 = vadd.f32 %v4057, %v4059
          %4225 = vadd.xlane.f32.xlu0 %v4224
          %v4226 = vpop.xlane.xlu0 %4225
          %v4227 = vadd.f32 %v4061, %v4063
          %4228 = vadd.xlane.f32.xlu0 %v4227
          %v4229 = vpop.xlane.xlu0 %4228
          %v4230 = vadd.f32 %v4065, %v4067
          %4231 = vadd.xlane.f32.xlu0 %v4230
          %v4232 = vpop.xlane.xlu0 %4231
          %v4233 = vadd.f32 %v4069, %v4071
          %4234 = vadd.xlane.f32.xlu0 %v4233
          %v4235 = vpop.xlane.xlu0 %4234
          %v4236 = vadd.f32 %v4073, %v4075
          %4237 = vadd.xlane.f32.xlu0 %v4236
          %v4238 = vpop.xlane.xlu0 %4237
          %v4239 = vadd.f32 %v4077, %v4079
          %4240 = vadd.xlane.f32.xlu0 %v4239
          %v4241 = vpop.xlane.xlu0 %4240
          %v4242 = vadd.f32 %v4081, %v4083
          %4243 = vadd.xlane.f32.xlu0 %v4242
          %v4244 = vpop.xlane.xlu0 %4243
          %v4245 = vadd.f32 %v4085, %v4087
          %4246 = vadd.xlane.f32.xlu0 %v4245
          %v4247 = vpop.xlane.xlu0 %4246
          %v4248 = vadd.f32 %v4120, %v4154
          %v4249 = vadd.f32 %v4121, %v4157
          %v4250 = vadd.f32 %v4122, %v4160
          %v4251 = vadd.f32 %v4123, %v4163
          %v4252 = vadd.f32 %v4124, %v4166
          %v4253 = vadd.f32 %v4125, %v4169
          %v4254 = vadd.f32 %v4126, %v4172
          %v4255 = vadd.f32 %v4127, %v4175
          %v4256 = vadd.f32 %v4128, %v4178
          %v4257 = vadd.f32 %v4129, %v4181
          %v4258 = vadd.f32 %v4130, %v4184
          %v4259 = vadd.f32 %v4131, %v4187
          %v4260 = vadd.f32 %v4132, %v4190
          %v4261 = vadd.f32 %v4133, %v4193
          %v4262 = vadd.f32 %v4134, %v4196
          %v4263 = vadd.f32 %v4135, %v4199
          %v4264 = vadd.f32 %v4136, %v4202
          %v4265 = vadd.f32 %v4137, %v4205
          %v4266 = vadd.f32 %v4138, %v4208
          %v4267 = vadd.f32 %v4139, %v4211
          %v4268 = vadd.f32 %v4140, %v4214
          %v4269 = vadd.f32 %v4141, %v4217
          %v4270 = vadd.f32 %v4142, %v4220
          %v4271 = vadd.f32 %v4143, %v4223
          %v4272 = vadd.f32 %v4144, %v4226
          %v4273 = vadd.f32 %v4145, %v4229
          %v4274 = vadd.f32 %v4146, %v4232
          %v4275 = vadd.f32 %v4147, %v4235
          %v4276 = vadd.f32 %v4148, %v4238
          %v4277 = vadd.f32 %v4149, %v4241
          %v4278 = vadd.f32 %v4150, %v4244
          %v4279 = vadd.f32 %v4151, %v4247
          %vm4280 = vcmask 7168
          %4281 = vst.msk [vmem:[#allocation6] sm:$0xff] %vm4280, %v4248
          %4282 = vst.msk [vmem:[#allocation6 + $0x8] sm:$0xff] %vm4280, %v4249
          %4283 = vst.msk [vmem:[#allocation6 + $0x10] sm:$0xff] %vm4280, %v4250
          %4284 = vst.msk [vmem:[#allocation6 + $0x18] sm:$0xff] %vm4280, %v4251
          %4285 = vst.msk [vmem:[#allocation6 + $0x20] sm:$0xff] %vm4280, %v4252
          %4286 = vst.msk [vmem:[#allocation6 + $0x28] sm:$0xff] %vm4280, %v4253
          %4287 = vst.msk [vmem:[#allocation6 + $0x30] sm:$0xff] %vm4280, %v4254
          %4288 = vst.msk [vmem:[#allocation6 + $0x38] sm:$0xff] %vm4280, %v4255
          %4289 = vst.msk [vmem:[#allocation6 + $0x40] sm:$0xff] %vm4280, %v4256
          %4290 = vst.msk [vmem:[#allocation6 + $0x48] sm:$0xff] %vm4280, %v4257
          %4291 = vst.msk [vmem:[#allocation6 + $0x50] sm:$0xff] %vm4280, %v4258
          %4292 = vst.msk [vmem:[#allocation6 + $0x58] sm:$0xff] %vm4280, %v4259
          %4293 = vst.msk [vmem:[#allocation6 + $0x60] sm:$0xff] %vm4280, %v4260
          %4294 = vst.msk [vmem:[#allocation6 + $0x68] sm:$0xff] %vm4280, %v4261
          %4295 = vst.msk [vmem:[#allocation6 + $0x70] sm:$0xff] %vm4280, %v4262
          %4296 = vst.msk [vmem:[#allocation6 + $0x78] sm:$0xff] %vm4280, %v4263
          %4297 = vst.msk [vmem:[#allocation6 + $0x80] sm:$0xff] %vm4280, %v4264
          %4298 = vst.msk [vmem:[#allocation6 + $0x88] sm:$0xff] %vm4280, %v4265
          %4299 = vst.msk [vmem:[#allocation6 + $0x90] sm:$0xff] %vm4280, %v4266
          %4300 = vst.msk [vmem:[#allocation6 + $0x98] sm:$0xff] %vm4280, %v4267
          %4301 = vst.msk [vmem:[#allocation6 + $0xa0] sm:$0xff] %vm4280, %v4268
          %4302 = vst.msk [vmem:[#allocation6 + $0xa8] sm:$0xff] %vm4280, %v4269
          %4303 = vst.msk [vmem:[#allocation6 + $0xb0] sm:$0xff] %vm4280, %v4270
          %4304 = vst.msk [vmem:[#allocation6 + $0xb8] sm:$0xff] %vm4280, %v4271
          %4305 = vst.msk [vmem:[#allocation6 + $0xc0] sm:$0xff] %vm4280, %v4272
          %4306 = vst.msk [vmem:[#allocation6 + $0xc8] sm:$0xff] %vm4280, %v4273
          %4307 = vst.msk [vmem:[#allocation6 + $0xd0] sm:$0xff] %vm4280, %v4274
          %4308 = vst.msk [vmem:[#allocation6 + $0xd8] sm:$0xff] %vm4280, %v4275
          %4309 = vst.msk [vmem:[#allocation6 + $0xe0] sm:$0xff] %vm4280, %v4276
          %4310 = vst.msk [vmem:[#allocation6 + $0xe8] sm:$0xff] %vm4280, %v4277
          %4311 = vst.msk [vmem:[#allocation6 + $0xf0] sm:$0xff] %vm4280, %v4278
          %4312 = vst.msk [vmem:[#allocation6 + $0xf8] sm:$0xff] %vm4280, %v4279
          %v4313 = vld [vmem:[#allocation7] sm:$0xff]
          %v4314 = vld [vmem:[#allocation7 + $0x8] sm:$0xff]
          %v4315 = vld [vmem:[#allocation7 + $0x10] sm:$0xff]
          %v4316 = vld [vmem:[#allocation7 + $0x18] sm:$0xff]
          %v4317 = vld [vmem:[#allocation7 + $0x20] sm:$0xff]
          %v4318 = vld [vmem:[#allocation7 + $0x28] sm:$0xff]
          %v4319 = vld [vmem:[#allocation7 + $0x30] sm:$0xff]
          %v4320 = vld [vmem:[#allocation7 + $0x38] sm:$0xff]
          %v4321 = vld [vmem:[#allocation7 + $0x40] sm:$0xff]
          %v4322 = vld [vmem:[#allocation7 + $0x48] sm:$0xff]
          %v4323 = vld [vmem:[#allocation7 + $0x50] sm:$0xff]
          %v4324 = vld [vmem:[#allocation7 + $0x58] sm:$0xff]
          %v4325 = vld [vmem:[#allocation7 + $0x60] sm:$0xff]
          %v4326 = vld [vmem:[#allocation7 + $0x68] sm:$0xff]
          %v4327 = vld [vmem:[#allocation7 + $0x70] sm:$0xff]
          %v4328 = vld [vmem:[#allocation7 + $0x78] sm:$0xff]
          %v4329 = vld [vmem:[#allocation7 + $0x80] sm:$0xff]
          %v4330 = vld [vmem:[#allocation7 + $0x88] sm:$0xff]
          %v4331 = vld [vmem:[#allocation7 + $0x90] sm:$0xff]
          %v4332 = vld [vmem:[#allocation7 + $0x98] sm:$0xff]
          %v4333 = vld [vmem:[#allocation7 + $0xa0] sm:$0xff]
          %v4334 = vld [vmem:[#allocation7 + $0xa8] sm:$0xff]
          %v4335 = vld [vmem:[#allocation7 + $0xb0] sm:$0xff]
          %v4336 = vld [vmem:[#allocation7 + $0xb8] sm:$0xff]
          %v4337 = vld [vmem:[#allocation7 + $0xc0] sm:$0xff]
          %v4338 = vld [vmem:[#allocation7 + $0xc8] sm:$0xff]
          %v4339 = vld [vmem:[#allocation7 + $0xd0] sm:$0xff]
          %v4340 = vld [vmem:[#allocation7 + $0xd8] sm:$0xff]
          %v4341 = vld [vmem:[#allocation7 + $0xe0] sm:$0xff]
          %v4342 = vld [vmem:[#allocation7 + $0xe8] sm:$0xff]
          %v4343 = vld [vmem:[#allocation7 + $0xf0] sm:$0xff]
          %v4344 = vld [vmem:[#allocation7 + $0xf8] sm:$0xff]
          %4346 = vset.pattern.permute.xlu0 0
          %4347 = vperm.xlu0 %4346, %v3673
          %v4348 = vpop.permute.xlu0 %4347
          %4351 = vset.pattern.permute.xlu0 0
          %4352 = vperm.xlu0 %4351, %v3675
          %v4353 = vpop.permute.xlu0 %4352
          %4356 = vset.pattern.permute.xlu0 0
          %4357 = vperm.xlu0 %4356, %v3677
          %v4358 = vpop.permute.xlu0 %4357
          %4361 = vset.pattern.permute.xlu0 0
          %4362 = vperm.xlu0 %4361, %v3679
          %v4363 = vpop.permute.xlu0 %4362
          %4366 = vset.pattern.permute.xlu0 0
          %4367 = vperm.xlu0 %4366, %v3681
          %v4368 = vpop.permute.xlu0 %4367
          %4371 = vset.pattern.permute.xlu0 0
          %4372 = vperm.xlu0 %4371, %v3683
          %v4373 = vpop.permute.xlu0 %4372
          %4376 = vset.pattern.permute.xlu0 0
          %4377 = vperm.xlu0 %4376, %v3685
          %v4378 = vpop.permute.xlu0 %4377
          %4381 = vset.pattern.permute.xlu0 0
          %4382 = vperm.xlu0 %4381, %v3687
          %v4383 = vpop.permute.xlu0 %4382
          %4386 = vset.pattern.permute.xlu0 0
          %4387 = vperm.xlu0 %4386, %v3689
          %v4388 = vpop.permute.xlu0 %4387
          %4391 = vset.pattern.permute.xlu0 0
          %4392 = vperm.xlu0 %4391, %v3691
          %v4393 = vpop.permute.xlu0 %4392
          %4396 = vset.pattern.permute.xlu0 0
          %4397 = vperm.xlu0 %4396, %v3693
          %v4398 = vpop.permute.xlu0 %4397
          %4401 = vset.pattern.permute.xlu0 0
          %4402 = vperm.xlu0 %4401, %v3695
          %v4403 = vpop.permute.xlu0 %4402
          %4406 = vset.pattern.permute.xlu0 0
          %4407 = vperm.xlu0 %4406, %v3697
          %v4408 = vpop.permute.xlu0 %4407
          %4411 = vset.pattern.permute.xlu0 0
          %4412 = vperm.xlu0 %4411, %v3699
          %v4413 = vpop.permute.xlu0 %4412
          %4416 = vset.pattern.permute.xlu0 0
          %4417 = vperm.xlu0 %4416, %v3701
          %v4418 = vpop.permute.xlu0 %4417
          %4421 = vset.pattern.permute.xlu0 0
          %4422 = vperm.xlu0 %4421, %v3703
          %v4423 = vpop.permute.xlu0 %4422
          %4426 = vset.pattern.permute.xlu0 0
          %4427 = vperm.xlu0 %4426, %v3705
          %v4428 = vpop.permute.xlu0 %4427
          %4431 = vset.pattern.permute.xlu0 0
          %4432 = vperm.xlu0 %4431, %v3707
          %v4433 = vpop.permute.xlu0 %4432
          %4436 = vset.pattern.permute.xlu0 0
          %4437 = vperm.xlu0 %4436, %v3709
          %v4438 = vpop.permute.xlu0 %4437
          %4441 = vset.pattern.permute.xlu0 0
          %4442 = vperm.xlu0 %4441, %v3711
          %v4443 = vpop.permute.xlu0 %4442
          %4446 = vset.pattern.permute.xlu0 0
          %4447 = vperm.xlu0 %4446, %v3713
          %v4448 = vpop.permute.xlu0 %4447
          %4451 = vset.pattern.permute.xlu0 0
          %4452 = vperm.xlu0 %4451, %v3715
          %v4453 = vpop.permute.xlu0 %4452
          %4456 = vset.pattern.permute.xlu0 0
          %4457 = vperm.xlu0 %4456, %v3717
          %v4458 = vpop.permute.xlu0 %4457
          %4461 = vset.pattern.permute.xlu0 0
          %4462 = vperm.xlu0 %4461, %v3719
          %v4463 = vpop.permute.xlu0 %4462
          %4466 = vset.pattern.permute.xlu0 0
          %4467 = vperm.xlu0 %4466, %v3721
          %v4468 = vpop.permute.xlu0 %4467
          %4471 = vset.pattern.permute.xlu0 0
          %4472 = vperm.xlu0 %4471, %v3723
          %v4473 = vpop.permute.xlu0 %4472
          %4476 = vset.pattern.permute.xlu0 0
          %4477 = vperm.xlu0 %4476, %v3725
          %v4478 = vpop.permute.xlu0 %4477
          %4481 = vset.pattern.permute.xlu0 0
          %4482 = vperm.xlu0 %4481, %v3727
          %v4483 = vpop.permute.xlu0 %4482
          %4486 = vset.pattern.permute.xlu0 0
          %4487 = vperm.xlu0 %4486, %v3729
          %v4488 = vpop.permute.xlu0 %4487
          %4491 = vset.pattern.permute.xlu0 0
          %4492 = vperm.xlu0 %4491, %v3731
          %v4493 = vpop.permute.xlu0 %4492
          %4496 = vset.pattern.permute.xlu0 0
          %4497 = vperm.xlu0 %4496, %v3733
          %v4498 = vpop.permute.xlu0 %4497
          %4501 = vset.pattern.permute.xlu0 0
          %4502 = vperm.xlu0 %4501, %v3735
          %v4503 = vpop.permute.xlu0 %4502
          %v4505 = vmul.f32 %v4348, %v4313
          %v4506 = vmul.f32 %v4353, %v4314
          %v4507 = vmul.f32 %v4358, %v4315
          %v4508 = vmul.f32 %v4363, %v4316
          %v4509 = vmul.f32 %v4368, %v4317
          %v4510 = vmul.f32 %v4373, %v4318
          %v4511 = vmul.f32 %v4378, %v4319
          %v4512 = vmul.f32 %v4383, %v4320
          %v4513 = vmul.f32 %v4388, %v4321
          %v4514 = vmul.f32 %v4393, %v4322
          %v4515 = vmul.f32 %v4398, %v4323
          %v4516 = vmul.f32 %v4403, %v4324
          %v4517 = vmul.f32 %v4408, %v4325
          %v4518 = vmul.f32 %v4413, %v4326
          %v4519 = vmul.f32 %v4418, %v4327
          %v4520 = vmul.f32 %v4423, %v4328
          %v4521 = vmul.f32 %v4428, %v4329
          %v4522 = vmul.f32 %v4433, %v4330
          %v4523 = vmul.f32 %v4438, %v4331
          %v4524 = vmul.f32 %v4443, %v4332
          %v4525 = vmul.f32 %v4448, %v4333
          %v4526 = vmul.f32 %v4453, %v4334
          %v4527 = vmul.f32 %v4458, %v4335
          %v4528 = vmul.f32 %v4463, %v4336
          %v4529 = vmul.f32 %v4468, %v4337
          %v4530 = vmul.f32 %v4473, %v4338
          %v4531 = vmul.f32 %v4478, %v4339
          %v4532 = vmul.f32 %v4483, %v4340
          %v4533 = vmul.f32 %v4488, %v4341
          %v4534 = vmul.f32 %v4493, %v4342
          %v4535 = vmul.f32 %v4498, %v4343
          %v4536 = vmul.f32 %v4503, %v4344
          %v4537 = vpack.c.bf16 %v3965, %v3961
          %v4538 = vpack.c.bf16 %v3967, %v3963
          %v4539 = vpack.c.bf16 %v3973, %v3969
          %v4540 = vpack.c.bf16 %v3975, %v3971
          %v4541 = vpack.c.bf16 %v3981, %v3977
          %v4542 = vpack.c.bf16 %v3983, %v3979
          %v4543 = vpack.c.bf16 %v3989, %v3985
          %v4544 = vpack.c.bf16 %v3991, %v3987
          %v4545 = vpack.c.bf16 %v3997, %v3993
          %v4546 = vpack.c.bf16 %v3999, %v3995
          %v4547 = vpack.c.bf16 %v4005, %v4001
          %v4548 = vpack.c.bf16 %v4007, %v4003
          %v4549 = vpack.c.bf16 %v4013, %v4009
          %v4550 = vpack.c.bf16 %v4015, %v4011
          %v4551 = vpack.c.bf16 %v4021, %v4017
          %v4552 = vpack.c.bf16 %v4023, %v4019
          %v4553 = vpack.c.bf16 %v4029, %v4025
          %v4554 = vpack.c.bf16 %v4031, %v4027
          %v4555 = vpack.c.bf16 %v4037, %v4033
          %v4556 = vpack.c.bf16 %v4039, %v4035
          %v4557 = vpack.c.bf16 %v4045, %v4041
          %v4558 = vpack.c.bf16 %v4047, %v4043
          %v4559 = vpack.c.bf16 %v4053, %v4049
          %v4560 = vpack.c.bf16 %v4055, %v4051
          %v4561 = vpack.c.bf16 %v4061, %v4057
          %v4562 = vpack.c.bf16 %v4063, %v4059
          %v4563 = vpack.c.bf16 %v4069, %v4065
          %v4564 = vpack.c.bf16 %v4071, %v4067
          %v4565 = vpack.c.bf16 %v4077, %v4073
          %v4566 = vpack.c.bf16 %v4079, %v4075
          %v4567 = vpack.c.bf16 %v4085, %v4081
          %v4568 = vpack.c.bf16 %v4087, %v4083
          %4569 = vmatprep.subr.bf16.mxu0 0
          %4570 = vmatpush1.bf16.msra.mxu0 %v3158
          %4571 = vmatprep.subr.bf16.mxu0 0
          %4572 = vmatpush1.bf16.msra.mxu0 %v3159
          %4573 = vmatprep.subr.bf16.mxu0 0
          %4574 = vmatpush1.bf16.msra.mxu0 %v3160
          %4575 = vmatprep.subr.bf16.mxu0 0
          %4576 = vmatpush1.bf16.msra.mxu0 %v3161
          %4577 = vmatprep.subr.bf16.mxu0 0
          %4578 = vmatpush1.bf16.msra.mxu0 %v3162
          %4579 = vmatprep.subr.bf16.mxu0 0
          %4580 = vmatpush1.bf16.msra.mxu0 %v3163
          %4581 = vmatprep.subr.bf16.mxu0 0
          %4582 = vmatpush1.bf16.msra.mxu0 %v3164
          %4583 = vmatprep.subr.bf16.mxu0 0
          %4584 = vmatpush1.bf16.msra.mxu0 %v3165
          %4585 = vmatprep.subr.bf16.mxu0 0
          %4586 = vmatpush1.bf16.msra.mxu0 %v3166
          %4587 = vmatprep.subr.bf16.mxu0 0
          %4588 = vmatpush1.bf16.msra.mxu0 %v3167
          %4589 = vmatprep.subr.bf16.mxu0 0
          %4590 = vmatpush1.bf16.msra.mxu0 %v3168
          %4591 = vmatprep.subr.bf16.mxu0 0
          %4592 = vmatpush1.bf16.msra.mxu0 %v3169
          %4593 = vmatprep.subr.bf16.mxu0 0
          %4594 = vmatpush1.bf16.msra.mxu0 %v3170
          %4595 = vmatprep.subr.bf16.mxu0 0
          %4596 = vmatpush1.bf16.msra.mxu0 %v3171
          %4597 = vmatprep.subr.bf16.mxu0 0
          %4598 = vmatpush1.bf16.msra.mxu0 %v3172
          %4599 = vmatprep.subr.bf16.mxu0 0
          %4600 = vmatpush1.bf16.msra.mxu0 %v3173
          %4601 = vmatprep.mubr.bf16.mxu0 %v4538
          %4602 = vmatmul.mubr.bf16.gmra.mrb[0].mxu0 %v4537
          %v4603 = vpop.f32.mrb[0].mxu0
          %v4604 = vadd.f32 0.0, %v4603
          %v4605 = vpop.f32.mrb[0].mxu0
          %v4606 = vpop.f32.mrb[0].mxu0
          %v4607 = vadd.f32 0.0, %v4606
          %v4608 = vpop.f32.mrb[0].mxu0
          %4609 = vmatprep.mubr.bf16.mxu0 %v4540
          %4610 = vmatmul.mubr.bf16.gmra.mrb[0].mxu0 %v4539
          %v4611 = vpop.f32.mrb[0].mxu0
          %v4612 = vadd.f32 0.0, %v4611
          %v4613 = vpop.f32.mrb[0].mxu0
          %v4614 = vpop.f32.mrb[0].mxu0
          %v4615 = vadd.f32 0.0, %v4614
          %v4616 = vpop.f32.mrb[0].mxu0
          %4617 = vmatprep.mubr.bf16.mxu0 %v4542
          %4618 = vmatmul.mubr.bf16.gmra.mrb[0].mxu0 %v4541
          %v4619 = vpop.f32.mrb[0].mxu0
          %v4620 = vadd.f32 0.0, %v4619
          %v4621 = vpop.f32.mrb[0].mxu0
          %v4622 = vpop.f32.mrb[0].mxu0
          %v4623 = vadd.f32 0.0, %v4622
          %v4624 = vpop.f32.mrb[0].mxu0
          %4625 = vmatprep.mubr.bf16.mxu0 %v4544
          %4626 = vmatmul.mubr.bf16.gmra.mrb[0].mxu0 %v4543
          %v4627 = vpop.f32.mrb[0].mxu0
          %v4628 = vadd.f32 0.0, %v4627
          %v4629 = vpop.f32.mrb[0].mxu0
          %v4630 = vpop.f32.mrb[0].mxu0
          %v4631 = vadd.f32 0.0, %v4630
          %v4632 = vpop.f32.mrb[0].mxu0
          %4633 = vmatprep.mubr.bf16.mxu0 %v4546
          %4634 = vmatmul.mubr.bf16.gmra.mrb[0].mxu0 %v4545
          %v4635 = vpop.f32.mrb[0].mxu0
          %v4636 = vadd.f32 0.0, %v4635
          %v4637 = vpop.f32.mrb[0].mxu0
          %v4638 = vpop.f32.mrb[0].mxu0
          %v4639 = vadd.f32 0.0, %v4638
          %v4640 = vpop.f32.mrb[0].mxu0
          %4641 = vmatprep.mubr.bf16.mxu0 %v4548
          %4642 = vmatmul.mubr.bf16.gmra.mrb[0].mxu0 %v4547
          %v4643 = vpop.f32.mrb[0].mxu0
          %v4644 = vadd.f32 0.0, %v4643
          %v4645 = vpop.f32.mrb[0].mxu0
          %v4646 = vpop.f32.mrb[0].mxu0
          %v4647 = vadd.f32 0.0, %v4646
          %v4648 = vpop.f32.mrb[0].mxu0
          %4649 = vmatprep.mubr.bf16.mxu0 %v4550
          %4650 = vmatmul.mubr.bf16.gmra.mrb[0].mxu0 %v4549
          %v4651 = vpop.f32.mrb[0].mxu0
          %v4652 = vadd.f32 0.0, %v4651
          %v4653 = vpop.f32.mrb[0].mxu0
          %v4654 = vpop.f32.mrb[0].mxu0
          %v4655 = vadd.f32 0.0, %v4654
          %v4656 = vpop.f32.mrb[0].mxu0
          %4657 = vmatprep.mubr.bf16.mxu0 %v4552
          %4658 = vmatmul.mubr.bf16.gmra.mrb[0].mxu0 %v4551
          %v4659 = vpop.f32.mrb[0].mxu0
          %v4660 = vadd.f32 0.0, %v4659
          %v4661 = vpop.f32.mrb[0].mxu0
          %v4662 = vpop.f32.mrb[0].mxu0
          %v4663 = vadd.f32 0.0, %v4662
          %v4664 = vpop.f32.mrb[0].mxu0
          %4665 = vmatprep.mubr.bf16.mxu0 %v4554
          %4666 = vmatmul.mubr.bf16.gmra.mrb[0].mxu0 %v4553
          %v4667 = vpop.f32.mrb[0].mxu0
          %v4668 = vadd.f32 0.0, %v4667
          %v4669 = vpop.f32.mrb[0].mxu0
          %v4670 = vpop.f32.mrb[0].mxu0
          %v4671 = vadd.f32 0.0, %v4670
          %v4672 = vpop.f32.mrb[0].mxu0
          %4673 = vmatprep.mubr.bf16.mxu0 %v4556
          %4674 = vmatmul.mubr.bf16.gmra.mrb[0].mxu0 %v4555
          %v4675 = vpop.f32.mrb[0].mxu0
          %v4676 = vadd.f32 0.0, %v4675
          %v4677 = vpop.f32.mrb[0].mxu0
          %v4678 = vpop.f32.mrb[0].mxu0
          %v4679 = vadd.f32 0.0, %v4678
          %v4680 = vpop.f32.mrb[0].mxu0
          %4681 = vmatprep.mubr.bf16.mxu0 %v4558
          %4682 = vmatmul.mubr.bf16.gmra.mrb[0].mxu0 %v4557
          %v4683 = vpop.f32.mrb[0].mxu0
          %v4684 = vadd.f32 0.0, %v4683
          %v4685 = vpop.f32.mrb[0].mxu0
          %v4686 = vpop.f32.mrb[0].mxu0
          %v4687 = vadd.f32 0.0, %v4686
          %v4688 = vpop.f32.mrb[0].mxu0
          %4689 = vmatprep.mubr.bf16.mxu0 %v4560
          %4690 = vmatmul.mubr.bf16.gmra.mrb[0].mxu0 %v4559
          %v4691 = vpop.f32.mrb[0].mxu0
          %v4692 = vadd.f32 0.0, %v4691
          %v4693 = vpop.f32.mrb[0].mxu0
          %v4694 = vpop.f32.mrb[0].mxu0
          %v4695 = vadd.f32 0.0, %v4694
          %v4696 = vpop.f32.mrb[0].mxu0
          %4697 = vmatprep.mubr.bf16.mxu0 %v4562
          %4698 = vmatmul.mubr.bf16.gmra.mrb[0].mxu0 %v4561
          %v4699 = vpop.f32.mrb[0].mxu0
          %v4700 = vadd.f32 0.0, %v4699
          %v4701 = vpop.f32.mrb[0].mxu0
          %v4702 = vpop.f32.mrb[0].mxu0
          %v4703 = vadd.f32 0.0, %v4702
          %v4704 = vpop.f32.mrb[0].mxu0
          %4705 = vmatprep.mubr.bf16.mxu0 %v4564
          %4706 = vmatmul.mubr.bf16.gmra.mrb[0].mxu0 %v4563
          %v4707 = vpop.f32.mrb[0].mxu0
          %v4708 = vadd.f32 0.0, %v4707
          %v4709 = vpop.f32.mrb[0].mxu0
          %v4710 = vpop.f32.mrb[0].mxu0
          %v4711 = vadd.f32 0.0, %v4710
          %v4712 = vpop.f32.mrb[0].mxu0
          %4713 = vmatprep.mubr.bf16.mxu0 %v4566
          %4714 = vmatmul.mubr.bf16.gmra.mrb[0].mxu0 %v4565
          %v4715 = vpop.f32.mrb[0].mxu0
          %v4716 = vadd.f32 0.0, %v4715
          %v4717 = vpop.f32.mrb[0].mxu0
          %v4718 = vpop.f32.mrb[0].mxu0
          %v4719 = vadd.f32 0.0, %v4718
          %v4720 = vpop.f32.mrb[0].mxu0
          %4721 = vmatprep.mubr.bf16.mxu0 %v4568
          %4722 = vmatmul.mubr.bf16.gmra.mrb[0].mxu0 %v4567
          %v4723 = vpop.f32.mrb[0].mxu0
          %v4724 = vadd.f32 0.0, %v4723
          %v4725 = vpop.f32.mrb[0].mxu0
          %v4726 = vpop.f32.mrb[0].mxu0
          %v4727 = vadd.f32 0.0, %v4726
          %v4728 = vpop.f32.mrb[0].mxu0
          %4729 = vdwg.mxu0
          %v4730 = vadd.f32 %v4505, %v4604
          %v4731 = vadd.f32 %v4506, %v4607
          %v4732 = vadd.f32 %v4507, %v4612
          %v4733 = vadd.f32 %v4508, %v4615
          %v4734 = vadd.f32 %v4509, %v4620
          %v4735 = vadd.f32 %v4510, %v4623
          %v4736 = vadd.f32 %v4511, %v4628
          %v4737 = vadd.f32 %v4512, %v4631
          %v4738 = vadd.f32 %v4513, %v4636
          %v4739 = vadd.f32 %v4514, %v4639
          %v4740 = vadd.f32 %v4515, %v4644
          %v4741 = vadd.f32 %v4516, %v4647
          %v4742 = vadd.f32 %v4517, %v4652
          %v4743 = vadd.f32 %v4518, %v4655
          %v4744 = vadd.f32 %v4519, %v4660
          %v4745 = vadd.f32 %v4520, %v4663
          %v4746 = vadd.f32 %v4521, %v4668
          %v4747 = vadd.f32 %v4522, %v4671
          %v4748 = vadd.f32 %v4523, %v4676
          %v4749 = vadd.f32 %v4524, %v4679
          %v4750 = vadd.f32 %v4525, %v4684
          %v4751 = vadd.f32 %v4526, %v4687
          %v4752 = vadd.f32 %v4527, %v4692
          %v4753 = vadd.f32 %v4528, %v4695
          %v4754 = vadd.f32 %v4529, %v4700
          %v4755 = vadd.f32 %v4530, %v4703
          %v4756 = vadd.f32 %v4531, %v4708
          %v4757 = vadd.f32 %v4532, %v4711
          %v4758 = vadd.f32 %v4533, %v4716
          %v4759 = vadd.f32 %v4534, %v4719
          %v4760 = vadd.f32 %v4535, %v4724
          %v4761 = vadd.f32 %v4536, %v4727
          %4762 = vst.msk [vmem:[#allocation7] sm:$0xff] %vm3190, %v4730
          %4763 = vst.msk [vmem:[#allocation7 + $0x8] sm:$0xff] %vm3190, %v4731
          %4764 = vst.msk [vmem:[#allocation7 + $0x10] sm:$0xff] %vm3190, %v4732
          %4765 = vst.msk [vmem:[#allocation7 + $0x18] sm:$0xff] %vm3190, %v4733
          %4766 = vst.msk [vmem:[#allocation7 + $0x20] sm:$0xff] %vm3190, %v4734
          %4767 = vst.msk [vmem:[#allocation7 + $0x28] sm:$0xff] %vm3190, %v4735
          %4768 = vst.msk [vmem:[#allocation7 + $0x30] sm:$0xff] %vm3190, %v4736
          %4769 = vst.msk [vmem:[#allocation7 + $0x38] sm:$0xff] %vm3190, %v4737
          %4770 = vst.msk [vmem:[#allocation7 + $0x40] sm:$0xff] %vm3190, %v4738
          %4771 = vst.msk [vmem:[#allocation7 + $0x48] sm:$0xff] %vm3190, %v4739
          %4772 = vst.msk [vmem:[#allocation7 + $0x50] sm:$0xff] %vm3190, %v4740
          %4773 = vst.msk [vmem:[#allocation7 + $0x58] sm:$0xff] %vm3190, %v4741
          %4774 = vst.msk [vmem:[#allocation7 + $0x60] sm:$0xff] %vm3190, %v4742
          %4775 = vst.msk [vmem:[#allocation7 + $0x68] sm:$0xff] %vm3190, %v4743
          %4776 = vst.msk [vmem:[#allocation7 + $0x70] sm:$0xff] %vm3190, %v4744
          %4777 = vst.msk [vmem:[#allocation7 + $0x78] sm:$0xff] %vm3190, %v4745
          %4778 = vst.msk [vmem:[#allocation7 + $0x80] sm:$0xff] %vm3190, %v4746
          %4779 = vst.msk [vmem:[#allocation7 + $0x88] sm:$0xff] %vm3190, %v4747
          %4780 = vst.msk [vmem:[#allocation7 + $0x90] sm:$0xff] %vm3190, %v4748
          %4781 = vst.msk [vmem:[#allocation7 + $0x98] sm:$0xff] %vm3190, %v4749
          %4782 = vst.msk [vmem:[#allocation7 + $0xa0] sm:$0xff] %vm3190, %v4750
          %4783 = vst.msk [vmem:[#allocation7 + $0xa8] sm:$0xff] %vm3190, %v4751
          %4784 = vst.msk [vmem:[#allocation7 + $0xb0] sm:$0xff] %vm3190, %v4752
          %4785 = vst.msk [vmem:[#allocation7 + $0xb8] sm:$0xff] %vm3190, %v4753
          %4786 = vst.msk [vmem:[#allocation7 + $0xc0] sm:$0xff] %vm3190, %v4754
          %4787 = vst.msk [vmem:[#allocation7 + $0xc8] sm:$0xff] %vm3190, %v4755
          %4788 = vst.msk [vmem:[#allocation7 + $0xd0] sm:$0xff] %vm3190, %v4756
          %4789 = vst.msk [vmem:[#allocation7 + $0xd8] sm:$0xff] %vm3190, %v4757
          %4790 = vst.msk [vmem:[#allocation7 + $0xe0] sm:$0xff] %vm3190, %v4758
          %4791 = vst.msk [vmem:[#allocation7 + $0xe8] sm:$0xff] %vm3190, %v4759
          %4792 = vst.msk [vmem:[#allocation7 + $0xf0] sm:$0xff] %vm3190, %v4760
          %4793 = vst.msk [vmem:[#allocation7 + $0xf8] sm:$0xff] %vm3190, %v4761
          %4794 = vst.msk [vmem:[#allocation5] sm:$0xff] %vm4280, %v3608
          %4795 = vst.msk [vmem:[#allocation5 + $0x8] sm:$0xff] %vm4280, %v3609
          %4796 = vst.msk [vmem:[#allocation5 + $0x10] sm:$0xff] %vm4280, %v3610
          %4797 = vst.msk [vmem:[#allocation5 + $0x18] sm:$0xff] %vm4280, %v3611
          %4798 = vst.msk [vmem:[#allocation5 + $0x20] sm:$0xff] %vm4280, %v3612
          %4799 = vst.msk [vmem:[#allocation5 + $0x28] sm:$0xff] %vm4280, %v3613
          %4800 = vst.msk [vmem:[#allocation5 + $0x30] sm:$0xff] %vm4280, %v3614
          %4801 = vst.msk [vmem:[#allocation5 + $0x38] sm:$0xff] %vm4280, %v3615
          %4802 = vst.msk [vmem:[#allocation5 + $0x40] sm:$0xff] %vm4280, %v3616
          %4803 = vst.msk [vmem:[#allocation5 + $0x48] sm:$0xff] %vm4280, %v3617
          %4804 = vst.msk [vmem:[#allocation5 + $0x50] sm:$0xff] %vm4280, %v3618
          %4805 = vst.msk [vmem:[#allocation5 + $0x58] sm:$0xff] %vm4280, %v3619
          %4806 = vst.msk [vmem:[#allocation5 + $0x60] sm:$0xff] %vm4280, %v3620
          %4807 = vst.msk [vmem:[#allocation5 + $0x68] sm:$0xff] %vm4280, %v3621
          %4808 = vst.msk [vmem:[#allocation5 + $0x70] sm:$0xff] %vm4280, %v3622
          %4809 = vst.msk [vmem:[#allocation5 + $0x78] sm:$0xff] %vm4280, %v3623
          %4810 = vst.msk [vmem:[#allocation5 + $0x80] sm:$0xff] %vm4280, %v3624
          %4811 = vst.msk [vmem:[#allocation5 + $0x88] sm:$0xff] %vm4280, %v3625
          %4812 = vst.msk [vmem:[#allocation5 + $0x90] sm:$0xff] %vm4280, %v3626
          %4813 = vst.msk [vmem:[#allocation5 + $0x98] sm:$0xff] %vm4280, %v3627
          %4814 = vst.msk [vmem:[#allocation5 + $0xa0] sm:$0xff] %vm4280, %v3628
          %4815 = vst.msk [vmem:[#allocation5 + $0xa8] sm:$0xff] %vm4280, %v3629
          %4816 = vst.msk [vmem:[#allocation5 + $0xb0] sm:$0xff] %vm4280, %v3630
          %4817 = vst.msk [vmem:[#allocation5 + $0xb8] sm:$0xff] %vm4280, %v3631
          %4818 = vst.msk [vmem:[#allocation5 + $0xc0] sm:$0xff] %vm4280, %v3632
          %4819 = vst.msk [vmem:[#allocation5 + $0xc8] sm:$0xff] %vm4280, %v3633
          %4820 = vst.msk [vmem:[#allocation5 + $0xd0] sm:$0xff] %vm4280, %v3634
          %4821 = vst.msk [vmem:[#allocation5 + $0xd8] sm:$0xff] %vm4280, %v3635
          %4822 = vst.msk [vmem:[#allocation5 + $0xe0] sm:$0xff] %vm4280, %v3636
          %4823 = vst.msk [vmem:[#allocation5 + $0xe8] sm:$0xff] %vm4280, %v3637
          %4824 = vst.msk [vmem:[#allocation5 + $0xf0] sm:$0xff] %vm4280, %v3638
          %4825 = vst.msk [vmem:[#allocation5 + $0xf8] sm:$0xff] %vm4280, %v3639
        $region44: #{tpu_custom_call.1} parent=27 // pred_fallthru
          _
        // Predicated region
        $region45: #{tpu_custom_call.1} parent=27 // pred_check
          %p4826 = pneg %p201
        $region46: #{tpu_custom_call.1} parent=27 // pred_check_branch
          %4828 = sbr.rel (%p4826) target = $region48
        $region47: #{tpu_custom_call.1} parent=27 // pred_region
          %v4829 = vld [vmem:[#allocation6] sm:$0xff]
          %v4830 = vld [vmem:[#allocation6 + $0x8] sm:$0xff]
          %v4831 = vld [vmem:[#allocation6 + $0x10] sm:$0xff]
          %v4832 = vld [vmem:[#allocation6 + $0x18] sm:$0xff]
          %v4833 = vld [vmem:[#allocation6 + $0x20] sm:$0xff]
          %v4834 = vld [vmem:[#allocation6 + $0x28] sm:$0xff]
          %v4835 = vld [vmem:[#allocation6 + $0x30] sm:$0xff]
          %v4836 = vld [vmem:[#allocation6 + $0x38] sm:$0xff]
          %v4837 = vld [vmem:[#allocation6 + $0x40] sm:$0xff]
          %v4838 = vld [vmem:[#allocation6 + $0x48] sm:$0xff]
          %v4839 = vld [vmem:[#allocation6 + $0x50] sm:$0xff]
          %v4840 = vld [vmem:[#allocation6 + $0x58] sm:$0xff]
          %v4841 = vld [vmem:[#allocation6 + $0x60] sm:$0xff]
          %v4842 = vld [vmem:[#allocation6 + $0x68] sm:$0xff]
          %v4843 = vld [vmem:[#allocation6 + $0x70] sm:$0xff]
          %v4844 = vld [vmem:[#allocation6 + $0x78] sm:$0xff]
          %v4845 = vld [vmem:[#allocation6 + $0x80] sm:$0xff]
          %v4846 = vld [vmem:[#allocation6 + $0x88] sm:$0xff]
          %v4847 = vld [vmem:[#allocation6 + $0x90] sm:$0xff]
          %v4848 = vld [vmem:[#allocation6 + $0x98] sm:$0xff]
          %v4849 = vld [vmem:[#allocation6 + $0xa0] sm:$0xff]
          %v4850 = vld [vmem:[#allocation6 + $0xa8] sm:$0xff]
          %v4851 = vld [vmem:[#allocation6 + $0xb0] sm:$0xff]
          %v4852 = vld [vmem:[#allocation6 + $0xb8] sm:$0xff]
          %v4853 = vld [vmem:[#allocation6 + $0xc0] sm:$0xff]
          %v4854 = vld [vmem:[#allocation6 + $0xc8] sm:$0xff]
          %v4855 = vld [vmem:[#allocation6 + $0xd0] sm:$0xff]
          %v4856 = vld [vmem:[#allocation6 + $0xd8] sm:$0xff]
          %v4857 = vld [vmem:[#allocation6 + $0xe0] sm:$0xff]
          %v4858 = vld [vmem:[#allocation6 + $0xe8] sm:$0xff]
          %v4859 = vld [vmem:[#allocation6 + $0xf0] sm:$0xff]
          %v4860 = vld [vmem:[#allocation6 + $0xf8] sm:$0xff]
          %v4861 = vrcp.pop %v4829
          %v4862 = vrcp.pop %v4830
          %v4863 = vrcp.pop %v4831
          %v4864 = vrcp.pop %v4832
          %v4865 = vrcp.pop %v4833
          %v4866 = vrcp.pop %v4834
          %v4867 = vrcp.pop %v4835
          %v4868 = vrcp.pop %v4836
          %v4869 = vrcp.pop %v4837
          %v4870 = vrcp.pop %v4838
          %v4871 = vrcp.pop %v4839
          %v4872 = vrcp.pop %v4840
          %v4873 = vrcp.pop %v4841
          %v4874 = vrcp.pop %v4842
          %v4875 = vrcp.pop %v4843
          %v4876 = vrcp.pop %v4844
          %v4877 = vrcp.pop %v4845
          %v4878 = vrcp.pop %v4846
          %v4879 = vrcp.pop %v4847
          %v4880 = vrcp.pop %v4848
          %v4881 = vrcp.pop %v4849
          %v4882 = vrcp.pop %v4850
          %v4883 = vrcp.pop %v4851
          %v4884 = vrcp.pop %v4852
          %v4885 = vrcp.pop %v4853
          %v4886 = vrcp.pop %v4854
          %v4887 = vrcp.pop %v4855
          %v4888 = vrcp.pop %v4856
          %v4889 = vrcp.pop %v4857
          %v4890 = vrcp.pop %v4858
          %v4891 = vrcp.pop %v4859
          %v4892 = vrcp.pop %v4860
          %v4893 = vld [vmem:[#allocation7] sm:$0xff]
          %v4894 = vld [vmem:[#allocation7 + $0x8] sm:$0xff]
          %v4895 = vld [vmem:[#allocation7 + $0x10] sm:$0xff]
          %v4896 = vld [vmem:[#allocation7 + $0x18] sm:$0xff]
          %v4897 = vld [vmem:[#allocation7 + $0x20] sm:$0xff]
          %v4898 = vld [vmem:[#allocation7 + $0x28] sm:$0xff]
          %v4899 = vld [vmem:[#allocation7 + $0x30] sm:$0xff]
          %v4900 = vld [vmem:[#allocation7 + $0x38] sm:$0xff]
          %v4901 = vld [vmem:[#allocation7 + $0x40] sm:$0xff]
          %v4902 = vld [vmem:[#allocation7 + $0x48] sm:$0xff]
          %v4903 = vld [vmem:[#allocation7 + $0x50] sm:$0xff]
          %v4904 = vld [vmem:[#allocation7 + $0x58] sm:$0xff]
          %v4905 = vld [vmem:[#allocation7 + $0x60] sm:$0xff]
          %v4906 = vld [vmem:[#allocation7 + $0x68] sm:$0xff]
          %v4907 = vld [vmem:[#allocation7 + $0x70] sm:$0xff]
          %v4908 = vld [vmem:[#allocation7 + $0x78] sm:$0xff]
          %v4909 = vld [vmem:[#allocation7 + $0x80] sm:$0xff]
          %v4910 = vld [vmem:[#allocation7 + $0x88] sm:$0xff]
          %v4911 = vld [vmem:[#allocation7 + $0x90] sm:$0xff]
          %v4912 = vld [vmem:[#allocation7 + $0x98] sm:$0xff]
          %v4913 = vld [vmem:[#allocation7 + $0xa0] sm:$0xff]
          %v4914 = vld [vmem:[#allocation7 + $0xa8] sm:$0xff]
          %v4915 = vld [vmem:[#allocation7 + $0xb0] sm:$0xff]
          %v4916 = vld [vmem:[#allocation7 + $0xb8] sm:$0xff]
          %v4917 = vld [vmem:[#allocation7 + $0xc0] sm:$0xff]
          %v4918 = vld [vmem:[#allocation7 + $0xc8] sm:$0xff]
          %v4919 = vld [vmem:[#allocation7 + $0xd0] sm:$0xff]
          %v4920 = vld [vmem:[#allocation7 + $0xd8] sm:$0xff]
          %v4921 = vld [vmem:[#allocation7 + $0xe0] sm:$0xff]
          %v4922 = vld [vmem:[#allocation7 + $0xe8] sm:$0xff]
          %v4923 = vld [vmem:[#allocation7 + $0xf0] sm:$0xff]
          %v4924 = vld [vmem:[#allocation7 + $0xf8] sm:$0xff]
          %4926 = vset.pattern.permute.xlu0 0
          %4927 = vperm.xlu0 %4926, %v4861
          %v4928 = vpop.permute.xlu0 %4927
          %4931 = vset.pattern.permute.xlu0 0
          %4932 = vperm.xlu0 %4931, %v4862
          %v4933 = vpop.permute.xlu0 %4932
          %4936 = vset.pattern.permute.xlu0 0
          %4937 = vperm.xlu0 %4936, %v4863
          %v4938 = vpop.permute.xlu0 %4937
          %4941 = vset.pattern.permute.xlu0 0
          %4942 = vperm.xlu0 %4941, %v4864
          %v4943 = vpop.permute.xlu0 %4942
          %4946 = vset.pattern.permute.xlu0 0
          %4947 = vperm.xlu0 %4946, %v4865
          %v4948 = vpop.permute.xlu0 %4947
          %4951 = vset.pattern.permute.xlu0 0
          %4952 = vperm.xlu0 %4951, %v4866
          %v4953 = vpop.permute.xlu0 %4952
          %4956 = vset.pattern.permute.xlu0 0
          %4957 = vperm.xlu0 %4956, %v4867
          %v4958 = vpop.permute.xlu0 %4957
          %4961 = vset.pattern.permute.xlu0 0
          %4962 = vperm.xlu0 %4961, %v4868
          %v4963 = vpop.permute.xlu0 %4962
          %4966 = vset.pattern.permute.xlu0 0
          %4967 = vperm.xlu0 %4966, %v4869
          %v4968 = vpop.permute.xlu0 %4967
          %4971 = vset.pattern.permute.xlu0 0
          %4972 = vperm.xlu0 %4971, %v4870
          %v4973 = vpop.permute.xlu0 %4972
          %4976 = vset.pattern.permute.xlu0 0
          %4977 = vperm.xlu0 %4976, %v4871
          %v4978 = vpop.permute.xlu0 %4977
          %4981 = vset.pattern.permute.xlu0 0
          %4982 = vperm.xlu0 %4981, %v4872
          %v4983 = vpop.permute.xlu0 %4982
          %4986 = vset.pattern.permute.xlu0 0
          %4987 = vperm.xlu0 %4986, %v4873
          %v4988 = vpop.permute.xlu0 %4987
          %4991 = vset.pattern.permute.xlu0 0
          %4992 = vperm.xlu0 %4991, %v4874
          %v4993 = vpop.permute.xlu0 %4992
          %4996 = vset.pattern.permute.xlu0 0
          %4997 = vperm.xlu0 %4996, %v4875
          %v4998 = vpop.permute.xlu0 %4997
          %5001 = vset.pattern.permute.xlu0 0
          %5002 = vperm.xlu0 %5001, %v4876
          %v5003 = vpop.permute.xlu0 %5002
          %5006 = vset.pattern.permute.xlu0 0
          %5007 = vperm.xlu0 %5006, %v4877
          %v5008 = vpop.permute.xlu0 %5007
          %5011 = vset.pattern.permute.xlu0 0
          %5012 = vperm.xlu0 %5011, %v4878
          %v5013 = vpop.permute.xlu0 %5012
          %5016 = vset.pattern.permute.xlu0 0
          %5017 = vperm.xlu0 %5016, %v4879
          %v5018 = vpop.permute.xlu0 %5017
          %5021 = vset.pattern.permute.xlu0 0
          %5022 = vperm.xlu0 %5021, %v4880
          %v5023 = vpop.permute.xlu0 %5022
          %5026 = vset.pattern.permute.xlu0 0
          %5027 = vperm.xlu0 %5026, %v4881
          %v5028 = vpop.permute.xlu0 %5027
          %5031 = vset.pattern.permute.xlu0 0
          %5032 = vperm.xlu0 %5031, %v4882
          %v5033 = vpop.permute.xlu0 %5032
          %5036 = vset.pattern.permute.xlu0 0
          %5037 = vperm.xlu0 %5036, %v4883
          %v5038 = vpop.permute.xlu0 %5037
          %5041 = vset.pattern.permute.xlu0 0
          %5042 = vperm.xlu0 %5041, %v4884
          %v5043 = vpop.permute.xlu0 %5042
          %5046 = vset.pattern.permute.xlu0 0
          %5047 = vperm.xlu0 %5046, %v4885
          %v5048 = vpop.permute.xlu0 %5047
          %5051 = vset.pattern.permute.xlu0 0
          %5052 = vperm.xlu0 %5051, %v4886
          %v5053 = vpop.permute.xlu0 %5052
          %5056 = vset.pattern.permute.xlu0 0
          %5057 = vperm.xlu0 %5056, %v4887
          %v5058 = vpop.permute.xlu0 %5057
          %5061 = vset.pattern.permute.xlu0 0
          %5062 = vperm.xlu0 %5061, %v4888
          %v5063 = vpop.permute.xlu0 %5062
          %5066 = vset.pattern.permute.xlu0 0
          %5067 = vperm.xlu0 %5066, %v4889
          %v5068 = vpop.permute.xlu0 %5067
          %5071 = vset.pattern.permute.xlu0 0
          %5072 = vperm.xlu0 %5071, %v4890
          %v5073 = vpop.permute.xlu0 %5072
          %5076 = vset.pattern.permute.xlu0 0
          %5077 = vperm.xlu0 %5076, %v4891
          %v5078 = vpop.permute.xlu0 %5077
          %5081 = vset.pattern.permute.xlu0 0
          %5082 = vperm.xlu0 %5081, %v4892
          %v5083 = vpop.permute.xlu0 %5082
          %v5085 = vmul.f32 %v4893, %v4928
          %v5086 = vmul.f32 %v4894, %v4933
          %v5087 = vmul.f32 %v4895, %v4938
          %v5088 = vmul.f32 %v4896, %v4943
          %v5089 = vmul.f32 %v4897, %v4948
          %v5090 = vmul.f32 %v4898, %v4953
          %v5091 = vmul.f32 %v4899, %v4958
          %v5092 = vmul.f32 %v4900, %v4963
          %v5093 = vmul.f32 %v4901, %v4968
          %v5094 = vmul.f32 %v4902, %v4973
          %v5095 = vmul.f32 %v4903, %v4978
          %v5096 = vmul.f32 %v4904, %v4983
          %v5097 = vmul.f32 %v4905, %v4988
          %v5098 = vmul.f32 %v4906, %v4993
          %v5099 = vmul.f32 %v4907, %v4998
          %v5100 = vmul.f32 %v4908, %v5003
          %v5101 = vmul.f32 %v4909, %v5008
          %v5102 = vmul.f32 %v4910, %v5013
          %v5103 = vmul.f32 %v4911, %v5018
          %v5104 = vmul.f32 %v4912, %v5023
          %v5105 = vmul.f32 %v4913, %v5028
          %v5106 = vmul.f32 %v4914, %v5033
          %v5107 = vmul.f32 %v4915, %v5038
          %v5108 = vmul.f32 %v4916, %v5043
          %v5109 = vmul.f32 %v4917, %v5048
          %v5110 = vmul.f32 %v4918, %v5053
          %v5111 = vmul.f32 %v4919, %v5058
          %v5112 = vmul.f32 %v4920, %v5063
          %v5113 = vmul.f32 %v4921, %v5068
          %v5114 = vmul.f32 %v4922, %v5073
          %v5115 = vmul.f32 %v4923, %v5078
          %v5116 = vmul.f32 %v4924, %v5083
          %vm5117 = vcmask 523264
          %5118 = vst.msk [vmem:[%s198] sm:$0xff] %vm5117, %v5085
          %5119 = vst.msk [vmem:[%s198 + $0x8] sm:$0xff] %vm5117, %v5086
          %5120 = vst.msk [vmem:[%s198 + $0x10] sm:$0xff] %vm5117, %v5087
          %5121 = vst.msk [vmem:[%s198 + $0x18] sm:$0xff] %vm5117, %v5088
          %5122 = vst.msk [vmem:[%s198 + $0x20] sm:$0xff] %vm5117, %v5089
          %5123 = vst.msk [vmem:[%s198 + $0x28] sm:$0xff] %vm5117, %v5090
          %5124 = vst.msk [vmem:[%s198 + $0x30] sm:$0xff] %vm5117, %v5091
          %5125 = vst.msk [vmem:[%s198 + $0x38] sm:$0xff] %vm5117, %v5092
          %5126 = vst.msk [vmem:[%s198 + $0x40] sm:$0xff] %vm5117, %v5093
          %5127 = vst.msk [vmem:[%s198 + $0x48] sm:$0xff] %vm5117, %v5094
          %5128 = vst.msk [vmem:[%s198 + $0x50] sm:$0xff] %vm5117, %v5095
          %5129 = vst.msk [vmem:[%s198 + $0x58] sm:$0xff] %vm5117, %v5096
          %5130 = vst.msk [vmem:[%s198 + $0x60] sm:$0xff] %vm5117, %v5097
          %5131 = vst.msk [vmem:[%s198 + $0x68] sm:$0xff] %vm5117, %v5098
          %5132 = vst.msk [vmem:[%s198 + $0x70] sm:$0xff] %vm5117, %v5099
          %5133 = vst.msk [vmem:[%s198 + $0x78] sm:$0xff] %vm5117, %v5100
          %5134 = vst.msk [vmem:[%s198 + $0x80] sm:$0xff] %vm5117, %v5101
          %5135 = vst.msk [vmem:[%s198 + $0x88] sm:$0xff] %vm5117, %v5102
          %5136 = vst.msk [vmem:[%s198 + $0x90] sm:$0xff] %vm5117, %v5103
          %5137 = vst.msk [vmem:[%s198 + $0x98] sm:$0xff] %vm5117, %v5104
          %5138 = vst.msk [vmem:[%s198 + $0xa0] sm:$0xff] %vm5117, %v5105
          %5139 = vst.msk [vmem:[%s198 + $0xa8] sm:$0xff] %vm5117, %v5106
          %5140 = vst.msk [vmem:[%s198 + $0xb0] sm:$0xff] %vm5117, %v5107
          %5141 = vst.msk [vmem:[%s198 + $0xb8] sm:$0xff] %vm5117, %v5108
          %5142 = vst.msk [vmem:[%s198 + $0xc0] sm:$0xff] %vm5117, %v5109
          %5143 = vst.msk [vmem:[%s198 + $0xc8] sm:$0xff] %vm5117, %v5110
          %5144 = vst.msk [vmem:[%s198 + $0xd0] sm:$0xff] %vm5117, %v5111
          %5145 = vst.msk [vmem:[%s198 + $0xd8] sm:$0xff] %vm5117, %v5112
          %5146 = vst.msk [vmem:[%s198 + $0xe0] sm:$0xff] %vm5117, %v5113
          %5147 = vst.msk [vmem:[%s198 + $0xe8] sm:$0xff] %vm5117, %v5114
          %5148 = vst.msk [vmem:[%s198 + $0xf0] sm:$0xff] %vm5117, %v5115
          %5149 = vst.msk [vmem:[%s198 + $0xf8] sm:$0xff] %vm5117, %v5116
        $region48: #{tpu_custom_call.1} parent=27 // pred_fallthru
          _
        %s5150 = smul.u32 32, %s22
        %p5151 = scmp.lt.s32.totalorder %s21, 1
        %s5152 = scalar_select %p5151, %s21, 1
        %p5153 = scmp.lt.s32.totalorder %s5150, 31
        %s5154 = scalar_select %p5153, %s5150, 31
        %s5155 = smul.addr %s5152, 32
        %s5156 = sadd.s32 %s5154, %s5155
        %s5157 = smul.addr %s5156, 8
        %s5158 = scalar_lea.vmem %s2, %s5157
        // Predicated region
        $region49: #{tpu_custom_call.1} parent=27 // pred_check
          %p5159 = pneg %p104
        $region50: #{tpu_custom_call.1} parent=27 // pred_check_branch
          %5161 = sbr.rel (%p5159) target = $region52
        $region51: #{tpu_custom_call.1} parent=27 // pred_region
          %s5162 = smul.u32 32, %s22
        $region52: #{tpu_custom_call.1} parent=27 // pred_fallthru
          _
      $region28: #{tpu_custom_call.1} parent=5 // pred_fallthru
        _
      %p5163 = scmp.le.s32.totalorder 2, %s11
      // Predicated region
      $region53: #{tpu_custom_call.1} parent=5 // pred_check
        %p5164 = pneg %p5163
      $region54: #{tpu_custom_call.1} parent=5 // pred_check_branch
        %5166 = sbr.rel (%p5164) target = $region56
      $region55: #{tpu_custom_call.1} parent=5 // pred_region
        %s5167 = ssub.s32 %s11, 2
        // Predicated region
        $region57: #{tpu_custom_call.1} parent=55 // pred_check
          %p5168 = pneg %p110
        $region58: #{tpu_custom_call.1} parent=55 // pred_check_branch
          %5170 = sbr.rel (%p5168) target = $region60
        $region59: #{tpu_custom_call.1} parent=55 // pred_region
          %s5171 = smul.u32 32, %s25
          %p5172 = scmp.lt.s32.totalorder %s24, 1
          %s5173 = scalar_select %p5172, %s24, 1
          %p5174 = scmp.lt.s32.totalorder %s5171, 31
          %s5175 = scalar_select %p5174, %s5171, 31
          %s5176 = smul.addr %s5173, 32
          %s5177 = sadd.s32 %s5175, %s5176
          %s5178 = smul.addr %s5177, 8
          %s5179 = scalar_lea.vmem %s2, %s5178
        $region60: #{tpu_custom_call.1} parent=55 // pred_fallthru
          _
      $region56: #{tpu_custom_call.1} parent=5 // pred_fallthru
        _
    $region6: #{tpu_custom_call.1} parent=1 // loop_footer
      %s15 = sadd.s32 1, %s11
    $region7: #{tpu_custom_call.1} parent=1 // loop_footer_branch
      %10 = sbr.rel target = $region3
    $region8: #{tpu_custom_call.1} parent=1 // loop_exit
      _
    %5180 = vsyncpa [#allocation9], 1
    %s5181 = scalar_lea.sflag [#allocation9], 1
    %5182 = vsyncpa %s5181, 1

</llo_original>
